<compile_context>
chip_gen: v7x
topology: tpu7x:2x2x1
jax: 0.10.0
libtpu: 0.0.40
codegen_flags: <defaults>
</compile_context>

<pallas_src>
import math
import functools

import jax
import jax.numpy as jnp
from jax import lax
from jax.experimental import pallas as pl
from jax.experimental.pallas import tpu as pltpu

EPS = 1e-12


def _layernorm(x, w, b):
    # TF-style LayerNorm: biased variance, eps inside the sqrt.
    u = jnp.mean(x, axis=-1, keepdims=True)
    xc = x - u
    s = jnp.mean(xc * xc, axis=-1, keepdims=True)
    return w * (xc * lax.rsqrt(s + EPS)) + b


def _gelu(x, approximate):
    if approximate:
        # tanh form (EUP-friendly on v5e; slight deviation from exact erf).
        return jax.nn.gelu(x, approximate=True)
    return x * 0.5 * (1.0 + lax.erf(x * (1.0 / math.sqrt(2.0))))


def _seq_block_kernel(
    x_full_ref, x_tile_ref, mask_ref, cb_full_ref, cb_tile_ref,
    sqrt_beta_ref, f_ln_w_ref, f_ln_b_ref,
    wq_ref, bq_ref, wk_ref, bk_ref, wv_ref, bv_ref,
    wo_ref, bo_ref, a_ln_w_ref, a_ln_b_ref,
    w1_ref, b1_ref, w2_ref, b2_ref, ff_ln_w_ref, ff_ln_b_ref,
    out_ref,
    k_scr, v_scr, proj_scr, ctx_scr,
    *, num_heads, alpha, mask_per_batch, approx_gelu):
    qi = pl.program_id(1)

    x_tile = x_tile_ref[0]                           # (Tq, H) f32
    tq, hidden = x_tile.shape
    dh = hidden // num_heads

    # -------- per-batch-element precompute (runs once, at query-tile 0) --------
    @pl.when(qi == 0)
    def _():
        x_full = x_full_ref[0]                       # (S, H) f32
        x_full_bf = x_full.astype(jnp.bfloat16)
        # K / V: full lane-width (S, H) @ (H, H) bf16 matmuls, f32 accumulation.
        k_scr[...] = (jnp.dot(x_full_bf, wk_ref[...],
                              preferred_element_type=jnp.float32)
                      + bk_ref[...]).astype(jnp.bfloat16)
        v_scr[...] = (jnp.dot(x_full_bf, wv_ref[...],
                              preferred_element_type=jnp.float32)
                      + bv_ref[...]).astype(jnp.bfloat16)
        # DFT low-pass projection: proj = C^T @ x  (r x H, r = kept frequencies).
        # Tiny matmul; kept in f32 so the low-pass path tracks the FFT reference.
        proj_scr[...] = lax.dot_general(
            cb_full_ref[...], x_full, (((0,), (0,)), ((), ())),
            preferred_element_type=jnp.float32)

    # ---------------- FrequencyLayer (low-rank DFT projection) ----------------
    low = jnp.dot(cb_tile_ref[...], proj_scr[...],
                  preferred_element_type=jnp.float32)            # (Tq, H)
    beta2 = sqrt_beta_ref[...] * sqrt_beta_ref[...]              # (1, H)
    emb = low + beta2 * (x_tile - low)
    dsp = _layernorm(emb + x_tile, f_ln_w_ref[...], f_ln_b_ref[...])

    # ---------------- MultiHeadAttention ----------------
    x_tile_bf = x_tile.astype(jnp.bfloat16)
    q = jnp.dot(x_tile_bf, wq_ref[...],
                preferred_element_type=jnp.float32) + bq_ref[...]   # (Tq, H)
    mask = mask_ref[0] if mask_per_batch else mask_ref[...]         # (Tq, S)
    scale = 1.0 / math.sqrt(dh)

    # Per-head score / softmax / PV.  With Q/K/V hoisted out, the per-head body is
    # small; the static unroll lets head i's MXU work overlap head i-1's softmax.
    # Context is assembled into VMEM scratch at static lane offsets so the output
    # projection below is a single full-width matmul.
    for h in range(num_heads):
        sl = slice(h * dh, (h + 1) * dh)
        qh = q[:, sl].astype(jnp.bfloat16)                       # (Tq, dh)
        kh = k_scr[:, sl]                                        # (S, dh) bf16
        s = lax.dot_general(qh, kh, (((1,), (1,)), ((), ())),
                            preferred_element_type=jnp.float32)  # (Tq, S)
        s = s * scale + mask
        s = s - jnp.max(s, axis=-1, keepdims=True)
        e = jnp.exp(s)
        p = (e * pl.reciprocal(jnp.sum(e, axis=-1, keepdims=True),
                               approx=True)).astype(jnp.bfloat16)
        ctx_scr[:, sl] = jnp.dot(p, v_scr[:, sl],
                                 preferred_element_type=jnp.float32)

    att = jnp.dot(ctx_scr[...].astype(jnp.bfloat16), wo_ref[...],
                  preferred_element_type=jnp.float32) + bo_ref[...]
    gsp = _layernorm(att + x_tile, a_ln_w_ref[...], a_ln_b_ref[...])

    layer_out = alpha * dsp + (1.0 - alpha) * gsp

    # ---------------- FeedForward (tiled over the 4H inner dim) ----------------
    lo_bf = layer_out.astype(jnp.bfloat16)
    n_ff = w1_ref.shape[0]

    def ff_body(i, acc):
        h1 = jnp.dot(lo_bf, w1_ref[i],
                     preferred_element_type=jnp.float32) + b1_ref[i]
        h1 = _gelu(h1, approx_gelu)
        return acc + jnp.dot(h1.astype(jnp.bfloat16), w2_ref[i],
                             preferred_element_type=jnp.float32)

    h2 = lax.fori_loop(0, n_ff, ff_body,
                       jnp.zeros((tq, hidden), jnp.float32),
                       unroll=(n_ff if n_ff <= 4 else 2))
    h2 = h2 + b2_ref[...]
    out = _layernorm(h2 + layer_out, ff_ln_w_ref[...], ff_ln_b_ref[...])
    out_ref[0] = out.astype(out_ref.dtype)


def _lowpass_basis(seq_len, c):
    """Orthonormal real basis C (S, r) of the kept rfft frequencies, so that
    rfft(ortho) -> zero freqs >= c -> irfft(ortho) along seq == C @ (C^T @ x)."""
    n = jnp.arange(seq_len, dtype=jnp.float32)
    cols = [jnp.full((seq_len,), 1.0 / math.sqrt(seq_len), jnp.float32)]   # k = 0
    kmax = min(c - 1, seq_len // 2)
    for k in range(1, kmax + 1):
        ang = (2.0 * math.pi * k / seq_len) * n
        if 2 * k == seq_len:                      # Nyquist (even S)
            cols.append(jnp.cos(ang) * (1.0 / math.sqrt(seq_len)))
        else:
            cols.append(jnp.cos(ang) * math.sqrt(2.0 / seq_len))
            cols.append(jnp.sin(ang) * math.sqrt(2.0 / seq_len))
    return jnp.stack(cols, axis=1).astype(jnp.float32)                     # (S, r)


def _pick_q_tile(seq_len, target):
    """Largest multiple-of-8 divisor of seq_len that is <= target (or seq_len)."""
    if target is None:
        target = 512
    if seq_len <= target:
        return seq_len
    t = (min(target, seq_len) // 8) * 8
    while t >= 8:
        if seq_len % t == 0:
            return t
        t -= 8
    return seq_len


def _pick_ff_tile(inner, requested=None):
    if requested is not None and inner % requested == 0:
        return requested
    for t in (512, 384, 256, 128):
        if inner % t == 0:
            return t
    return inner


def _vmem_cap_bytes():
    # Generation-aware cap: v5e/v6e have 128 MiB of VMEM per TensorCore, v7x only
    # 64 MiB.  Never request more scoped VMEM than ~85% of what physically exists.
    try:
        cap = int(pltpu.get_tpu_info().vmem_capacity_bytes)
    except Exception:
        cap = 64 * 1024 * 1024
    return int(cap * 0.85)


def sequential_block(x, attention_mask, params, *, num_heads, alpha, c,
                     q_tile=512, ff_tile=None, approx_gelu=False):
    """x: (B, S, H) f32.  attention_mask: additive, shared (S, S) or (B, S, S)."""
    B, S, H = x.shape
    assert H % num_heads == 0
    inner = params["w1"].shape[1]
    f32, bf16 = jnp.float32, jnp.bfloat16

    # Low-rank DFT basis (computed once, outside the kernel).
    cb = _lowpass_basis(S, c)                      # (S, r)
    r = cb.shape[1]

    tq = _pick_q_tile(S, q_tile)
    n_q = S // tq
    tf_ = _pick_ff_tile(inner, ff_tile)
    n_ff = inner // tf_

    # FFN inner-dim chunking: (H, 4H) -> (n_ff, H, Tf), (4H, H) -> (n_ff, Tf, H).
    w1c = params["w1"].astype(bf16).reshape(H, n_ff, tf_).transpose(1, 0, 2)
    b1c = params["b1"].astype(f32).reshape(n_ff, 1, tf_)
    w2c = params["w2"].astype(bf16).reshape(n_ff, tf_, H)

    mask_per_batch = attention_mask.ndim == 3
    x_f32 = x.astype(f32)
    mask_f32 = attention_mask.astype(f32)

    const_list = [
        params["sqrt_beta"].astype(f32).reshape(1, H),
        params["f_ln_w"].astype(f32).reshape(1, H),
        params["f_ln_b"].astype(f32).reshape(1, H),
        params["wq"].astype(bf16), params["bq"].astype(f32).reshape(1, H),
        params["wk"].astype(bf16), params["bk"].astype(f32).reshape(1, H),
        params["wv"].astype(bf16), params["bv"].astype(f32).reshape(1, H),
        params["wo"].astype(bf16), params["bo"].astype(f32).reshape(1, H),
        params["a_ln_w"].astype(f32).reshape(1, H),
        params["a_ln_b"].astype(f32).reshape(1, H),
        w1c, b1c, w2c,
        params["b2"].astype(f32).reshape(1, H),
        params["ff_ln_w"].astype(f32).reshape(1, H),
        params["ff_ln_b"].astype(f32).reshape(1, H),
    ]
    inputs = [x_f32, x_f32, mask_f32, cb, cb] + const_list

    def nbytes(a):
        return int(a.size) * jnp.dtype(a.dtype).itemsize

    def build(single_buffer_consts):
        const_kwargs = {}
        if single_buffer_consts:
            # Constant-index blocks are fetched once; single-buffer them so they
            # don't pay 2x VMEM (matters most on v7x's 64 MiB).
            const_kwargs["pipeline_mode"] = pl.Buffered(1)

        def const_spec(arr):
            nd = arr.ndim
            return pl.BlockSpec(arr.shape, lambda b, qi, _nd=nd: (0,) * _nd,
                                **const_kwargs)

        x_full_spec = pl.BlockSpec((1, S, H), lambda b, qi: (b, 0, 0))
        x_tile_spec = pl.BlockSpec((1, tq, H), lambda b, qi: (b, qi, 0))
        if mask_per_batch:
            mask_spec = pl.BlockSpec((1, tq, S), lambda b, qi: (b, qi, 0))
        else:
            mask_spec = pl.BlockSpec((tq, S), lambda b, qi: (qi, 0))
        cb_full_spec = const_spec(cb)
        cb_tile_spec = pl.BlockSpec((tq, r), lambda b, qi: (qi, 0))

        in_specs = ([x_full_spec, x_tile_spec, mask_spec, cb_full_spec,
                     cb_tile_spec] + [const_spec(a) for a in const_list])
        out_spec = pl.BlockSpec((1, tq, H), lambda b, qi: (b, qi, 0))

        # Explicit VMEM budget: constants counted once when single-buffered,
        # streamed blocks double-buffered, plus scratch and in-kernel temporaries.
        param_bytes = sum(nbytes(a) for a in const_list) + nbytes(cb)
        param_bytes *= 1 if single_buffer_consts else 2
        stream_bytes = 2 * 4 * (S * H + 3 * tq * H + tq * S + tq * r)
        scratch_bytes = 2 * S * H * 2 + max(r, 8) * H * 4 + tq * H * 4
        tmp_bytes = 4 * (6 * S * H + 4 * tq * S + 20 * tq * H + 4 * tq * tf_)
        vmem_limit = min(_vmem_cap_bytes(),
                         max(32 * 1024 * 1024,
                             param_bytes + stream_bytes + scratch_bytes + tmp_bytes))

        kernel = functools.partial(
            _seq_block_kernel, num_heads=num_heads, alpha=float(alpha),
            mask_per_batch=mask_per_batch, approx_gelu=approx_gelu)

        return pl.pallas_call(
            kernel,
            out_shape=jax.ShapeDtypeStruct((B, S, H), jnp.float32),
            grid=(B, n_q),
            in_specs=in_specs,
            out_specs=out_spec,
            scratch_shapes=[
                pltpu.VMEM((S, H), jnp.bfloat16),    # K (per batch element)
                pltpu.VMEM((S, H), jnp.bfloat16),    # V
                pltpu.VMEM((r, H), jnp.float32),     # C^T @ x
                pltpu.VMEM((tq, H), jnp.float32),    # per-head context assembly
            ],
            compiler_params=pltpu.CompilerParams(
                dimension_semantics=("parallel", "arbitrary"),
                vmem_limit_bytes=int(vmem_limit)),
        )

    try:
        return build(single_buffer_consts=True)(*inputs)
    except Exception:
        # pipeline_mode=pl.Buffered(1) unsupported on this jax/libtpu combination:
        # fall back to default double-buffered constants (identical results).
        return build(single_buffer_consts=False)(*inputs)


# ------------------------- pure-JAX reference -------------------------
def reference_forward(x, attention_mask, params, *, num_heads, alpha, c):
    B, S, H = x.shape
    dh = H // num_heads

    def ln(t, w, b):
        u = t.mean(-1, keepdims=True)
        s = ((t - u) ** 2).mean(-1, keepdims=True)
        return w * ((t - u) / jnp.sqrt(s + EPS)) + b

    am = attention_mask if attention_mask.ndim == 3 else \
        jnp.broadcast_to(attention_mask, (B, S, S))

    # FrequencyLayer
    xf = jnp.fft.rfft(x, axis=1, norm="ortho")
    xf = xf.at[:, c:, :].set(0)
    low = jnp.fft.irfft(xf, n=S, axis=1, norm="ortho")
    high = x - low
    emb = low + params["sqrt_beta"] ** 2 * high
    dsp = ln(emb + x, params["f_ln_w"], params["f_ln_b"])

    # MultiHeadAttention
    q = x @ params["wq"] + params["bq"]
    k = x @ params["wk"] + params["bk"]
    v = x @ params["wv"] + params["bv"]
    qh = q.reshape(B, S, num_heads, dh).transpose(0, 2, 1, 3)
    kh = k.reshape(B, S, num_heads, dh).transpose(0, 2, 3, 1)
    vh = v.reshape(B, S, num_heads, dh).transpose(0, 2, 1, 3)
    scores = qh @ kh / math.sqrt(dh) + am[:, None, :, :]
    probs = jax.nn.softmax(scores, axis=-1)
    ctx = (probs @ vh).transpose(0, 2, 1, 3).reshape(B, S, H)
    att = ctx @ params["wo"] + params["bo"]
    gsp = ln(att + x, params["a_ln_w"], params["a_ln_b"])

    layer_out = alpha * dsp + (1 - alpha) * gsp

    # FeedForward
    h1 = layer_out @ params["w1"] + params["b1"]
    h1 = h1 * 0.5 * (1.0 + lax.erf(h1 / math.sqrt(2.0)))
    h2 = h1 @ params["w2"] + params["b2"]
    return ln(h2 + layer_out, params["ff_ln_w"], params["ff_ln_b"])


if __name__ == "__main__":
    B, S, H = 2, 16, 32
    NUM_HEADS = 2
    ALPHA = 0.5
    C_ARG = 5
    c = C_ARG // 2 + 1            # as in FrequencyLayer.__init__

    key = jax.random.PRNGKey(0)
    ks = jax.random.split(key, 16)

    def nrm(k, shape, scale=0.02):
        return scale * jax.random.normal(k, shape, dtype=jnp.float32)

    def q_bf16(a):
        # Store matmul weights at bf16 precision (exact bf16 round-trip later),
        # so the kernel/reference comparison isolates kernel correctness.
        return a.astype(jnp.bfloat16).astype(jnp.float32)

    params = dict(
        sqrt_beta=jax.random.normal(ks[0], (1, 1, H), dtype=jnp.float32),
        f_ln_w=jnp.ones((H,), jnp.float32), f_ln_b=jnp.zeros((H,), jnp.float32),
        wq=q_bf16(nrm(ks[1], (H, H))), bq=nrm(ks[2], (H,)),
        wk=q_bf16(nrm(ks[3], (H, H))), bk=nrm(ks[4], (H,)),
        wv=q_bf16(nrm(ks[5], (H, H))), bv=nrm(ks[6], (H,)),
        wo=q_bf16(nrm(ks[7], (H, H))), bo=nrm(ks[8], (H,)),
        a_ln_w=jnp.ones((H,), jnp.float32), a_ln_b=jnp.zeros((H,), jnp.float32),
        w1=q_bf16(nrm(ks[9], (H, 4 * H))), b1=nrm(ks[10], (4 * H,)),
        w2=q_bf16(nrm(ks[11], (4 * H, H))), b2=nrm(ks[12], (H,)),
        ff_ln_w=jnp.ones((H,), jnp.float32), ff_ln_b=jnp.zeros((H,), jnp.float32),
    )

    x = jax.random.normal(ks[13], (B, S, H), dtype=jnp.float32)
    causal = jnp.tril(jnp.ones((S, S), jnp.float32))
    shared_mask = (1.0 - causal) * -10000.0       # shared (S, S) additive mask

    ref = reference_forward(x, shared_mask, params,
                            num_heads=NUM_HEADS, alpha=ALPHA, c=c)

    # q_tile=8 exercises the multi-query-tile path: grid = (B, S // 8) = (2, 2).
    out = sequential_block(x, shared_mask, params,
                           num_heads=NUM_HEADS, alpha=ALPHA, c=c, q_tile=8)
    out = jax.block_until_ready(out)
    assert out.shape == (B, S, H)
    err = float(jnp.max(jnp.abs(out - ref)))
    assert bool(jnp.allclose(out, ref, atol=1e-2, rtol=1e-2)), f"max abs err = {err}"

    # Per-batch (B, S, S) mask path must agree as well.
    batch_mask = jnp.broadcast_to(shared_mask, (B, S, S))
    out_b = sequential_block(x, batch_mask, params,
                             num_heads=NUM_HEADS, alpha=ALPHA, c=c, q_tile=8)
    out_b = jax.block_until_ready(out_b)
    err_b = float(jnp.max(jnp.abs(out_b - ref)))
    assert bool(jnp.allclose(out_b, ref, atol=1e-2, rtol=1e-2)), f"max abs err = {err_b}"

    print("KERNEL_OK")
</pallas_src>

<mosaic_0001>
module attributes {stable_mosaic.version = 11 : i64} {
  func.func @_seq_block_kernel(%arg0: i32, %arg1: i32, %arg2: memref<1x16x32xf32, #tpu.memory_space<vmem>>, %arg3: memref<1x8x32xf32, #tpu.memory_space<vmem>>, %arg4: memref<8x16xf32, #tpu.memory_space<vmem>>, %arg5: memref<16x5xf32, #tpu.memory_space<vmem>>, %arg6: memref<8x5xf32, #tpu.memory_space<vmem>>, %arg7: memref<1x32xf32, #tpu.memory_space<vmem>>, %arg8: memref<1x32xf32, #tpu.memory_space<vmem>>, %arg9: memref<1x32xf32, #tpu.memory_space<vmem>>, %arg10: memref<32x32xbf16, #tpu.memory_space<vmem>>, %arg11: memref<1x32xf32, #tpu.memory_space<vmem>>, %arg12: memref<32x32xbf16, #tpu.memory_space<vmem>>, %arg13: memref<1x32xf32, #tpu.memory_space<vmem>>, %arg14: memref<32x32xbf16, #tpu.memory_space<vmem>>, %arg15: memref<1x32xf32, #tpu.memory_space<vmem>>, %arg16: memref<32x32xbf16, #tpu.memory_space<vmem>>, %arg17: memref<1x32xf32, #tpu.memory_space<vmem>>, %arg18: memref<1x32xf32, #tpu.memory_space<vmem>>, %arg19: memref<1x32xf32, #tpu.memory_space<vmem>>, %arg20: memref<1x32x128xbf16, #tpu.memory_space<vmem>>, %arg21: memref<1x1x128xf32, #tpu.memory_space<vmem>>, %arg22: memref<1x128x32xbf16, #tpu.memory_space<vmem>>, %arg23: memref<1x32xf32, #tpu.memory_space<vmem>>, %arg24: memref<1x32xf32, #tpu.memory_space<vmem>>, %arg25: memref<1x32xf32, #tpu.memory_space<vmem>>, %arg26: memref<1x8x32xf32, #tpu.memory_space<vmem>>, %arg27: memref<16x32xbf16, #tpu.memory_space<vmem>>, %arg28: memref<16x32xbf16, #tpu.memory_space<vmem>>, %arg29: memref<5x32xf32, #tpu.memory_space<vmem>>, %arg30: memref<8x32xf32, #tpu.memory_space<vmem>>) attributes {dimension_semantics = [#tpu.dimension_semantics<parallel>, #tpu.dimension_semantics<arbitrary>], iteration_bounds = array<i64: 2, 2>, scalar_prefetch = 0 : i64, scratch_operands = 4 : i64, tpu.core_type = #tpu.core_type<tc>, window_params = [{transform_indices = @transform_0, window_bounds = array<i64: 1, 16, 32>}, {transform_indices = @transform_1, window_bounds = array<i64: 1, 8, 32>}, {transform_indices = @transform_2, window_bounds = array<i64: 8, 16>}, {pipeline_mode = #tpu.pipeline_mode<synchronous>, transform_indices = @transform_3, window_bounds = array<i64: 16, 5>}, {transform_indices = @transform_4, window_bounds = array<i64: 8, 5>}, {pipeline_mode = #tpu.pipeline_mode<synchronous>, transform_indices = @transform_5, window_bounds = array<i64: 1, 32>}, {pipeline_mode = #tpu.pipeline_mode<synchronous>, transform_indices = @transform_6, window_bounds = array<i64: 1, 32>}, {pipeline_mode = #tpu.pipeline_mode<synchronous>, transform_indices = @transform_7, window_bounds = array<i64: 1, 32>}, {pipeline_mode = #tpu.pipeline_mode<synchronous>, transform_indices = @transform_8, window_bounds = array<i64: 32, 32>}, {pipeline_mode = #tpu.pipeline_mode<synchronous>, transform_indices = @transform_9, window_bounds = array<i64: 1, 32>}, {pipeline_mode = #tpu.pipeline_mode<synchronous>, transform_indices = @transform_10, window_bounds = array<i64: 32, 32>}, {pipeline_mode = #tpu.pipeline_mode<synchronous>, transform_indices = @transform_11, window_bounds = array<i64: 1, 32>}, {pipeline_mode = #tpu.pipeline_mode<synchronous>, transform_indices = @transform_12, window_bounds = array<i64: 32, 32>}, {pipeline_mode = #tpu.pipeline_mode<synchronous>, transform_indices = @transform_13, window_bounds = array<i64: 1, 32>}, {pipeline_mode = #tpu.pipeline_mode<synchronous>, transform_indices = @transform_14, window_bounds = array<i64: 32, 32>}, {pipeline_mode = #tpu.pipeline_mode<synchronous>, transform_indices = @transform_15, window_bounds = array<i64: 1, 32>}, {pipeline_mode = #tpu.pipeline_mode<synchronous>, transform_indices = @transform_16, window_bounds = array<i64: 1, 32>}, {pipeline_mode = #tpu.pipeline_mode<synchronous>, transform_indices = @transform_17, window_bounds = array<i64: 1, 32>}, {pipeline_mode = #tpu.pipeline_mode<synchronous>, transform_indices = @transform_18, window_bounds = array<i64: 1, 32, 128>}, {pipeline_mode = #tpu.pipeline_mode<synchronous>, transform_indices = @transform_19, window_bounds = array<i64: 1, 1, 128>}, {pipeline_mode = #tpu.pipeline_mode<synchronous>, transform_indices = @transform_20, window_bounds = array<i64: 1, 128, 32>}, {pipeline_mode = #tpu.pipeline_mode<synchronous>, transform_indices = @transform_21, window_bounds = array<i64: 1, 32>}, {pipeline_mode = #tpu.pipeline_mode<synchronous>, transform_indices = @transform_22, window_bounds = array<i64: 1, 32>}, {pipeline_mode = #tpu.pipeline_mode<synchronous>, transform_indices = @transform_23, window_bounds = array<i64: 1, 32>}, {transform_indices = @transform_24, window_bounds = array<i64: 1, 8, 32>}]} {
    %c0 = arith.constant 0 : index
    %c0_0 = arith.constant 0 : index
    %c0_1 = arith.constant 0 : index
    %0 = vector.load %arg3[%c0, %c0_0, %c0_1] : memref<1x8x32xf32, #tpu.memory_space<vmem>>, vector<1x8x32xf32>
    %1 = vector.shape_cast %0 : vector<1x8x32xf32> to vector<8x32xf32>
    %c0_i32 = arith.constant 0 : i32
    %2 = arith.cmpi eq, %arg1, %c0_i32 : i32
    %3 = arith.extui %2 : i1 to i32
    %c0_i32_2 = arith.constant 0 : i32
    %4 = arith.cmpi ne, %3, %c0_i32_2 : i32
    scf.if %4 {
      %c0_93 = arith.constant 0 : index
      %c0_94 = arith.constant 0 : index
      %c0_95 = arith.constant 0 : index
      %176 = vector.load %arg2[%c0_93, %c0_94, %c0_95] : memref<1x16x32xf32, #tpu.memory_space<vmem>>, vector<1x16x32xf32>
      %177 = vector.shape_cast %176 : vector<1x16x32xf32> to vector<16x32xf32>
      %178 = arith.truncf %177 : vector<16x32xf32> to vector<16x32xbf16>
      %c0_96 = arith.constant 0 : index
      %c0_97 = arith.constant 0 : index
      %179 = vector.load %arg12[%c0_96, %c0_97] : memref<32x32xbf16, #tpu.memory_space<vmem>>, vector<32x32xbf16>
      %cst_98 = arith.constant dense<0.000000e+00> : vector<16x32xf32>
      %180 = tpu.matmul %178, %179, %cst_98 {dimension_numbers = #tpu.dot_dimension_numbers<[1], [0], [0], [1], [0, 0, 1, 1], [], []>} : vector<16x32xbf16>, vector<32x32xbf16>, vector<16x32xf32> -> vector<16x32xf32>
      %c0_99 = arith.constant 0 : index
      %c0_100 = arith.constant 0 : index
      %181 = vector.load %arg13[%c0_99, %c0_100] : memref<1x32xf32, #tpu.memory_space<vmem>>, vector<1x32xf32>
      %182 = vector.broadcast %181 : vector<1x32xf32> to vector<16x32xf32>
      %183 = arith.addf %180, %182 : vector<16x32xf32>
      %184 = arith.truncf %183 : vector<16x32xf32> to vector<16x32xbf16>
      %c0_101 = arith.constant 0 : index
      %c0_102 = arith.constant 0 : index
      %185 = vector.load %arg27[%c0_101, %c0_102] : memref<16x32xbf16, #tpu.memory_space<vmem>>, vector<16x32xbf16>
      tpu.vector_store %arg27[%c0_101, %c0_102], %184 {strides = array<i32>} : memref<16x32xbf16, #tpu.memory_space<vmem>>, vector<16x32xbf16>,
      %c0_103 = arith.constant 0 : index
      %c0_104 = arith.constant 0 : index
      %186 = vector.load %arg14[%c0_103, %c0_104] : memref<32x32xbf16, #tpu.memory_space<vmem>>, vector<32x32xbf16>
      %cst_105 = arith.constant dense<0.000000e+00> : vector<16x32xf32>
      %187 = tpu.matmul %178, %186, %cst_105 {dimension_numbers = #tpu.dot_dimension_numbers<[1], [0], [0], [1], [0, 0, 1, 1], [], []>} : vector<16x32xbf16>, vector<32x32xbf16>, vector<16x32xf32> -> vector<16x32xf32>
      %c0_106 = arith.constant 0 : index
      %c0_107 = arith.constant 0 : index
      %188 = vector.load %arg15[%c0_106, %c0_107] : memref<1x32xf32, #tpu.memory_space<vmem>>, vector<1x32xf32>
      %189 = vector.broadcast %188 : vector<1x32xf32> to vector<16x32xf32>
      %190 = arith.addf %187, %189 : vector<16x32xf32>
      %191 = arith.truncf %190 : vector<16x32xf32> to vector<16x32xbf16>
      %c0_108 = arith.constant 0 : index
      %c0_109 = arith.constant 0 : index
      %192 = vector.load %arg28[%c0_108, %c0_109] : memref<16x32xbf16, #tpu.memory_space<vmem>>, vector<16x32xbf16>
      tpu.vector_store %arg28[%c0_108, %c0_109], %191 {strides = array<i32>} : memref<16x32xbf16, #tpu.memory_space<vmem>>, vector<16x32xbf16>,
      %c0_110 = arith.constant 0 : index
      %c0_111 = arith.constant 0 : index
      %193 = vector.load %arg5[%c0_110, %c0_111] : memref<16x5xf32, #tpu.memory_space<vmem>>, vector<16x5xf32>
      %cst_112 = arith.constant dense<0.000000e+00> : vector<5x32xf32>
      %194 = tpu.matmul %193, %177, %cst_112 {dimension_numbers = #tpu.dot_dimension_numbers<[0], [0], [1], [1], [0, 1, 1, 1], [], []>} : vector<16x5xf32>, vector<16x32xf32>, vector<5x32xf32> -> vector<5x32xf32>
      %c0_113 = arith.constant 0 : index
      %c0_114 = arith.constant 0 : index
      %195 = vector.load %arg29[%c0_113, %c0_114] : memref<5x32xf32, #tpu.memory_space<vmem>>, vector<5x32xf32>
      tpu.vector_store %arg29[%c0_113, %c0_114], %194 {strides = array<i32>} : memref<5x32xf32, #tpu.memory_space<vmem>>, vector<5x32xf32>,
    } else {
    }
    %c0_3 = arith.constant 0 : index
    %c0_4 = arith.constant 0 : index
    %5 = vector.load %arg6[%c0_3, %c0_4] : memref<8x5xf32, #tpu.memory_space<vmem>>, vector<8x5xf32>
    %c0_5 = arith.constant 0 : index
    %c0_6 = arith.constant 0 : index
    %6 = vector.load %arg29[%c0_5, %c0_6] : memref<5x32xf32, #tpu.memory_space<vmem>>, vector<5x32xf32>
    %cst = arith.constant dense<0.000000e+00> : vector<8x32xf32>
    %7 = tpu.matmul %5, %6, %cst {dimension_numbers = #tpu.dot_dimension_numbers<[1], [0], [0], [1], [0, 0, 1, 1], [], []>} : vector<8x5xf32>, vector<5x32xf32>, vector<8x32xf32> -> vector<8x32xf32>
    %c0_7 = arith.constant 0 : index
    %c0_8 = arith.constant 0 : index
    %8 = vector.load %arg7[%c0_7, %c0_8] : memref<1x32xf32, #tpu.memory_space<vmem>>, vector<1x32xf32>
    %c0_9 = arith.constant 0 : index
    %c0_10 = arith.constant 0 : index
    %9 = vector.load %arg7[%c0_9, %c0_10] : memref<1x32xf32, #tpu.memory_space<vmem>>, vector<1x32xf32>
    %10 = arith.mulf %8, %9 : vector<1x32xf32>
    %11 = arith.subf %1, %7 : vector<8x32xf32>
    %12 = vector.broadcast %10 : vector<1x32xf32> to vector<8x32xf32>
    %13 = arith.mulf %12, %11 : vector<8x32xf32>
    %14 = arith.addf %7, %13 : vector<8x32xf32>
    %15 = arith.addf %14, %1 : vector<8x32xf32>
    %c0_11 = arith.constant 0 : index
    %c0_12 = arith.constant 0 : index
    %16 = vector.load %arg8[%c0_11, %c0_12] : memref<1x32xf32, #tpu.memory_space<vmem>>, vector<1x32xf32>
    %c0_13 = arith.constant 0 : index
    %c0_14 = arith.constant 0 : index
    %17 = vector.load %arg9[%c0_13, %c0_14] : memref<1x32xf32, #tpu.memory_space<vmem>>, vector<1x32xf32>
    %cst_15 = arith.constant dense<0.000000e+00> : vector<8xf32>
    %18 = vector.multi_reduction <add>, %15, %cst_15 [1] : vector<8x32xf32> to vector<8xf32>
    %19 = vector.shape_cast %18 : vector<8xf32> to vector<8x1xf32>
    %cst_16 = arith.constant 3.200000e+01 : f32
    %20 = vector.broadcast %cst_16 : f32 to vector<8x1xf32>
    %21 = arith.divf %19, %20 : vector<8x1xf32>
    %22 = vector.broadcast %21 : vector<8x1xf32> to vector<8x32xf32>
    %23 = arith.subf %15, %22 : vector<8x32xf32>
    %24 = arith.mulf %23, %23 : vector<8x32xf32>
    %cst_17 = arith.constant dense<0.000000e+00> : vector<8xf32>
    %25 = vector.multi_reduction <add>, %24, %cst_17 [1] : vector<8x32xf32> to vector<8xf32>
    %26 = vector.shape_cast %25 : vector<8xf32> to vector<8x1xf32>
    %cst_18 = arith.constant 3.200000e+01 : f32
    %27 = vector.broadcast %cst_18 : f32 to vector<8x1xf32>
    %28 = arith.divf %26, %27 : vector<8x1xf32>
    %cst_19 = arith.constant 9.99999996E-13 : f32
    %29 = vector.broadcast %cst_19 : f32 to vector<8x1xf32>
    %30 = arith.addf %28, %29 : vector<8x1xf32>
    %31 = math.rsqrt %30 : vector<8x1xf32>
    %32 = vector.broadcast %31 : vector<8x1xf32> to vector<8x32xf32>
    %33 = arith.mulf %23, %32 : vector<8x32xf32>
    %34 = vector.broadcast %16 : vector<1x32xf32> to vector<8x32xf32>
    %35 = arith.mulf %34, %33 : vector<8x32xf32>
    %36 = vector.broadcast %17 : vector<1x32xf32> to vector<8x32xf32>
    %37 = arith.addf %35, %36 : vector<8x32xf32>
    %38 = arith.truncf %1 : vector<8x32xf32> to vector<8x32xbf16>
    %c0_20 = arith.constant 0 : index
    %c0_21 = arith.constant 0 : index
    %39 = vector.load %arg10[%c0_20, %c0_21] : memref<32x32xbf16, #tpu.memory_space<vmem>>, vector<32x32xbf16>
    %cst_22 = arith.constant dense<0.000000e+00> : vector<8x32xf32>
    %40 = tpu.matmul %38, %39, %cst_22 {dimension_numbers = #tpu.dot_dimension_numbers<[1], [0], [0], [1], [0, 0, 1, 1], [], []>} : vector<8x32xbf16>, vector<32x32xbf16>, vector<8x32xf32> -> vector<8x32xf32>
    %c0_23 = arith.constant 0 : index
    %c0_24 = arith.constant 0 : index
    %41 = vector.load %arg11[%c0_23, %c0_24] : memref<1x32xf32, #tpu.memory_space<vmem>>, vector<1x32xf32>
    %42 = vector.broadcast %41 : vector<1x32xf32> to vector<8x32xf32>
    %43 = arith.addf %40, %42 : vector<8x32xf32>
    %c0_25 = arith.constant 0 : index
    %c0_26 = arith.constant 0 : index
    %44 = vector.load %arg4[%c0_25, %c0_26] : memref<8x16xf32, #tpu.memory_space<vmem>>, vector<8x16xf32>
    %45 = vector.extract_strided_slice %43 {offsets = [0, 0], sizes = [8, 16], strides = [1, 1]} : vector<8x32xf32> to vector<8x16xf32>
    %46 = arith.truncf %45 : vector<8x16xf32> to vector<8x16xbf16>
    %c0_27 = arith.constant 0 : index
    %c0_28 = arith.constant 0 : index
    %47 = vector.load %arg27[%c0_27, %c0_28] : memref<16x32xbf16, #tpu.memory_space<vmem>>, vector<16x16xbf16>
    %cst_29 = arith.constant dense<0.000000e+00> : vector<8x16xf32>
    %48 = tpu.matmul %46, %47, %cst_29 {dimension_numbers = #tpu.dot_dimension_numbers<[1], [1], [0], [0], [0, 0, 1, 0], [], []>} : vector<8x16xbf16>, vector<16x16xbf16>, vector<8x16xf32> -> vector<8x16xf32>
    %cst_30 = arith.constant 2.500000e-01 : f32
    %49 = vector.broadcast %cst_30 : f32 to vector<8x16xf32>
    %50 = arith.mulf %48, %49 : vector<8x16xf32>
    %51 = arith.addf %50, %44 : vector<8x16xf32>
    %cst_31 = arith.constant dense<0xFF800000> : vector<8xf32>
    %52 = vector.multi_reduction <maximumf>, %51, %cst_31 [1] : vector<8x16xf32> to vector<8xf32>
    %53 = vector.shape_cast %52 : vector<8xf32> to vector<8x1xf32>
    %54 = vector.broadcast %53 : vector<8x1xf32> to vector<8x16xf32>
    %55 = arith.subf %51, %54 : vector<8x16xf32>
    %56 = math.exp %55 : vector<8x16xf32>
    %cst_32 = arith.constant dense<0.000000e+00> : vector<8xf32>
    %57 = vector.multi_reduction <add>, %56, %cst_32 [1] : vector<8x16xf32> to vector<8xf32>
    %58 = vector.shape_cast %57 : vector<8xf32> to vector<8x1xf32>
    %59 = tpu.reciprocal %58 {approx = true} : vector<8x1xf32> -> vector<8x1xf32>
    %60 = vector.broadcast %59 : vector<8x1xf32> to vector<8x16xf32>
    %61 = arith.mulf %56, %60 : vector<8x16xf32>
    %62 = arith.truncf %61 : vector<8x16xf32> to vector<8x16xbf16>
    %c0_33 = arith.constant 0 : index
    %c0_34 = arith.constant 0 : index
    %63 = vector.load %arg28[%c0_33, %c0_34] : memref<16x32xbf16, #tpu.memory_space<vmem>>, vector<16x16xbf16>
    %cst_35 = arith.constant dense<0.000000e+00> : vector<8x16xf32>
    %64 = tpu.matmul %62, %63, %cst_35 {dimension_numbers = #tpu.dot_dimension_numbers<[1], [0], [0], [1], [0, 0, 1, 1], [], []>} : vector<8x16xbf16>, vector<16x16xbf16>, vector<8x16xf32> -> vector<8x16xf32>
    %c0_36 = arith.constant 0 : index
    %c0_37 = arith.constant 0 : index
    %65 = vector.load %arg30[%c0_36, %c0_37] : memref<8x32xf32, #tpu.memory_space<vmem>>, vector<8x16xf32>
    tpu.vector_store %arg30[%c0_36, %c0_37], %64 {strides = array<i32>} : memref<8x32xf32, #tpu.memory_space<vmem>>, vector<8x16xf32>,
    %66 = vector.extract_strided_slice %43 {offsets = [0, 16], sizes = [8, 16], strides = [1, 1]} : vector<8x32xf32> to vector<8x16xf32>
    %67 = arith.truncf %66 : vector<8x16xf32> to vector<8x16xbf16>
    %c0_38 = arith.constant 0 : index
    %c16 = arith.constant 16 : index
    %68 = vector.load %arg27[%c0_38, %c16] : memref<16x32xbf16, #tpu.memory_space<vmem>>, vector<16x16xbf16>
    %cst_39 = arith.constant dense<0.000000e+00> : vector<8x16xf32>
    %69 = tpu.matmul %67, %68, %cst_39 {dimension_numbers = #tpu.dot_dimension_numbers<[1], [1], [0], [0], [0, 0, 1, 0], [], []>} : vector<8x16xbf16>, vector<16x16xbf16>, vector<8x16xf32> -> vector<8x16xf32>
    %cst_40 = arith.constant 2.500000e-01 : f32
    %70 = vector.broadcast %cst_40 : f32 to vector<8x16xf32>
    %71 = arith.mulf %69, %70 : vector<8x16xf32>
    %72 = arith.addf %71, %44 : vector<8x16xf32>
    %cst_41 = arith.constant dense<0xFF800000> : vector<8xf32>
    %73 = vector.multi_reduction <maximumf>, %72, %cst_41 [1] : vector<8x16xf32> to vector<8xf32>
    %74 = vector.shape_cast %73 : vector<8xf32> to vector<8x1xf32>
    %75 = vector.broadcast %74 : vector<8x1xf32> to vector<8x16xf32>
    %76 = arith.subf %72, %75 : vector<8x16xf32>
    %77 = math.exp %76 : vector<8x16xf32>
    %cst_42 = arith.constant dense<0.000000e+00> : vector<8xf32>
    %78 = vector.multi_reduction <add>, %77, %cst_42 [1] : vector<8x16xf32> to vector<8xf32>
    %79 = vector.shape_cast %78 : vector<8xf32> to vector<8x1xf32>
    %80 = tpu.reciprocal %79 {approx = true} : vector<8x1xf32> -> vector<8x1xf32>
    %81 = vector.broadcast %80 : vector<8x1xf32> to vector<8x16xf32>
    %82 = arith.mulf %77, %81 : vector<8x16xf32>
    %83 = arith.truncf %82 : vector<8x16xf32> to vector<8x16xbf16>
    %c0_43 = arith.constant 0 : index
    %c16_44 = arith.constant 16 : index
    %84 = vector.load %arg28[%c0_43, %c16_44] : memref<16x32xbf16, #tpu.memory_space<vmem>>, vector<16x16xbf16>
    %cst_45 = arith.constant dense<0.000000e+00> : vector<8x16xf32>
    %85 = tpu.matmul %83, %84, %cst_45 {dimension_numbers = #tpu.dot_dimension_numbers<[1], [0], [0], [1], [0, 0, 1, 1], [], []>} : vector<8x16xbf16>, vector<16x16xbf16>, vector<8x16xf32> -> vector<8x16xf32>
    %c0_46 = arith.constant 0 : index
    %c16_47 = arith.constant 16 : index
    %86 = vector.load %arg30[%c0_46, %c16_47] : memref<8x32xf32, #tpu.memory_space<vmem>>, vector<8x16xf32>
    tpu.vector_store %arg30[%c0_46, %c16_47], %85 {strides = array<i32>} : memref<8x32xf32, #tpu.memory_space<vmem>>, vector<8x16xf32>,
    %c0_48 = arith.constant 0 : index
    %c0_49 = arith.constant 0 : index
    %87 = vector.load %arg30[%c0_48, %c0_49] : memref<8x32xf32, #tpu.memory_space<vmem>>, vector<8x32xf32>
    %88 = arith.truncf %87 : vector<8x32xf32> to vector<8x32xbf16>
    %c0_50 = arith.constant 0 : index
    %c0_51 = arith.constant 0 : index
    %89 = vector.load %arg16[%c0_50, %c0_51] : memref<32x32xbf16, #tpu.memory_space<vmem>>, vector<32x32xbf16>
    %cst_52 = arith.constant dense<0.000000e+00> : vector<8x32xf32>
    %90 = tpu.matmul %88, %89, %cst_52 {dimension_numbers = #tpu.dot_dimension_numbers<[1], [0], [0], [1], [0, 0, 1, 1], [], []>} : vector<8x32xbf16>, vector<32x32xbf16>, vector<8x32xf32> -> vector<8x32xf32>
    %c0_53 = arith.constant 0 : index
    %c0_54 = arith.constant 0 : index
    %91 = vector.load %arg17[%c0_53, %c0_54] : memref<1x32xf32, #tpu.memory_space<vmem>>, vector<1x32xf32>
    %92 = vector.broadcast %91 : vector<1x32xf32> to vector<8x32xf32>
    %93 = arith.addf %90, %92 : vector<8x32xf32>
    %94 = arith.addf %93, %1 : vector<8x32xf32>
    %c0_55 = arith.constant 0 : index
    %c0_56 = arith.constant 0 : index
    %95 = vector.load %arg18[%c0_55, %c0_56] : memref<1x32xf32, #tpu.memory_space<vmem>>, vector<1x32xf32>
    %c0_57 = arith.constant 0 : index
    %c0_58 = arith.constant 0 : index
    %96 = vector.load %arg19[%c0_57, %c0_58] : memref<1x32xf32, #tpu.memory_space<vmem>>, vector<1x32xf32>
    %cst_59 = arith.constant dense<0.000000e+00> : vector<8xf32>
    %97 = vector.multi_reduction <add>, %94, %cst_59 [1] : vector<8x32xf32> to vector<8xf32>
    %98 = vector.shape_cast %97 : vector<8xf32> to vector<8x1xf32>
    %cst_60 = arith.constant 3.200000e+01 : f32
    %99 = vector.broadcast %cst_60 : f32 to vector<8x1xf32>
    %100 = arith.divf %98, %99 : vector<8x1xf32>
    %101 = vector.broadcast %100 : vector<8x1xf32> to vector<8x32xf32>
    %102 = arith.subf %94, %101 : vector<8x32xf32>
    %103 = arith.mulf %102, %102 : vector<8x32xf32>
    %cst_61 = arith.constant dense<0.000000e+00> : vector<8xf32>
    %104 = vector.multi_reduction <add>, %103, %cst_61 [1] : vector<8x32xf32> to vector<8xf32>
    %105 = vector.shape_cast %104 : vector<8xf32> to vector<8x1xf32>
    %cst_62 = arith.constant 3.200000e+01 : f32
    %106 = vector.broadcast %cst_62 : f32 to vector<8x1xf32>
    %107 = arith.divf %105, %106 : vector<8x1xf32>
    %cst_63 = arith.constant 9.99999996E-13 : f32
    %108 = vector.broadcast %cst_63 : f32 to vector<8x1xf32>
    %109 = arith.addf %107, %108 : vector<8x1xf32>
    %110 = math.rsqrt %109 : vector<8x1xf32>
    %111 = vector.broadcast %110 : vector<8x1xf32> to vector<8x32xf32>
    %112 = arith.mulf %102, %111 : vector<8x32xf32>
    %113 = vector.broadcast %95 : vector<1x32xf32> to vector<8x32xf32>
    %114 = arith.mulf %113, %112 : vector<8x32xf32>
    %115 = vector.broadcast %96 : vector<1x32xf32> to vector<8x32xf32>
    %116 = arith.addf %114, %115 : vector<8x32xf32>
    %cst_64 = arith.constant 5.000000e-01 : f32
    %117 = vector.broadcast %cst_64 : f32 to vector<8x32xf32>
    %118 = arith.mulf %117, %37 : vector<8x32xf32>
    %cst_65 = arith.constant 5.000000e-01 : f32
    %119 = vector.broadcast %cst_65 : f32 to vector<8x32xf32>
    %120 = arith.mulf %119, %116 : vector<8x32xf32>
    %121 = arith.addf %118, %120 : vector<8x32xf32>
    %122 = arith.truncf %121 : vector<8x32xf32> to vector<8x32xbf16>
    %cst_66 = arith.constant 0.000000e+00 : f32
    %123 = vector.broadcast %cst_66 : f32 to vector<8x32xf32>
    %c0_i32_67 = arith.constant 0 : i32
    %124 = arith.index_cast %c0_i32_67 : i32 to index
    %c0_68 = arith.constant 0 : index
    %c0_69 = arith.constant 0 : index
    %125 = vector.load %arg20[%124, %c0_68, %c0_69] : memref<1x32x128xbf16, #tpu.memory_space<vmem>>, vector<1x32x128xbf16>
    %126 = vector.shape_cast %125 : vector<1x32x128xbf16> to vector<32x128xbf16>
    %cst_70 = arith.constant dense<0.000000e+00> : vector<8x128xf32>
    %127 = tpu.matmul %122, %126, %cst_70 {dimension_numbers = #tpu.dot_dimension_numbers<[1], [0], [0], [1], [0, 0, 1, 1], [], []>} : vector<8x32xbf16>, vector<32x128xbf16>, vector<8x128xf32> -> vector<8x128xf32>
    %128 = arith.index_cast %c0_i32_67 : i32 to index
    %c0_71 = arith.constant 0 : index
    %c0_72 = arith.constant 0 : index
    %129 = vector.load %arg21[%128, %c0_71, %c0_72] : memref<1x1x128xf32, #tpu.memory_space<vmem>>, vector<1x1x128xf32>
    %130 = vector.shape_cast %129 : vector<1x1x128xf32> to vector<1x128xf32>
    %131 = vector.broadcast %130 : vector<1x128xf32> to vector<8x128xf32>
    %132 = arith.addf %127, %131 : vector<8x128xf32>
    %cst_73 = arith.constant 5.000000e-01 : f32
    %133 = vector.broadcast %cst_73 : f32 to vector<8x128xf32>
    %134 = arith.mulf %132, %133 : vector<8x128xf32>
    %cst_74 = arith.constant 0.707106769 : f32
    %135 = vector.broadcast %cst_74 : f32 to vector<8x128xf32>
    %136 = arith.mulf %132, %135 : vector<8x128xf32>
    %137 = math.erf %136 : vector<8x128xf32>
    %cst_75 = arith.constant 1.000000e+00 : f32
    %138 = vector.broadcast %cst_75 : f32 to vector<8x128xf32>
    %139 = arith.addf %138, %137 : vector<8x128xf32>
    %140 = arith.mulf %134, %139 : vector<8x128xf32>
    %141 = arith.truncf %140 : vector<8x128xf32> to vector<8x128xbf16>
    %142 = arith.index_cast %c0_i32_67 : i32 to index
    %c0_76 = arith.constant 0 : index
    %c0_77 = arith.constant 0 : index
    %143 = vector.load %arg22[%142, %c0_76, %c0_77] : memref<1x128x32xbf16, #tpu.memory_space<vmem>>, vector<1x128x32xbf16>
    %144 = vector.shape_cast %143 : vector<1x128x32xbf16> to vector<128x32xbf16>
    %cst_78 = arith.constant dense<0.000000e+00> : vector<8x32xf32>
    %145 = tpu.matmul %141, %144, %cst_78 {dimension_numbers = #tpu.dot_dimension_numbers<[1], [0], [0], [1], [0, 0, 1, 1], [], []>} : vector<8x128xbf16>, vector<128x32xbf16>, vector<8x32xf32> -> vector<8x32xf32>
    %146 = arith.addf %123, %145 : vector<8x32xf32>
    %c1_i32 = arith.constant 1 : i32
    %c0_79 = arith.constant 0 : index
    %c0_80 = arith.constant 0 : index
    %147 = vector.load %arg23[%c0_79, %c0_80] : memref<1x32xf32, #tpu.memory_space<vmem>>, vector<1x32xf32>
    %148 = vector.broadcast %147 : vector<1x32xf32> to vector<8x32xf32>
    %149 = arith.addf %146, %148 : vector<8x32xf32>
    %150 = arith.addf %149, %121 : vector<8x32xf32>
    %c0_81 = arith.constant 0 : index
    %c0_82 = arith.constant 0 : index
    %151 = vector.load %arg24[%c0_81, %c0_82] : memref<1x32xf32, #tpu.memory_space<vmem>>, vector<1x32xf32>
    %c0_83 = arith.constant 0 : index
    %c0_84 = arith.constant 0 : index
    %152 = vector.load %arg25[%c0_83, %c0_84] : memref<1x32xf32, #tpu.memory_space<vmem>>, vector<1x32xf32>
    %cst_85 = arith.constant dense<0.000000e+00> : vector<8xf32>
    %153 = vector.multi_reduction <add>, %150, %cst_85 [1] : vector<8x32xf32> to vector<8xf32>
    %154 = vector.shape_cast %153 : vector<8xf32> to vector<8x1xf32>
    %cst_86 = arith.constant 3.200000e+01 : f32
    %155 = vector.broadcast %cst_86 : f32 to vector<8x1xf32>
    %156 = arith.divf %154, %155 : vector<8x1xf32>
    %157 = vector.broadcast %156 : vector<8x1xf32> to vector<8x32xf32>
    %158 = arith.subf %150, %157 : vector<8x32xf32>
    %159 = arith.mulf %158, %158 : vector<8x32xf32>
    %cst_87 = arith.constant dense<0.000000e+00> : vector<8xf32>
    %160 = vector.multi_reduction <add>, %159, %cst_87 [1] : vector<8x32xf32> to vector<8xf32>
    %161 = vector.shape_cast %160 : vector<8xf32> to vector<8x1xf32>
    %cst_88 = arith.constant 3.200000e+01 : f32
    %162 = vector.broadcast %cst_88 : f32 to vector<8x1xf32>
    %163 = arith.divf %161, %162 : vector<8x1xf32>
    %cst_89 = arith.constant 9.99999996E-13 : f32
    %164 = vector.broadcast %cst_89 : f32 to vector<8x1xf32>
    %165 = arith.addf %163, %164 : vector<8x1xf32>
    %166 = math.rsqrt %165 : vector<8x1xf32>
    %167 = vector.broadcast %166 : vector<8x1xf32> to vector<8x32xf32>
    %168 = arith.mulf %158, %167 : vector<8x32xf32>
    %169 = vector.broadcast %151 : vector<1x32xf32> to vector<8x32xf32>
    %170 = arith.mulf %169, %168 : vector<8x32xf32>
    %171 = vector.broadcast %152 : vector<1x32xf32> to vector<8x32xf32>
    %172 = arith.addf %170, %171 : vector<8x32xf32>
    %c0_90 = arith.constant 0 : index
    %c0_91 = arith.constant 0 : index
    %c0_92 = arith.constant 0 : index
    %173 = vector.load %arg26[%c0_90, %c0_91, %c0_92] : memref<1x8x32xf32, #tpu.memory_space<vmem>>, vector<1x8x32xf32>
    %174 = vector.shape_cast %173 : vector<1x8x32xf32> to vector<8x32xf32>
    %175 = vector.shape_cast %172 : vector<8x32xf32> to vector<1x8x32xf32>
    tpu.vector_store %arg26[%c0_90, %c0_91, %c0_92], %175 {strides = array<i32>} : memref<1x8x32xf32, #tpu.memory_space<vmem>>, vector<1x8x32xf32>,
    return
  }
  func.func @transform_0(%arg0: i32, %arg1: i32) -> (i32, i32, i32) {
    %c0_i32 = arith.constant 0 : i32
    %c0_i32_0 = arith.constant 0 : i32
    %c0_i32_1 = arith.constant 0 : i32
    return %arg0, %c0_i32, %c0_i32_0 : i32, i32, i32
  }
  func.func @transform_1(%arg0: i32, %arg1: i32) -> (i32, i32, i32) {
    %c0_i32 = arith.constant 0 : i32
    %c0_i32_0 = arith.constant 0 : i32
    return %arg0, %arg1, %c0_i32 : i32, i32, i32
  }
  func.func @transform_2(%arg0: i32, %arg1: i32) -> (i32, i32) {
    %c0_i32 = arith.constant 0 : i32
    %c0_i32_0 = arith.constant 0 : i32
    return %arg1, %c0_i32 : i32, i32
  }
  func.func @transform_3(%arg0: i32, %arg1: i32) -> (i32, i32) {
    %c0_i32 = arith.constant 0 : i32
    %c0_i32_0 = arith.constant 0 : i32
    %c0_i32_1 = arith.constant 0 : i32
    return %c0_i32, %c0_i32_0 : i32, i32
  }
  func.func @transform_4(%arg0: i32, %arg1: i32) -> (i32, i32) {
    %c0_i32 = arith.constant 0 : i32
    %c0_i32_0 = arith.constant 0 : i32
    return %arg1, %c0_i32 : i32, i32
  }
  func.func @transform_5(%arg0: i32, %arg1: i32) -> (i32, i32) {
    %c0_i32 = arith.constant 0 : i32
    %c0_i32_0 = arith.constant 0 : i32
    %c0_i32_1 = arith.constant 0 : i32
    return %c0_i32, %c0_i32_0 : i32, i32
  }
  func.func @transform_6(%arg0: i32, %arg1: i32) -> (i32, i32) {
    %c0_i32 = arith.constant 0 : i32
    %c0_i32_0 = arith.constant 0 : i32
    %c0_i32_1 = arith.constant 0 : i32
    return %c0_i32, %c0_i32_0 : i32, i32
  }
  func.func @transform_7(%arg0: i32, %arg1: i32) -> (i32, i32) {
    %c0_i32 = arith.constant 0 : i32
    %c0_i32_0 = arith.constant 0 : i32
    %c0_i32_1 = arith.constant 0 : i32
    return %c0_i32, %c0_i32_0 : i32, i32
  }
  func.func @transform_8(%arg0: i32, %arg1: i32) -> (i32, i32) {
    %c0_i32 = arith.constant 0 : i32
    %c0_i32_0 = arith.constant 0 : i32
    %c0_i32_1 = arith.constant 0 : i32
    return %c0_i32, %c0_i32_0 : i32, i32
  }
  func.func @transform_9(%arg0: i32, %arg1: i32) -> (i32, i32) {
    %c0_i32 = arith.constant 0 : i32
    %c0_i32_0 = arith.constant 0 : i32
    %c0_i32_1 = arith.constant 0 : i32
    return %c0_i32, %c0_i32_0 : i32, i32
  }
  func.func @transform_10(%arg0: i32, %arg1: i32) -> (i32, i32) {
    %c0_i32 = arith.constant 0 : i32
    %c0_i32_0 = arith.constant 0 : i32
    %c0_i32_1 = arith.constant 0 : i32
    return %c0_i32, %c0_i32_0 : i32, i32
  }
  func.func @transform_11(%arg0: i32, %arg1: i32) -> (i32, i32) {
    %c0_i32 = arith.constant 0 : i32
    %c0_i32_0 = arith.constant 0 : i32
    %c0_i32_1 = arith.constant 0 : i32
    return %c0_i32, %c0_i32_0 : i32, i32
  }
  func.func @transform_12(%arg0: i32, %arg1: i32) -> (i32, i32) {
    %c0_i32 = arith.constant 0 : i32
    %c0_i32_0 = arith.constant 0 : i32
    %c0_i32_1 = arith.constant 0 : i32
    return %c0_i32, %c0_i32_0 : i32, i32
  }
  func.func @transform_13(%arg0: i32, %arg1: i32) -> (i32, i32) {
    %c0_i32 = arith.constant 0 : i32
    %c0_i32_0 = arith.constant 0 : i32
    %c0_i32_1 = arith.constant 0 : i32
    return %c0_i32, %c0_i32_0 : i32, i32
  }
  func.func @transform_14(%arg0: i32, %arg1: i32) -> (i32, i32) {
    %c0_i32 = arith.constant 0 : i32
    %c0_i32_0 = arith.constant 0 : i32
    %c0_i32_1 = arith.constant 0 : i32
    return %c0_i32, %c0_i32_0 : i32, i32
  }
  func.func @transform_15(%arg0: i32, %arg1: i32) -> (i32, i32) {
    %c0_i32 = arith.constant 0 : i32
    %c0_i32_0 = arith.constant 0 : i32
    %c0_i32_1 = arith.constant 0 : i32
    return %c0_i32, %c0_i32_0 : i32, i32
  }
  func.func @transform_16(%arg0: i32, %arg1: i32) -> (i32, i32) {
    %c0_i32 = arith.constant 0 : i32
    %c0_i32_0 = arith.constant 0 : i32
    %c0_i32_1 = arith.constant 0 : i32
    return %c0_i32, %c0_i32_0 : i32, i32
  }
  func.func @transform_17(%arg0: i32, %arg1: i32) -> (i32, i32) {
    %c0_i32 = arith.constant 0 : i32
    %c0_i32_0 = arith.constant 0 : i32
    %c0_i32_1 = arith.constant 0 : i32
    return %c0_i32, %c0_i32_0 : i32, i32
  }
  func.func @transform_18(%arg0: i32, %arg1: i32) -> (i32, i32, i32) {
    %c0_i32 = arith.constant 0 : i32
    %c0_i32_0 = arith.constant 0 : i32
    %c0_i32_1 = arith.constant 0 : i32
    %c0_i32_2 = arith.constant 0 : i32
    return %c0_i32, %c0_i32_0, %c0_i32_1 : i32, i32, i32
  }
  func.func @transform_19(%arg0: i32, %arg1: i32) -> (i32, i32, i32) {
    %c0_i32 = arith.constant 0 : i32
    %c0_i32_0 = arith.constant 0 : i32
    %c0_i32_1 = arith.constant 0 : i32
    %c0_i32_2 = arith.constant 0 : i32
    return %c0_i32, %c0_i32_0, %c0_i32_1 : i32, i32, i32
  }
  func.func @transform_20(%arg0: i32, %arg1: i32) -> (i32, i32, i32) {
    %c0_i32 = arith.constant 0 : i32
    %c0_i32_0 = arith.constant 0 : i32
    %c0_i32_1 = arith.constant 0 : i32
    %c0_i32_2 = arith.constant 0 : i32
    return %c0_i32, %c0_i32_0, %c0_i32_1 : i32, i32, i32
  }
  func.func @transform_21(%arg0: i32, %arg1: i32) -> (i32, i32) {
    %c0_i32 = arith.constant 0 : i32
    %c0_i32_0 = arith.constant 0 : i32
    %c0_i32_1 = arith.constant 0 : i32
    return %c0_i32, %c0_i32_0 : i32, i32
  }
  func.func @transform_22(%arg0: i32, %arg1: i32) -> (i32, i32) {
    %c0_i32 = arith.constant 0 : i32
    %c0_i32_0 = arith.constant 0 : i32
    %c0_i32_1 = arith.constant 0 : i32
    return %c0_i32, %c0_i32_0 : i32, i32
  }
  func.func @transform_23(%arg0: i32, %arg1: i32) -> (i32, i32) {
    %c0_i32 = arith.constant 0 : i32
    %c0_i32_0 = arith.constant 0 : i32
    %c0_i32_1 = arith.constant 0 : i32
    return %c0_i32, %c0_i32_0 : i32, i32
  }
  func.func @transform_24(%arg0: i32, %arg1: i32) -> (i32, i32, i32) {
    %c0_i32 = arith.constant 0 : i32
    %c0_i32_0 = arith.constant 0 : i32
    return %arg0, %arg1, %c0_i32 : i32, i32, i32
  }
}

module attributes {stable_mosaic.version = 11 : i64} {
  func.func @_seq_block_kernel(%arg0: i32, %arg1: i32, %arg2: memref<1x16x32xf32, #tpu.memory_space<vmem>>, %arg3: memref<1x8x32xf32, #tpu.memory_space<vmem>>, %arg4: memref<8x16xf32, #tpu.memory_space<vmem>>, %arg5: memref<16x5xf32, #tpu.memory_space<vmem>>, %arg6: memref<8x5xf32, #tpu.memory_space<vmem>>, %arg7: memref<1x32xf32, #tpu.memory_space<vmem>>, %arg8: memref<1x32xf32, #tpu.memory_space<vmem>>, %arg9: memref<1x32xf32, #tpu.memory_space<vmem>>, %arg10: memref<32x32xbf16, #tpu.memory_space<vmem>>, %arg11: memref<1x32xf32, #tpu.memory_space<vmem>>, %arg12: memref<32x32xbf16, #tpu.memory_space<vmem>>, %arg13: memref<1x32xf32, #tpu.memory_space<vmem>>, %arg14: memref<32x32xbf16, #tpu.memory_space<vmem>>, %arg15: memref<1x32xf32, #tpu.memory_space<vmem>>, %arg16: memref<32x32xbf16, #tpu.memory_space<vmem>>, %arg17: memref<1x32xf32, #tpu.memory_space<vmem>>, %arg18: memref<1x32xf32, #tpu.memory_space<vmem>>, %arg19: memref<1x32xf32, #tpu.memory_space<vmem>>, %arg20: memref<1x32x128xbf16, #tpu.memory_space<vmem>>, %arg21: memref<1x1x128xf32, #tpu.memory_space<vmem>>, %arg22: memref<1x128x32xbf16, #tpu.memory_space<vmem>>, %arg23: memref<1x32xf32, #tpu.memory_space<vmem>>, %arg24: memref<1x32xf32, #tpu.memory_space<vmem>>, %arg25: memref<1x32xf32, #tpu.memory_space<vmem>>, %arg26: memref<1x8x32xf32, #tpu.memory_space<vmem>>, %arg27: memref<16x32xbf16, #tpu.memory_space<vmem>>, %arg28: memref<16x32xbf16, #tpu.memory_space<vmem>>, %arg29: memref<5x32xf32, #tpu.memory_space<vmem>>, %arg30: memref<8x32xf32, #tpu.memory_space<vmem>>) attributes {dimension_semantics = [#tpu.dimension_semantics<parallel>, #tpu.dimension_semantics<arbitrary>], iteration_bounds = array<i64: 2, 2>, scalar_prefetch = 0 : i64, scratch_operands = 4 : i64, tpu.core_type = #tpu.core_type<tc>, window_params = [{transform_indices = @transform_0, window_bounds = array<i64: 1, 16, 32>}, {transform_indices = @transform_1, window_bounds = array<i64: 1, 8, 32>}, {transform_indices = @transform_2, window_bounds = array<i64: 8, 16>}, {pipeline_mode = #tpu.pipeline_mode<synchronous>, transform_indices = @transform_3, window_bounds = array<i64: 16, 5>}, {transform_indices = @transform_4, window_bounds = array<i64: 8, 5>}, {pipeline_mode = #tpu.pipeline_mode<synchronous>, transform_indices = @transform_5, window_bounds = array<i64: 1, 32>}, {pipeline_mode = #tpu.pipeline_mode<synchronous>, transform_indices = @transform_6, window_bounds = array<i64: 1, 32>}, {pipeline_mode = #tpu.pipeline_mode<synchronous>, transform_indices = @transform_7, window_bounds = array<i64: 1, 32>}, {pipeline_mode = #tpu.pipeline_mode<synchronous>, transform_indices = @transform_8, window_bounds = array<i64: 32, 32>}, {pipeline_mode = #tpu.pipeline_mode<synchronous>, transform_indices = @transform_9, window_bounds = array<i64: 1, 32>}, {pipeline_mode = #tpu.pipeline_mode<synchronous>, transform_indices = @transform_10, window_bounds = array<i64: 32, 32>}, {pipeline_mode = #tpu.pipeline_mode<synchronous>, transform_indices = @transform_11, window_bounds = array<i64: 1, 32>}, {pipeline_mode = #tpu.pipeline_mode<synchronous>, transform_indices = @transform_12, window_bounds = array<i64: 32, 32>}, {pipeline_mode = #tpu.pipeline_mode<synchronous>, transform_indices = @transform_13, window_bounds = array<i64: 1, 32>}, {pipeline_mode = #tpu.pipeline_mode<synchronous>, transform_indices = @transform_14, window_bounds = array<i64: 32, 32>}, {pipeline_mode = #tpu.pipeline_mode<synchronous>, transform_indices = @transform_15, window_bounds = array<i64: 1, 32>}, {pipeline_mode = #tpu.pipeline_mode<synchronous>, transform_indices = @transform_16, window_bounds = array<i64: 1, 32>}, {pipeline_mode = #tpu.pipeline_mode<synchronous>, transform_indices = @transform_17, window_bounds = array<i64: 1, 32>}, {pipeline_mode = #tpu.pipeline_mode<synchronous>, transform_indices = @transform_18, window_bounds = array<i64: 1, 32, 128>}, {pipeline_mode = #tpu.pipeline_mode<synchronous>, transform_indices = @transform_19, window_bounds = array<i64: 1, 1, 128>}, {pipeline_mode = #tpu.pipeline_mode<synchronous>, transform_indices = @transform_20, window_bounds = array<i64: 1, 128, 32>}, {pipeline_mode = #tpu.pipeline_mode<synchronous>, transform_indices = @transform_21, window_bounds = array<i64: 1, 32>}, {pipeline_mode = #tpu.pipeline_mode<synchronous>, transform_indices = @transform_22, window_bounds = array<i64: 1, 32>}, {pipeline_mode = #tpu.pipeline_mode<synchronous>, transform_indices = @transform_23, window_bounds = array<i64: 1, 32>}, {transform_indices = @transform_24, window_bounds = array<i64: 1, 8, 32>}]} {
    %c0 = arith.constant 0 : index
    %c0_0 = arith.constant 0 : index
    %c0_1 = arith.constant 0 : index
    %0 = vector.load %arg3[%c0, %c0_0, %c0_1] : memref<1x8x32xf32, #tpu.memory_space<vmem>>, vector<1x8x32xf32>
    %1 = vector.shape_cast %0 : vector<1x8x32xf32> to vector<8x32xf32>
    %c0_i32 = arith.constant 0 : i32
    %2 = arith.cmpi eq, %arg1, %c0_i32 : i32
    %3 = arith.extui %2 : i1 to i32
    %c0_i32_2 = arith.constant 0 : i32
    %4 = arith.cmpi ne, %3, %c0_i32_2 : i32
    scf.if %4 {
      %c0_93 = arith.constant 0 : index
      %c0_94 = arith.constant 0 : index
      %c0_95 = arith.constant 0 : index
      %176 = vector.load %arg2[%c0_93, %c0_94, %c0_95] : memref<1x16x32xf32, #tpu.memory_space<vmem>>, vector<1x16x32xf32>
      %177 = vector.shape_cast %176 : vector<1x16x32xf32> to vector<16x32xf32>
      %178 = arith.truncf %177 : vector<16x32xf32> to vector<16x32xbf16>
      %c0_96 = arith.constant 0 : index
      %c0_97 = arith.constant 0 : index
      %179 = vector.load %arg12[%c0_96, %c0_97] : memref<32x32xbf16, #tpu.memory_space<vmem>>, vector<32x32xbf16>
      %cst_98 = arith.constant dense<0.000000e+00> : vector<16x32xf32>
      %180 = tpu.matmul %178, %179, %cst_98 {dimension_numbers = #tpu.dot_dimension_numbers<[1], [0], [0], [1], [0, 0, 1, 1], [], []>} : vector<16x32xbf16>, vector<32x32xbf16>, vector<16x32xf32> -> vector<16x32xf32>
      %c0_99 = arith.constant 0 : index
      %c0_100 = arith.constant 0 : index
      %181 = vector.load %arg13[%c0_99, %c0_100] : memref<1x32xf32, #tpu.memory_space<vmem>>, vector<1x32xf32>
      %182 = vector.broadcast %181 : vector<1x32xf32> to vector<16x32xf32>
      %183 = arith.addf %180, %182 : vector<16x32xf32>
      %184 = arith.truncf %183 : vector<16x32xf32> to vector<16x32xbf16>
      %c0_101 = arith.constant 0 : index
      %c0_102 = arith.constant 0 : index
      %185 = vector.load %arg27[%c0_101, %c0_102] : memref<16x32xbf16, #tpu.memory_space<vmem>>, vector<16x32xbf16>
      tpu.vector_store %arg27[%c0_101, %c0_102], %184 {strides = array<i32>} : memref<16x32xbf16, #tpu.memory_space<vmem>>, vector<16x32xbf16>,
      %c0_103 = arith.constant 0 : index
      %c0_104 = arith.constant 0 : index
      %186 = vector.load %arg14[%c0_103, %c0_104] : memref<32x32xbf16, #tpu.memory_space<vmem>>, vector<32x32xbf16>
      %cst_105 = arith.constant dense<0.000000e+00> : vector<16x32xf32>
      %187 = tpu.matmul %178, %186, %cst_105 {dimension_numbers = #tpu.dot_dimension_numbers<[1], [0], [0], [1], [0, 0, 1, 1], [], []>} : vector<16x32xbf16>, vector<32x32xbf16>, vector<16x32xf32> -> vector<16x32xf32>
      %c0_106 = arith.constant 0 : index
      %c0_107 = arith.constant 0 : index
      %188 = vector.load %arg15[%c0_106, %c0_107] : memref<1x32xf32, #tpu.memory_space<vmem>>, vector<1x32xf32>
      %189 = vector.broadcast %188 : vector<1x32xf32> to vector<16x32xf32>
      %190 = arith.addf %187, %189 : vector<16x32xf32>
      %191 = arith.truncf %190 : vector<16x32xf32> to vector<16x32xbf16>
      %c0_108 = arith.constant 0 : index
      %c0_109 = arith.constant 0 : index
      %192 = vector.load %arg28[%c0_108, %c0_109] : memref<16x32xbf16, #tpu.memory_space<vmem>>, vector<16x32xbf16>
      tpu.vector_store %arg28[%c0_108, %c0_109], %191 {strides = array<i32>} : memref<16x32xbf16, #tpu.memory_space<vmem>>, vector<16x32xbf16>,
      %c0_110 = arith.constant 0 : index
      %c0_111 = arith.constant 0 : index
      %193 = vector.load %arg5[%c0_110, %c0_111] : memref<16x5xf32, #tpu.memory_space<vmem>>, vector<16x5xf32>
      %cst_112 = arith.constant dense<0.000000e+00> : vector<5x32xf32>
      %194 = tpu.matmul %193, %177, %cst_112 {dimension_numbers = #tpu.dot_dimension_numbers<[0], [0], [1], [1], [0, 1, 1, 1], [], []>} : vector<16x5xf32>, vector<16x32xf32>, vector<5x32xf32> -> vector<5x32xf32>
      %c0_113 = arith.constant 0 : index
      %c0_114 = arith.constant 0 : index
      %195 = vector.load %arg29[%c0_113, %c0_114] : memref<5x32xf32, #tpu.memory_space<vmem>>, vector<5x32xf32>
      tpu.vector_store %arg29[%c0_113, %c0_114], %194 {strides = array<i32>} : memref<5x32xf32, #tpu.memory_space<vmem>>, vector<5x32xf32>,
    } else {
    }
    %c0_3 = arith.constant 0 : index
    %c0_4 = arith.constant 0 : index
    %5 = vector.load %arg6[%c0_3, %c0_4] : memref<8x5xf32, #tpu.memory_space<vmem>>, vector<8x5xf32>
    %c0_5 = arith.constant 0 : index
    %c0_6 = arith.constant 0 : index
    %6 = vector.load %arg29[%c0_5, %c0_6] : memref<5x32xf32, #tpu.memory_space<vmem>>, vector<5x32xf32>
    %cst = arith.constant dense<0.000000e+00> : vector<8x32xf32>
    %7 = tpu.matmul %5, %6, %cst {dimension_numbers = #tpu.dot_dimension_numbers<[1], [0], [0], [1], [0, 0, 1, 1], [], []>} : vector<8x5xf32>, vector<5x32xf32>, vector<8x32xf32> -> vector<8x32xf32>
    %c0_7 = arith.constant 0 : index
    %c0_8 = arith.constant 0 : index
    %8 = vector.load %arg7[%c0_7, %c0_8] : memref<1x32xf32, #tpu.memory_space<vmem>>, vector<1x32xf32>
    %c0_9 = arith.constant 0 : index
    %c0_10 = arith.constant 0 : index
    %9 = vector.load %arg7[%c0_9, %c0_10] : memref<1x32xf32, #tpu.memory_space<vmem>>, vector<1x32xf32>
    %10 = arith.mulf %8, %9 : vector<1x32xf32>
    %11 = arith.subf %1, %7 : vector<8x32xf32>
    %12 = vector.broadcast %10 : vector<1x32xf32> to vector<8x32xf32>
    %13 = arith.mulf %12, %11 : vector<8x32xf32>
    %14 = arith.addf %7, %13 : vector<8x32xf32>
    %15 = arith.addf %14, %1 : vector<8x32xf32>
    %c0_11 = arith.constant 0 : index
    %c0_12 = arith.constant 0 : index
    %16 = vector.load %arg8[%c0_11, %c0_12] : memref<1x32xf32, #tpu.memory_space<vmem>>, vector<1x32xf32>
    %c0_13 = arith.constant 0 : index
    %c0_14 = arith.constant 0 : index
    %17 = vector.load %arg9[%c0_13, %c0_14] : memref<1x32xf32, #tpu.memory_space<vmem>>, vector<1x32xf32>
    %cst_15 = arith.constant dense<0.000000e+00> : vector<8xf32>
    %18 = vector.multi_reduction <add>, %15, %cst_15 [1] : vector<8x32xf32> to vector<8xf32>
    %19 = vector.shape_cast %18 : vector<8xf32> to vector<8x1xf32>
    %cst_16 = arith.constant 3.200000e+01 : f32
    %20 = vector.broadcast %cst_16 : f32 to vector<8x1xf32>
    %21 = arith.divf %19, %20 : vector<8x1xf32>
    %22 = vector.broadcast %21 : vector<8x1xf32> to vector<8x32xf32>
    %23 = arith.subf %15, %22 : vector<8x32xf32>
    %24 = arith.mulf %23, %23 : vector<8x32xf32>
    %cst_17 = arith.constant dense<0.000000e+00> : vector<8xf32>
    %25 = vector.multi_reduction <add>, %24, %cst_17 [1] : vector<8x32xf32> to vector<8xf32>
    %26 = vector.shape_cast %25 : vector<8xf32> to vector<8x1xf32>
    %cst_18 = arith.constant 3.200000e+01 : f32
    %27 = vector.broadcast %cst_18 : f32 to vector<8x1xf32>
    %28 = arith.divf %26, %27 : vector<8x1xf32>
    %cst_19 = arith.constant 9.99999996E-13 : f32
    %29 = vector.broadcast %cst_19 : f32 to vector<8x1xf32>
    %30 = arith.addf %28, %29 : vector<8x1xf32>
    %31 = math.rsqrt %30 : vector<8x1xf32>
    %32 = vector.broadcast %31 : vector<8x1xf32> to vector<8x32xf32>
    %33 = arith.mulf %23, %32 : vector<8x32xf32>
    %34 = vector.broadcast %16 : vector<1x32xf32> to vector<8x32xf32>
    %35 = arith.mulf %34, %33 : vector<8x32xf32>
    %36 = vector.broadcast %17 : vector<1x32xf32> to vector<8x32xf32>
    %37 = arith.addf %35, %36 : vector<8x32xf32>
    %38 = arith.truncf %1 : vector<8x32xf32> to vector<8x32xbf16>
    %c0_20 = arith.constant 0 : index
    %c0_21 = arith.constant 0 : index
    %39 = vector.load %arg10[%c0_20, %c0_21] : memref<32x32xbf16, #tpu.memory_space<vmem>>, vector<32x32xbf16>
    %cst_22 = arith.constant dense<0.000000e+00> : vector<8x32xf32>
    %40 = tpu.matmul %38, %39, %cst_22 {dimension_numbers = #tpu.dot_dimension_numbers<[1], [0], [0], [1], [0, 0, 1, 1], [], []>} : vector<8x32xbf16>, vector<32x32xbf16>, vector<8x32xf32> -> vector<8x32xf32>
    %c0_23 = arith.constant 0 : index
    %c0_24 = arith.constant 0 : index
    %41 = vector.load %arg11[%c0_23, %c0_24] : memref<1x32xf32, #tpu.memory_space<vmem>>, vector<1x32xf32>
    %42 = vector.broadcast %41 : vector<1x32xf32> to vector<8x32xf32>
    %43 = arith.addf %40, %42 : vector<8x32xf32>
    %c0_25 = arith.constant 0 : index
    %c0_26 = arith.constant 0 : index
    %44 = vector.load %arg4[%c0_25, %c0_26] : memref<8x16xf32, #tpu.memory_space<vmem>>, vector<8x16xf32>
    %45 = vector.extract_strided_slice %43 {offsets = [0, 0], sizes = [8, 16], strides = [1, 1]} : vector<8x32xf32> to vector<8x16xf32>
    %46 = arith.truncf %45 : vector<8x16xf32> to vector<8x16xbf16>
    %c0_27 = arith.constant 0 : index
    %c0_28 = arith.constant 0 : index
    %47 = vector.load %arg27[%c0_27, %c0_28] : memref<16x32xbf16, #tpu.memory_space<vmem>>, vector<16x16xbf16>
    %cst_29 = arith.constant dense<0.000000e+00> : vector<8x16xf32>
    %48 = tpu.matmul %46, %47, %cst_29 {dimension_numbers = #tpu.dot_dimension_numbers<[1], [1], [0], [0], [0, 0, 1, 0], [], []>} : vector<8x16xbf16>, vector<16x16xbf16>, vector<8x16xf32> -> vector<8x16xf32>
    %cst_30 = arith.constant 2.500000e-01 : f32
    %49 = vector.broadcast %cst_30 : f32 to vector<8x16xf32>
    %50 = arith.mulf %48, %49 : vector<8x16xf32>
    %51 = arith.addf %50, %44 : vector<8x16xf32>
    %cst_31 = arith.constant dense<0xFF800000> : vector<8xf32>
    %52 = vector.multi_reduction <maximumf>, %51, %cst_31 [1] : vector<8x16xf32> to vector<8xf32>
    %53 = vector.shape_cast %52 : vector<8xf32> to vector<8x1xf32>
    %54 = vector.broadcast %53 : vector<8x1xf32> to vector<8x16xf32>
    %55 = arith.subf %51, %54 : vector<8x16xf32>
    %56 = math.exp %55 : vector<8x16xf32>
    %cst_32 = arith.constant dense<0.000000e+00> : vector<8xf32>
    %57 = vector.multi_reduction <add>, %56, %cst_32 [1] : vector<8x16xf32> to vector<8xf32>
    %58 = vector.shape_cast %57 : vector<8xf32> to vector<8x1xf32>
    %59 = tpu.reciprocal %58 {approx = true} : vector<8x1xf32> -> vector<8x1xf32>
    %60 = vector.broadcast %59 : vector<8x1xf32> to vector<8x16xf32>
    %61 = arith.mulf %56, %60 : vector<8x16xf32>
    %62 = arith.truncf %61 : vector<8x16xf32> to vector<8x16xbf16>
    %c0_33 = arith.constant 0 : index
    %c0_34 = arith.constant 0 : index
    %63 = vector.load %arg28[%c0_33, %c0_34] : memref<16x32xbf16, #tpu.memory_space<vmem>>, vector<16x16xbf16>
    %cst_35 = arith.constant dense<0.000000e+00> : vector<8x16xf32>
    %64 = tpu.matmul %62, %63, %cst_35 {dimension_numbers = #tpu.dot_dimension_numbers<[1], [0], [0], [1], [0, 0, 1, 1], [], []>} : vector<8x16xbf16>, vector<16x16xbf16>, vector<8x16xf32> -> vector<8x16xf32>
    %c0_36 = arith.constant 0 : index
    %c0_37 = arith.constant 0 : index
    %65 = vector.load %arg30[%c0_36, %c0_37] : memref<8x32xf32, #tpu.memory_space<vmem>>, vector<8x16xf32>
    tpu.vector_store %arg30[%c0_36, %c0_37], %64 {strides = array<i32>} : memref<8x32xf32, #tpu.memory_space<vmem>>, vector<8x16xf32>,
    %66 = vector.extract_strided_slice %43 {offsets = [0, 16], sizes = [8, 16], strides = [1, 1]} : vector<8x32xf32> to vector<8x16xf32>
    %67 = arith.truncf %66 : vector<8x16xf32> to vector<8x16xbf16>
    %c0_38 = arith.constant 0 : index
    %c16 = arith.constant 16 : index
    %68 = vector.load %arg27[%c0_38, %c16] : memref<16x32xbf16, #tpu.memory_space<vmem>>, vector<16x16xbf16>
    %cst_39 = arith.constant dense<0.000000e+00> : vector<8x16xf32>
    %69 = tpu.matmul %67, %68, %cst_39 {dimension_numbers = #tpu.dot_dimension_numbers<[1], [1], [0], [0], [0, 0, 1, 0], [], []>} : vector<8x16xbf16>, vector<16x16xbf16>, vector<8x16xf32> -> vector<8x16xf32>
    %cst_40 = arith.constant 2.500000e-01 : f32
    %70 = vector.broadcast %cst_40 : f32 to vector<8x16xf32>
    %71 = arith.mulf %69, %70 : vector<8x16xf32>
    %72 = arith.addf %71, %44 : vector<8x16xf32>
    %cst_41 = arith.constant dense<0xFF800000> : vector<8xf32>
    %73 = vector.multi_reduction <maximumf>, %72, %cst_41 [1] : vector<8x16xf32> to vector<8xf32>
    %74 = vector.shape_cast %73 : vector<8xf32> to vector<8x1xf32>
    %75 = vector.broadcast %74 : vector<8x1xf32> to vector<8x16xf32>
    %76 = arith.subf %72, %75 : vector<8x16xf32>
    %77 = math.exp %76 : vector<8x16xf32>
    %cst_42 = arith.constant dense<0.000000e+00> : vector<8xf32>
    %78 = vector.multi_reduction <add>, %77, %cst_42 [1] : vector<8x16xf32> to vector<8xf32>
    %79 = vector.shape_cast %78 : vector<8xf32> to vector<8x1xf32>
    %80 = tpu.reciprocal %79 {approx = true} : vector<8x1xf32> -> vector<8x1xf32>
    %81 = vector.broadcast %80 : vector<8x1xf32> to vector<8x16xf32>
    %82 = arith.mulf %77, %81 : vector<8x16xf32>
    %83 = arith.truncf %82 : vector<8x16xf32> to vector<8x16xbf16>
    %c0_43 = arith.constant 0 : index
    %c16_44 = arith.constant 16 : index
    %84 = vector.load %arg28[%c0_43, %c16_44] : memref<16x32xbf16, #tpu.memory_space<vmem>>, vector<16x16xbf16>
    %cst_45 = arith.constant dense<0.000000e+00> : vector<8x16xf32>
    %85 = tpu.matmul %83, %84, %cst_45 {dimension_numbers = #tpu.dot_dimension_numbers<[1], [0], [0], [1], [0, 0, 1, 1], [], []>} : vector<8x16xbf16>, vector<16x16xbf16>, vector<8x16xf32> -> vector<8x16xf32>
    %c0_46 = arith.constant 0 : index
    %c16_47 = arith.constant 16 : index
    %86 = vector.load %arg30[%c0_46, %c16_47] : memref<8x32xf32, #tpu.memory_space<vmem>>, vector<8x16xf32>
    tpu.vector_store %arg30[%c0_46, %c16_47], %85 {strides = array<i32>} : memref<8x32xf32, #tpu.memory_space<vmem>>, vector<8x16xf32>,
    %c0_48 = arith.constant 0 : index
    %c0_49 = arith.constant 0 : index
    %87 = vector.load %arg30[%c0_48, %c0_49] : memref<8x32xf32, #tpu.memory_space<vmem>>, vector<8x32xf32>
    %88 = arith.truncf %87 : vector<8x32xf32> to vector<8x32xbf16>
    %c0_50 = arith.constant 0 : index
    %c0_51 = arith.constant 0 : index
    %89 = vector.load %arg16[%c0_50, %c0_51] : memref<32x32xbf16, #tpu.memory_space<vmem>>, vector<32x32xbf16>
    %cst_52 = arith.constant dense<0.000000e+00> : vector<8x32xf32>
    %90 = tpu.matmul %88, %89, %cst_52 {dimension_numbers = #tpu.dot_dimension_numbers<[1], [0], [0], [1], [0, 0, 1, 1], [], []>} : vector<8x32xbf16>, vector<32x32xbf16>, vector<8x32xf32> -> vector<8x32xf32>
    %c0_53 = arith.constant 0 : index
    %c0_54 = arith.constant 0 : index
    %91 = vector.load %arg17[%c0_53, %c0_54] : memref<1x32xf32, #tpu.memory_space<vmem>>, vector<1x32xf32>
    %92 = vector.broadcast %91 : vector<1x32xf32> to vector<8x32xf32>
    %93 = arith.addf %90, %92 : vector<8x32xf32>
    %94 = arith.addf %93, %1 : vector<8x32xf32>
    %c0_55 = arith.constant 0 : index
    %c0_56 = arith.constant 0 : index
    %95 = vector.load %arg18[%c0_55, %c0_56] : memref<1x32xf32, #tpu.memory_space<vmem>>, vector<1x32xf32>
    %c0_57 = arith.constant 0 : index
    %c0_58 = arith.constant 0 : index
    %96 = vector.load %arg19[%c0_57, %c0_58] : memref<1x32xf32, #tpu.memory_space<vmem>>, vector<1x32xf32>
    %cst_59 = arith.constant dense<0.000000e+00> : vector<8xf32>
    %97 = vector.multi_reduction <add>, %94, %cst_59 [1] : vector<8x32xf32> to vector<8xf32>
    %98 = vector.shape_cast %97 : vector<8xf32> to vector<8x1xf32>
    %cst_60 = arith.constant 3.200000e+01 : f32
    %99 = vector.broadcast %cst_60 : f32 to vector<8x1xf32>
    %100 = arith.divf %98, %99 : vector<8x1xf32>
    %101 = vector.broadcast %100 : vector<8x1xf32> to vector<8x32xf32>
    %102 = arith.subf %94, %101 : vector<8x32xf32>
    %103 = arith.mulf %102, %102 : vector<8x32xf32>
    %cst_61 = arith.constant dense<0.000000e+00> : vector<8xf32>
    %104 = vector.multi_reduction <add>, %103, %cst_61 [1] : vector<8x32xf32> to vector<8xf32>
    %105 = vector.shape_cast %104 : vector<8xf32> to vector<8x1xf32>
    %cst_62 = arith.constant 3.200000e+01 : f32
    %106 = vector.broadcast %cst_62 : f32 to vector<8x1xf32>
    %107 = arith.divf %105, %106 : vector<8x1xf32>
    %cst_63 = arith.constant 9.99999996E-13 : f32
    %108 = vector.broadcast %cst_63 : f32 to vector<8x1xf32>
    %109 = arith.addf %107, %108 : vector<8x1xf32>
    %110 = math.rsqrt %109 : vector<8x1xf32>
    %111 = vector.broadcast %110 : vector<8x1xf32> to vector<8x32xf32>
    %112 = arith.mulf %102, %111 : vector<8x32xf32>
    %113 = vector.broadcast %95 : vector<1x32xf32> to vector<8x32xf32>
    %114 = arith.mulf %113, %112 : vector<8x32xf32>
    %115 = vector.broadcast %96 : vector<1x32xf32> to vector<8x32xf32>
    %116 = arith.addf %114, %115 : vector<8x32xf32>
    %cst_64 = arith.constant 5.000000e-01 : f32
    %117 = vector.broadcast %cst_64 : f32 to vector<8x32xf32>
    %118 = arith.mulf %117, %37 : vector<8x32xf32>
    %cst_65 = arith.constant 5.000000e-01 : f32
    %119 = vector.broadcast %cst_65 : f32 to vector<8x32xf32>
    %120 = arith.mulf %119, %116 : vector<8x32xf32>
    %121 = arith.addf %118, %120 : vector<8x32xf32>
    %122 = arith.truncf %121 : vector<8x32xf32> to vector<8x32xbf16>
    %cst_66 = arith.constant 0.000000e+00 : f32
    %123 = vector.broadcast %cst_66 : f32 to vector<8x32xf32>
    %c0_i32_67 = arith.constant 0 : i32
    %124 = arith.index_cast %c0_i32_67 : i32 to index
    %c0_68 = arith.constant 0 : index
    %c0_69 = arith.constant 0 : index
    %125 = vector.load %arg20[%124, %c0_68, %c0_69] : memref<1x32x128xbf16, #tpu.memory_space<vmem>>, vector<1x32x128xbf16>
    %126 = vector.shape_cast %125 : vector<1x32x128xbf16> to vector<32x128xbf16>
    %cst_70 = arith.constant dense<0.000000e+00> : vector<8x128xf32>
    %127 = tpu.matmul %122, %126, %cst_70 {dimension_numbers = #tpu.dot_dimension_numbers<[1], [0], [0], [1], [0, 0, 1, 1], [], []>} : vector<8x32xbf16>, vector<32x128xbf16>, vector<8x128xf32> -> vector<8x128xf32>
    %128 = arith.index_cast %c0_i32_67 : i32 to index
    %c0_71 = arith.constant 0 : index
    %c0_72 = arith.constant 0 : index
    %129 = vector.load %arg21[%128, %c0_71, %c0_72] : memref<1x1x128xf32, #tpu.memory_space<vmem>>, vector<1x1x128xf32>
    %130 = vector.shape_cast %129 : vector<1x1x128xf32> to vector<1x128xf32>
    %131 = vector.broadcast %130 : vector<1x128xf32> to vector<8x128xf32>
    %132 = arith.addf %127, %131 : vector<8x128xf32>
    %cst_73 = arith.constant 5.000000e-01 : f32
    %133 = vector.broadcast %cst_73 : f32 to vector<8x128xf32>
    %134 = arith.mulf %132, %133 : vector<8x128xf32>
    %cst_74 = arith.constant 0.707106769 : f32
    %135 = vector.broadcast %cst_74 : f32 to vector<8x128xf32>
    %136 = arith.mulf %132, %135 : vector<8x128xf32>
    %137 = math.erf %136 : vector<8x128xf32>
    %cst_75 = arith.constant 1.000000e+00 : f32
    %138 = vector.broadcast %cst_75 : f32 to vector<8x128xf32>
    %139 = arith.addf %138, %137 : vector<8x128xf32>
    %140 = arith.mulf %134, %139 : vector<8x128xf32>
    %141 = arith.truncf %140 : vector<8x128xf32> to vector<8x128xbf16>
    %142 = arith.index_cast %c0_i32_67 : i32 to index
    %c0_76 = arith.constant 0 : index
    %c0_77 = arith.constant 0 : index
    %143 = vector.load %arg22[%142, %c0_76, %c0_77] : memref<1x128x32xbf16, #tpu.memory_space<vmem>>, vector<1x128x32xbf16>
    %144 = vector.shape_cast %143 : vector<1x128x32xbf16> to vector<128x32xbf16>
    %cst_78 = arith.constant dense<0.000000e+00> : vector<8x32xf32>
    %145 = tpu.matmul %141, %144, %cst_78 {dimension_numbers = #tpu.dot_dimension_numbers<[1], [0], [0], [1], [0, 0, 1, 1], [], []>} : vector<8x128xbf16>, vector<128x32xbf16>, vector<8x32xf32> -> vector<8x32xf32>
    %146 = arith.addf %123, %145 : vector<8x32xf32>
    %c1_i32 = arith.constant 1 : i32
    %c0_79 = arith.constant 0 : index
    %c0_80 = arith.constant 0 : index
    %147 = vector.load %arg23[%c0_79, %c0_80] : memref<1x32xf32, #tpu.memory_space<vmem>>, vector<1x32xf32>
    %148 = vector.broadcast %147 : vector<1x32xf32> to vector<8x32xf32>
    %149 = arith.addf %146, %148 : vector<8x32xf32>
    %150 = arith.addf %149, %121 : vector<8x32xf32>
    %c0_81 = arith.constant 0 : index
    %c0_82 = arith.constant 0 : index
    %151 = vector.load %arg24[%c0_81, %c0_82] : memref<1x32xf32, #tpu.memory_space<vmem>>, vector<1x32xf32>
    %c0_83 = arith.constant 0 : index
    %c0_84 = arith.constant 0 : index
    %152 = vector.load %arg25[%c0_83, %c0_84] : memref<1x32xf32, #tpu.memory_space<vmem>>, vector<1x32xf32>
    %cst_85 = arith.constant dense<0.000000e+00> : vector<8xf32>
    %153 = vector.multi_reduction <add>, %150, %cst_85 [1] : vector<8x32xf32> to vector<8xf32>
    %154 = vector.shape_cast %153 : vector<8xf32> to vector<8x1xf32>
    %cst_86 = arith.constant 3.200000e+01 : f32
    %155 = vector.broadcast %cst_86 : f32 to vector<8x1xf32>
    %156 = arith.divf %154, %155 : vector<8x1xf32>
    %157 = vector.broadcast %156 : vector<8x1xf32> to vector<8x32xf32>
    %158 = arith.subf %150, %157 : vector<8x32xf32>
    %159 = arith.mulf %158, %158 : vector<8x32xf32>
    %cst_87 = arith.constant dense<0.000000e+00> : vector<8xf32>
    %160 = vector.multi_reduction <add>, %159, %cst_87 [1] : vector<8x32xf32> to vector<8xf32>
    %161 = vector.shape_cast %160 : vector<8xf32> to vector<8x1xf32>
    %cst_88 = arith.constant 3.200000e+01 : f32
    %162 = vector.broadcast %cst_88 : f32 to vector<8x1xf32>
    %163 = arith.divf %161, %162 : vector<8x1xf32>
    %cst_89 = arith.constant 9.99999996E-13 : f32
    %164 = vector.broadcast %cst_89 : f32 to vector<8x1xf32>
    %165 = arith.addf %163, %164 : vector<8x1xf32>
    %166 = math.rsqrt %165 : vector<8x1xf32>
    %167 = vector.broadcast %166 : vector<8x1xf32> to vector<8x32xf32>
    %168 = arith.mulf %158, %167 : vector<8x32xf32>
    %169 = vector.broadcast %151 : vector<1x32xf32> to vector<8x32xf32>
    %170 = arith.mulf %169, %168 : vector<8x32xf32>
    %171 = vector.broadcast %152 : vector<1x32xf32> to vector<8x32xf32>
    %172 = arith.addf %170, %171 : vector<8x32xf32>
    %c0_90 = arith.constant 0 : index
    %c0_91 = arith.constant 0 : index
    %c0_92 = arith.constant 0 : index
    %173 = vector.load %arg26[%c0_90, %c0_91, %c0_92] : memref<1x8x32xf32, #tpu.memory_space<vmem>>, vector<1x8x32xf32>
    %174 = vector.shape_cast %173 : vector<1x8x32xf32> to vector<8x32xf32>
    %175 = vector.shape_cast %172 : vector<8x32xf32> to vector<1x8x32xf32>
    tpu.vector_store %arg26[%c0_90, %c0_91, %c0_92], %175 {strides = array<i32>} : memref<1x8x32xf32, #tpu.memory_space<vmem>>, vector<1x8x32xf32>,
    return
  }
  func.func @transform_0(%arg0: i32, %arg1: i32) -> (i32, i32, i32) {
    %c0_i32 = arith.constant 0 : i32
    %c0_i32_0 = arith.constant 0 : i32
    %c0_i32_1 = arith.constant 0 : i32
    return %arg0, %c0_i32, %c0_i32_0 : i32, i32, i32
  }
  func.func @transform_1(%arg0: i32, %arg1: i32) -> (i32, i32, i32) {
    %c0_i32 = arith.constant 0 : i32
    %c0_i32_0 = arith.constant 0 : i32
    return %arg0, %arg1, %c0_i32 : i32, i32, i32
  }
  func.func @transform_2(%arg0: i32, %arg1: i32) -> (i32, i32) {
    %c0_i32 = arith.constant 0 : i32
    %c0_i32_0 = arith.constant 0 : i32
    return %arg1, %c0_i32 : i32, i32
  }
  func.func @transform_3(%arg0: i32, %arg1: i32) -> (i32, i32) {
    %c0_i32 = arith.constant 0 : i32
    %c0_i32_0 = arith.constant 0 : i32
    %c0_i32_1 = arith.constant 0 : i32
    return %c0_i32, %c0_i32_0 : i32, i32
  }
  func.func @transform_4(%arg0: i32, %arg1: i32) -> (i32, i32) {
    %c0_i32 = arith.constant 0 : i32
    %c0_i32_0 = arith.constant 0 : i32
    return %arg1, %c0_i32 : i32, i32
  }
  func.func @transform_5(%arg0: i32, %arg1: i32) -> (i32, i32) {
    %c0_i32 = arith.constant 0 : i32
    %c0_i32_0 = arith.constant 0 : i32
    %c0_i32_1 = arith.constant 0 : i32
    return %c0_i32, %c0_i32_0 : i32, i32
  }
  func.func @transform_6(%arg0: i32, %arg1: i32) -> (i32, i32) {
    %c0_i32 = arith.constant 0 : i32
    %c0_i32_0 = arith.constant 0 : i32
    %c0_i32_1 = arith.constant 0 : i32
    return %c0_i32, %c0_i32_0 : i32, i32
  }
  func.func @transform_7(%arg0: i32, %arg1: i32) -> (i32, i32) {
    %c0_i32 = arith.constant 0 : i32
    %c0_i32_0 = arith.constant 0 : i32
    %c0_i32_1 = arith.constant 0 : i32
    return %c0_i32, %c0_i32_0 : i32, i32
  }
  func.func @transform_8(%arg0: i32, %arg1: i32) -> (i32, i32) {
    %c0_i32 = arith.constant 0 : i32
    %c0_i32_0 = arith.constant 0 : i32
    %c0_i32_1 = arith.constant 0 : i32
    return %c0_i32, %c0_i32_0 : i32, i32
  }
  func.func @transform_9(%arg0: i32, %arg1: i32) -> (i32, i32) {
    %c0_i32 = arith.constant 0 : i32
    %c0_i32_0 = arith.constant 0 : i32
    %c0_i32_1 = arith.constant 0 : i32
    return %c0_i32, %c0_i32_0 : i32, i32
  }
  func.func @transform_10(%arg0: i32, %arg1: i32) -> (i32, i32) {
    %c0_i32 = arith.constant 0 : i32
    %c0_i32_0 = arith.constant 0 : i32
    %c0_i32_1 = arith.constant 0 : i32
    return %c0_i32, %c0_i32_0 : i32, i32
  }
  func.func @transform_11(%arg0: i32, %arg1: i32) -> (i32, i32) {
    %c0_i32 = arith.constant 0 : i32
    %c0_i32_0 = arith.constant 0 : i32
    %c0_i32_1 = arith.constant 0 : i32
    return %c0_i32, %c0_i32_0 : i32, i32
  }
  func.func @transform_12(%arg0: i32, %arg1: i32) -> (i32, i32) {
    %c0_i32 = arith.constant 0 : i32
    %c0_i32_0 = arith.constant 0 : i32
    %c0_i32_1 = arith.constant 0 : i32
    return %c0_i32, %c0_i32_0 : i32, i32
  }
  func.func @transform_13(%arg0: i32, %arg1: i32) -> (i32, i32) {
    %c0_i32 = arith.constant 0 : i32
    %c0_i32_0 = arith.constant 0 : i32
    %c0_i32_1 = arith.constant 0 : i32
    return %c0_i32, %c0_i32_0 : i32, i32
  }
  func.func @transform_14(%arg0: i32, %arg1: i32) -> (i32, i32) {
    %c0_i32 = arith.constant 0 : i32
    %c0_i32_0 = arith.constant 0 : i32
    %c0_i32_1 = arith.constant 0 : i32
    return %c0_i32, %c0_i32_0 : i32, i32
  }
  func.func @transform_15(%arg0: i32, %arg1: i32) -> (i32, i32) {
    %c0_i32 = arith.constant 0 : i32
    %c0_i32_0 = arith.constant 0 : i32
    %c0_i32_1 = arith.constant 0 : i32
    return %c0_i32, %c0_i32_0 : i32, i32
  }
  func.func @transform_16(%arg0: i32, %arg1: i32) -> (i32, i32) {
    %c0_i32 = arith.constant 0 : i32
    %c0_i32_0 = arith.constant 0 : i32
    %c0_i32_1 = arith.constant 0 : i32
    return %c0_i32, %c0_i32_0 : i32, i32
  }
  func.func @transform_17(%arg0: i32, %arg1: i32) -> (i32, i32) {
    %c0_i32 = arith.constant 0 : i32
    %c0_i32_0 = arith.constant 0 : i32
    %c0_i32_1 = arith.constant 0 : i32
    return %c0_i32, %c0_i32_0 : i32, i32
  }
  func.func @transform_18(%arg0: i32, %arg1: i32) -> (i32, i32, i32) {
    %c0_i32 = arith.constant 0 : i32
    %c0_i32_0 = arith.constant 0 : i32
    %c0_i32_1 = arith.constant 0 : i32
    %c0_i32_2 = arith.constant 0 : i32
    return %c0_i32, %c0_i32_0, %c0_i32_1 : i32, i32, i32
  }
  func.func @transform_19(%arg0: i32, %arg1: i32) -> (i32, i32, i32) {
    %c0_i32 = arith.constant 0 : i32
    %c0_i32_0 = arith.constant 0 : i32
    %c0_i32_1 = arith.constant 0 : i32
    %c0_i32_2 = arith.constant 0 : i32
    return %c0_i32, %c0_i32_0, %c0_i32_1 : i32, i32, i32
  }
  func.func @transform_20(%arg0: i32, %arg1: i32) -> (i32, i32, i32) {
    %c0_i32 = arith.constant 0 : i32
    %c0_i32_0 = arith.constant 0 : i32
    %c0_i32_1 = arith.constant 0 : i32
    %c0_i32_2 = arith.constant 0 : i32
    return %c0_i32, %c0_i32_0, %c0_i32_1 : i32, i32, i32
  }
  func.func @transform_21(%arg0: i32, %arg1: i32) -> (i32, i32) {
    %c0_i32 = arith.constant 0 : i32
    %c0_i32_0 = arith.constant 0 : i32
    %c0_i32_1 = arith.constant 0 : i32
    return %c0_i32, %c0_i32_0 : i32, i32
  }
  func.func @transform_22(%arg0: i32, %arg1: i32) -> (i32, i32) {
    %c0_i32 = arith.constant 0 : i32
    %c0_i32_0 = arith.constant 0 : i32
    %c0_i32_1 = arith.constant 0 : i32
    return %c0_i32, %c0_i32_0 : i32, i32
  }
  func.func @transform_23(%arg0: i32, %arg1: i32) -> (i32, i32) {
    %c0_i32 = arith.constant 0 : i32
    %c0_i32_0 = arith.constant 0 : i32
    %c0_i32_1 = arith.constant 0 : i32
    return %c0_i32, %c0_i32_0 : i32, i32
  }
  func.func @transform_24(%arg0: i32, %arg1: i32) -> (i32, i32, i32) {
    %c0_i32 = arith.constant 0 : i32
    %c0_i32_0 = arith.constant 0 : i32
    return %arg0, %arg1, %c0_i32 : i32, i32, i32
  }
}

</mosaic_0001>

<llo_original>
// kernel: tpu_custom_call.1
$region0: #{tpu_custom_call.1}
  #allocation0 [shape = 'u32[]', space=smem, size = 0x4, offset = 0x4, fixed_abs, tag = 'smem constant byte address 0x4 - core index']
  #allocation1 [shape = 'u32[144,128]{1,0:T(1,128)}', space=vmem, size = 0x12000, scoped, tag = 'internal scratch']
  #allocation2 [shape = 'bf16[16,32]{1,0:T(16,128)(2,1)}', space=vmem, size = 0x1000, scoped, tag = 'scratch operand']
  #allocation3 [shape = 'bf16[16,32]{1,0:T(16,128)(2,1)}', space=vmem, size = 0x1000, scoped, tag = 'scratch operand']
  #allocation4 [shape = 'f32[5,32]{1,0:T(8,128)}', space=vmem, size = 0x1000, scoped, tag = 'scratch operand']
  #allocation5 [shape = 'f32[8,32]{1,0:T(8,128)}', space=vmem, size = 0x1000, scoped, tag = 'scratch operand']
  %s0 = inlined_call_operand.vmem [shape: f32[2,16,32], index: 0, kind: input, shape index: {}]
  %s1 = inlined_call_operand.vmem [shape: f32[2,16,32], index: 1, kind: input, shape index: {}]
  %s2 = inlined_call_operand.vmem [shape: f32[16,16], index: 2, kind: input, shape index: {}]
  %s3 = inlined_call_operand.vmem [shape: f32[16,5], index: 3, kind: input, shape index: {}]
  %s4 = inlined_call_operand.vmem [shape: f32[16,5], index: 4, kind: input, shape index: {}]
  %s5 = inlined_call_operand.vmem [shape: f32[1,32], index: 5, kind: input, shape index: {}]
  %s6 = inlined_call_operand.hbm [shape: f32[1,32], index: 6, kind: input, shape index: {}]
  %s7 = inlined_call_operand.hbm [shape: f32[1,32], index: 7, kind: input, shape index: {}]
  %s8 = inlined_call_operand.vmem [shape: bf16[32,32], index: 8, kind: input, shape index: {}]
  %s9 = inlined_call_operand.hbm [shape: f32[1,32], index: 9, kind: input, shape index: {}]
  %s10 = inlined_call_operand.vmem [shape: bf16[32,32], index: 10, kind: input, shape index: {}]
  %s11 = inlined_call_operand.hbm [shape: f32[1,32], index: 11, kind: input, shape index: {}]
  %s12 = inlined_call_operand.vmem [shape: bf16[32,32], index: 12, kind: input, shape index: {}]
  %s13 = inlined_call_operand.hbm [shape: f32[1,32], index: 13, kind: input, shape index: {}]
  %s14 = inlined_call_operand.vmem [shape: bf16[32,32], index: 14, kind: input, shape index: {}]
  %s15 = inlined_call_operand.vmem [shape: f32[1,32], index: 15, kind: input, shape index: {}]
  %s16 = inlined_call_operand.vmem [shape: f32[1,32], index: 16, kind: input, shape index: {}]
  %s17 = inlined_call_operand.vmem [shape: f32[1,32], index: 17, kind: input, shape index: {}]
  %s18 = inlined_call_operand.vmem [shape: bf16[1,32,128], index: 18, kind: input, shape index: {}]
  %s19 = inlined_call_operand.vmem [shape: f32[1,1,128], index: 19, kind: input, shape index: {}]
  %s20 = inlined_call_operand.vmem [shape: bf16[1,128,32], index: 20, kind: input, shape index: {}]
  %s21 = inlined_call_operand.vmem [shape: f32[1,32], index: 21, kind: input, shape index: {}]
  %s22 = inlined_call_operand.vmem [shape: f32[1,32], index: 22, kind: input, shape index: {}]
  %s23 = inlined_call_operand.vmem [shape: f32[1,32], index: 23, kind: input, shape index: {}]
  %s24 = inlined_call_operand.hbm [shape: f32[2,16,32], index: 24, kind: output, shape index: {}]
  %s25 = sld [smem:[#allocation0]]
  $region153: #{tpu_custom_call.1} parent=0
    _
  %s27 = ssub.s32 1, %s25
  %s28 = scalar_select 0, %s27, %s25
  $region1: #{tpu_custom_call.1} parent=0
    #allocation6 [shape = 'u8[512]{0}', space=vmem, size = 0x400, scoped, tag = 'input window, operand 6, single buffered']
    #allocation7 [shape = 's32[2]{0}', space=sflag, size = 0x8, scoped, tag = 'scoped memory for tpu_custom_call.1']
    #allocation8 [shape = 's32[2]{0}', space=sflag, size = 0x8, scoped, tag = 'scoped memory for tpu_custom_call.1']
    #allocation9 [shape = 'u8[512]{0}', space=vmem, size = 0x400, scoped, tag = 'input window, operand 7, single buffered']
    #allocation10 [shape = 's32[1]{0}', space=sflag, size = 0x4, scoped, tag = 'scoped memory for tpu_custom_call.1']
    #allocation11 [shape = 'u8[512]{0}', space=vmem, size = 0x400, scoped, tag = 'input window, operand 9, single buffered']
    #allocation12 [shape = 'u8[512]{0}', space=vmem, size = 0x400, scoped, tag = 'input window, operand 11, single buffered']
    #allocation13 [shape = 's32[1]{0}', space=sflag, size = 0x4, scoped, tag = 'scoped memory for tpu_custom_call.1']
    #allocation14 [shape = 'u8[512]{0}', space=vmem, size = 0x400, scoped, tag = 'input window, operand 13, single buffered']
    #allocation15 [shape = 'u8[8192]{0}', space=vmem, size = 0x2000, scoped, tag = 'output window, operand 0']
    %29 = vsyncpa [#allocation7], 0
    %30 = vsyncpa [#allocation10], 0
    %31 = vsyncpa [#allocation13], 0
    %32 = vsyncpa [#allocation8], 0
    %s33 = scalar_lea.sflag [#allocation8], 1
    %34 = vsyncpa %s33, 0
    loop: start=0, step=1, limit=6
    $region2: #{tpu_custom_call.1} parent=1 // loop_pre_header
      _
    $region3: #{tpu_custom_call.1} parent=1 // loop_header
      %s36 = sphi 0, %s40
      %p37 = scmp.ge.s32.totalorder %s36, 6
      %s43 = sphi 0, %s55
      %s44 = sphi 0, %s51
      %s45 = sphi 0, %s43
      %s46 = sphi 0, %s44
      %s47 = sphi 0, %s45
      %s48 = sphi 0, %s46
      %s58 = sphi 0, %s60
      %s61 = sphi 0, %s58
      %s62 = sphi 0, %s61
      %s78 = sphi 0, %s62
      %s86 = sphi 0, %s88
      %s89 = sphi 0, %s86
      %s90 = sphi 0, %s89
      %s106 = sphi 0, %s90
      %s112 = sphi 0, %s114
      %s115 = sphi 0, %s112
      %s116 = sphi 0, %s115
      %s132 = sphi 0, %s116
      %s136 = sphi 0, %s136
      %s138 = sphi 0, %s136
      %s139 = sphi 0, %s138
      %s153 = sphi 0, %s139
      %s159 = sphi 0, %s161
      %s162 = sphi 0, %s159
      %s163 = sphi 0, %s162
      %s179 = sphi 0, %s163
      %s183 = sphi 0, %s183
      %s185 = sphi 0, %s183
      %s186 = sphi 0, %s185
      %s200 = sphi 0, %s186
      %s204 = sphi 0, %s204
      %s206 = sphi 0, %s204
      %s207 = sphi 0, %s206
      %s221 = sphi 0, %s207
      %s225 = sphi 0, %s225
      %s227 = sphi 0, %s225
      %s228 = sphi 0, %s227
      %s242 = sphi 0, %s228
      %s246 = sphi 0, %s246
      %s248 = sphi 0, %s246
      %s249 = sphi 0, %s248
      %s263 = sphi 0, %s249
      %s267 = sphi 0, %s267
      %s269 = sphi 0, %s267
      %s270 = sphi 0, %s269
      %s284 = sphi 0, %s270
      %s288 = sphi 0, %s288
      %s290 = sphi 0, %s288
      %s291 = sphi 0, %s290
      %s305 = sphi 0, %s291
      %s309 = sphi 0, %s309
      %s311 = sphi 0, %s309
      %s312 = sphi 0, %s311
      %s326 = sphi 0, %s312
      %s330 = sphi 0, %s330
      %s332 = sphi 0, %s330
      %s333 = sphi 0, %s332
      %s347 = sphi 0, %s333
      %s351 = sphi 0, %s351
      %s353 = sphi 0, %s351
      %s354 = sphi 0, %s353
      %s368 = sphi 0, %s354
      %s372 = sphi 0, %s372
      %s374 = sphi 0, %s372
      %s375 = sphi 0, %s374
      %s389 = sphi 0, %s375
      %s393 = sphi 0, %s393
      %s395 = sphi 0, %s393
      %s396 = sphi 0, %s395
      %s410 = sphi 0, %s396
      %s414 = sphi 0, %s414
      %s416 = sphi 0, %s414
      %s417 = sphi 0, %s416
      %s431 = sphi 0, %s417
      %s435 = sphi 0, %s435
      %s437 = sphi 0, %s435
      %s438 = sphi 0, %s437
      %s452 = sphi 0, %s438
      %s456 = sphi 0, %s456
      %s458 = sphi 0, %s456
      %s459 = sphi 0, %s458
      %s473 = sphi 0, %s459
      %s477 = sphi 0, %s477
      %s479 = sphi 0, %s477
      %s480 = sphi 0, %s479
      %s494 = sphi 0, %s480
      %s498 = sphi 0, %s498
      %s500 = sphi 0, %s498
      %s501 = sphi 0, %s500
      %s515 = sphi 0, %s501
      %s519 = sphi 0, %s519
      %s521 = sphi 0, %s519
      %s522 = sphi 0, %s521
      %s536 = sphi 0, %s522
      %s540 = sphi 0, %s540
      %s542 = sphi 0, %s540
      %s543 = sphi 0, %s542
      %s557 = sphi 0, %s543
      %s561 = sphi 0, %s561
      %s563 = sphi 0, %s561
      %s564 = sphi 0, %s563
      %s578 = sphi 0, %s564
      %s586 = sphi 0, %s588
      %s589 = sphi 0, %s586
      %s590 = sphi 0, %s589
      %s606 = sphi 0, %s590
    $region4: #{tpu_custom_call.1} parent=1 // loop_header_branch
      %39 = sbr.rel (%p37) target = $region8
    $region5: #{tpu_custom_call.1} parent=1 // loop_body
      %s41 = ssub.s32 %s36, 1
      %s42 = ssub.s32 %s36, 2
      %s49 = sadd.s32 1, %s44
      %p50 = scmp.ge.s32.totalorder %s49, 2
      %s51 = scalar_select %p50, 0, %s49
      %s52 = sadd.s32 1, %s43
      %s53 = scalar_select %p50, %s52, %s43
      %p54 = scmp.ge.s32.totalorder %s53, 2
      %s55 = scalar_select %p54, 0, %s53
      %s56 = ssub.s32 %s43, %s55
      %p57 = scmp.eq.s32.totalorder %s56, 0
      %s59 = sadd.s32 %s58, 1
      %s60 = scalar_select %p57, %s58, %s59
      %p63 = pneg %p57
      %p64 = scmp.eq.s32.totalorder %s36, 3
      %p65 = por %p63, %p64
      %p66 = scmp.ne.s32.totalorder %s58, %s61
      %p67 = scmp.eq.s32.totalorder %s36, 0
      %p68 = por %p66, %p67
      %p69 = scmp.ne.s32.totalorder %s58, %s61
      %p70 = scmp.eq.s32.totalorder %s41, 3
      %p71 = por %p69, %p70
      %p72 = scmp.ne.s32.totalorder %s61, %s62
      %p73 = scmp.eq.s32.totalorder %s41, 0
      %p74 = por %p72, %p73
      %p75 = scmp.ne.s32.totalorder %s61, %s62
      %p76 = scmp.eq.s32.totalorder %s42, 3
      %p77 = por %p75, %p76
      %p79 = scmp.ne.s32.totalorder %s62, %s78
      %p80 = scmp.eq.s32.totalorder %s42, 0
      %p81 = por %p79, %p80
      %s82 = ssub.s32 %s43, %s55
      %s83 = ssub.s32 %s44, %s51
      %s84 = sor.u32 %s82, %s83
      %p85 = scmp.eq.s32.totalorder %s84, 0
      %s87 = sadd.s32 %s86, 1
      %s88 = scalar_select %p85, %s86, %s87
      %p91 = pneg %p85
      %p92 = scmp.eq.s32.totalorder %s36, 3
      %p93 = por %p91, %p92
      %p94 = scmp.ne.s32.totalorder %s86, %s89
      %p95 = scmp.eq.s32.totalorder %s36, 0
      %p96 = por %p94, %p95
      %p97 = scmp.ne.s32.totalorder %s86, %s89
      %p98 = scmp.eq.s32.totalorder %s41, 3
      %p99 = por %p97, %p98
      %p100 = scmp.ne.s32.totalorder %s89, %s90
      %p101 = scmp.eq.s32.totalorder %s41, 0
      %p102 = por %p100, %p101
      %p103 = scmp.ne.s32.totalorder %s89, %s90
      %p104 = scmp.eq.s32.totalorder %s42, 3
      %p105 = por %p103, %p104
      %p107 = scmp.ne.s32.totalorder %s90, %s106
      %p108 = scmp.eq.s32.totalorder %s42, 0
      %p109 = por %p107, %p108
      %s110 = ssub.s32 %s44, %s51
      %p111 = scmp.eq.s32.totalorder %s110, 0
      %s113 = sadd.s32 %s112, 1
      %s114 = scalar_select %p111, %s112, %s113
      %p117 = pneg %p111
      %p118 = scmp.eq.s32.totalorder %s36, 3
      %p119 = por %p117, %p118
      %p120 = scmp.ne.s32.totalorder %s112, %s115
      %p121 = scmp.eq.s32.totalorder %s36, 0
      %p122 = por %p120, %p121
      %p123 = scmp.ne.s32.totalorder %s112, %s115
      %p124 = scmp.eq.s32.totalorder %s41, 3
      %p125 = por %p123, %p124
      %p126 = scmp.ne.s32.totalorder %s115, %s116
      %p127 = scmp.eq.s32.totalorder %s41, 0
      %p128 = por %p126, %p127
      %p129 = scmp.ne.s32.totalorder %s115, %s116
      %p130 = scmp.eq.s32.totalorder %s42, 3
      %p131 = por %p129, %p130
      %p133 = scmp.ne.s32.totalorder %s116, %s132
      %p134 = scmp.eq.s32.totalorder %s42, 0
      %p135 = por %p133, %p134
      %s137 = sadd.s32 %s136, 1
      %p140 = scmp.eq.s32.totalorder %s36, 3
      %p141 = scmp.ne.s32.totalorder %s136, %s138
      %p142 = scmp.eq.s32.totalorder %s36, 0
      %p143 = por %p141, %p142
      %p144 = scmp.ne.s32.totalorder %s136, %s138
      %p145 = scmp.eq.s32.totalorder %s41, 3
      %p146 = por %p144, %p145
      %p147 = scmp.ne.s32.totalorder %s138, %s139
      %p148 = scmp.eq.s32.totalorder %s41, 0
      %p149 = por %p147, %p148
      %p150 = scmp.ne.s32.totalorder %s138, %s139
      %p151 = scmp.eq.s32.totalorder %s42, 3
      %p152 = por %p150, %p151
      %p154 = scmp.ne.s32.totalorder %s139, %s153
      %p155 = scmp.eq.s32.totalorder %s42, 0
      %p156 = por %p154, %p155
      %s157 = ssub.s32 %s44, %s51
      %p158 = scmp.eq.s32.totalorder %s157, 0
      %s160 = sadd.s32 %s159, 1
      %s161 = scalar_select %p158, %s159, %s160
      %p164 = pneg %p158
      %p165 = scmp.eq.s32.totalorder %s36, 3
      %p166 = por %p164, %p165
      %p167 = scmp.ne.s32.totalorder %s159, %s162
      %p168 = scmp.eq.s32.totalorder %s36, 0
      %p169 = por %p167, %p168
      %p170 = scmp.ne.s32.totalorder %s159, %s162
      %p171 = scmp.eq.s32.totalorder %s41, 3
      %p172 = por %p170, %p171
      %p173 = scmp.ne.s32.totalorder %s162, %s163
      %p174 = scmp.eq.s32.totalorder %s41, 0
      %p175 = por %p173, %p174
      %p176 = scmp.ne.s32.totalorder %s162, %s163
      %p177 = scmp.eq.s32.totalorder %s42, 3
      %p178 = por %p176, %p177
      %p180 = scmp.ne.s32.totalorder %s163, %s179
      %p181 = scmp.eq.s32.totalorder %s42, 0
      %p182 = por %p180, %p181
      %s184 = sadd.s32 %s183, 1
      %p187 = scmp.eq.s32.totalorder %s36, 3
      %p188 = scmp.ne.s32.totalorder %s183, %s185
      %p189 = scmp.eq.s32.totalorder %s36, 0
      %p190 = por %p188, %p189
      %p191 = scmp.ne.s32.totalorder %s183, %s185
      %p192 = scmp.eq.s32.totalorder %s41, 3
      %p193 = por %p191, %p192
      %p194 = scmp.ne.s32.totalorder %s185, %s186
      %p195 = scmp.eq.s32.totalorder %s41, 0
      %p196 = por %p194, %p195
      %p197 = scmp.ne.s32.totalorder %s185, %s186
      %p198 = scmp.eq.s32.totalorder %s42, 3
      %p199 = por %p197, %p198
      %p201 = scmp.ne.s32.totalorder %s186, %s200
      %p202 = scmp.eq.s32.totalorder %s42, 0
      %p203 = por %p201, %p202
      %s205 = sadd.s32 %s204, 1
      %p208 = scmp.eq.s32.totalorder %s36, 3
      %p209 = scmp.ne.s32.totalorder %s204, %s206
      %p210 = scmp.eq.s32.totalorder %s36, 0
      %p211 = por %p209, %p210
      %p212 = scmp.ne.s32.totalorder %s204, %s206
      %p213 = scmp.eq.s32.totalorder %s41, 3
      %p214 = por %p212, %p213
      %p215 = scmp.ne.s32.totalorder %s206, %s207
      %p216 = scmp.eq.s32.totalorder %s41, 0
      %p217 = por %p215, %p216
      %p218 = scmp.ne.s32.totalorder %s206, %s207
      %p219 = scmp.eq.s32.totalorder %s42, 3
      %p220 = por %p218, %p219
      %p222 = scmp.ne.s32.totalorder %s207, %s221
      %p223 = scmp.eq.s32.totalorder %s42, 0
      %p224 = por %p222, %p223
      %s226 = sadd.s32 %s225, 1
      %p229 = scmp.eq.s32.totalorder %s36, 3
      %p230 = scmp.ne.s32.totalorder %s225, %s227
      %p231 = scmp.eq.s32.totalorder %s36, 0
      %p232 = por %p230, %p231
      %p233 = scmp.ne.s32.totalorder %s225, %s227
      %p234 = scmp.eq.s32.totalorder %s41, 3
      %p235 = por %p233, %p234
      %p236 = scmp.ne.s32.totalorder %s227, %s228
      %p237 = scmp.eq.s32.totalorder %s41, 0
      %p238 = por %p236, %p237
      %p239 = scmp.ne.s32.totalorder %s227, %s228
      %p240 = scmp.eq.s32.totalorder %s42, 3
      %p241 = por %p239, %p240
      %p243 = scmp.ne.s32.totalorder %s228, %s242
      %p244 = scmp.eq.s32.totalorder %s42, 0
      %p245 = por %p243, %p244
      %s247 = sadd.s32 %s246, 1
      %p250 = scmp.eq.s32.totalorder %s36, 3
      %p251 = scmp.ne.s32.totalorder %s246, %s248
      %p252 = scmp.eq.s32.totalorder %s36, 0
      %p253 = por %p251, %p252
      %p254 = scmp.ne.s32.totalorder %s246, %s248
      %p255 = scmp.eq.s32.totalorder %s41, 3
      %p256 = por %p254, %p255
      %p257 = scmp.ne.s32.totalorder %s248, %s249
      %p258 = scmp.eq.s32.totalorder %s41, 0
      %p259 = por %p257, %p258
      %p260 = scmp.ne.s32.totalorder %s248, %s249
      %p261 = scmp.eq.s32.totalorder %s42, 3
      %p262 = por %p260, %p261
      %p264 = scmp.ne.s32.totalorder %s249, %s263
      %p265 = scmp.eq.s32.totalorder %s42, 0
      %p266 = por %p264, %p265
      %s268 = sadd.s32 %s267, 1
      %p271 = scmp.eq.s32.totalorder %s36, 3
      %p272 = scmp.ne.s32.totalorder %s267, %s269
      %p273 = scmp.eq.s32.totalorder %s36, 0
      %p274 = por %p272, %p273
      %p275 = scmp.ne.s32.totalorder %s267, %s269
      %p276 = scmp.eq.s32.totalorder %s41, 3
      %p277 = por %p275, %p276
      %p278 = scmp.ne.s32.totalorder %s269, %s270
      %p279 = scmp.eq.s32.totalorder %s41, 0
      %p280 = por %p278, %p279
      %p281 = scmp.ne.s32.totalorder %s269, %s270
      %p282 = scmp.eq.s32.totalorder %s42, 3
      %p283 = por %p281, %p282
      %p285 = scmp.ne.s32.totalorder %s270, %s284
      %p286 = scmp.eq.s32.totalorder %s42, 0
      %p287 = por %p285, %p286
      %s289 = sadd.s32 %s288, 1
      %p292 = scmp.eq.s32.totalorder %s36, 3
      %p293 = scmp.ne.s32.totalorder %s288, %s290
      %p294 = scmp.eq.s32.totalorder %s36, 0
      %p295 = por %p293, %p294
      %p296 = scmp.ne.s32.totalorder %s288, %s290
      %p297 = scmp.eq.s32.totalorder %s41, 3
      %p298 = por %p296, %p297
      %p299 = scmp.ne.s32.totalorder %s290, %s291
      %p300 = scmp.eq.s32.totalorder %s41, 0
      %p301 = por %p299, %p300
      %p302 = scmp.ne.s32.totalorder %s290, %s291
      %p303 = scmp.eq.s32.totalorder %s42, 3
      %p304 = por %p302, %p303
      %p306 = scmp.ne.s32.totalorder %s291, %s305
      %p307 = scmp.eq.s32.totalorder %s42, 0
      %p308 = por %p306, %p307
      %s310 = sadd.s32 %s309, 1
      %p313 = scmp.eq.s32.totalorder %s36, 3
      %p314 = scmp.ne.s32.totalorder %s309, %s311
      %p315 = scmp.eq.s32.totalorder %s36, 0
      %p316 = por %p314, %p315
      %p317 = scmp.ne.s32.totalorder %s309, %s311
      %p318 = scmp.eq.s32.totalorder %s41, 3
      %p319 = por %p317, %p318
      %p320 = scmp.ne.s32.totalorder %s311, %s312
      %p321 = scmp.eq.s32.totalorder %s41, 0
      %p322 = por %p320, %p321
      %p323 = scmp.ne.s32.totalorder %s311, %s312
      %p324 = scmp.eq.s32.totalorder %s42, 3
      %p325 = por %p323, %p324
      %p327 = scmp.ne.s32.totalorder %s312, %s326
      %p328 = scmp.eq.s32.totalorder %s42, 0
      %p329 = por %p327, %p328
      %s331 = sadd.s32 %s330, 1
      %p334 = scmp.eq.s32.totalorder %s36, 3
      %p335 = scmp.ne.s32.totalorder %s330, %s332
      %p336 = scmp.eq.s32.totalorder %s36, 0
      %p337 = por %p335, %p336
      %p338 = scmp.ne.s32.totalorder %s330, %s332
      %p339 = scmp.eq.s32.totalorder %s41, 3
      %p340 = por %p338, %p339
      %p341 = scmp.ne.s32.totalorder %s332, %s333
      %p342 = scmp.eq.s32.totalorder %s41, 0
      %p343 = por %p341, %p342
      %p344 = scmp.ne.s32.totalorder %s332, %s333
      %p345 = scmp.eq.s32.totalorder %s42, 3
      %p346 = por %p344, %p345
      %p348 = scmp.ne.s32.totalorder %s333, %s347
      %p349 = scmp.eq.s32.totalorder %s42, 0
      %p350 = por %p348, %p349
      %s352 = sadd.s32 %s351, 1
      %p355 = scmp.eq.s32.totalorder %s36, 3
      %p356 = scmp.ne.s32.totalorder %s351, %s353
      %p357 = scmp.eq.s32.totalorder %s36, 0
      %p358 = por %p356, %p357
      %p359 = scmp.ne.s32.totalorder %s351, %s353
      %p360 = scmp.eq.s32.totalorder %s41, 3
      %p361 = por %p359, %p360
      %p362 = scmp.ne.s32.totalorder %s353, %s354
      %p363 = scmp.eq.s32.totalorder %s41, 0
      %p364 = por %p362, %p363
      %p365 = scmp.ne.s32.totalorder %s353, %s354
      %p366 = scmp.eq.s32.totalorder %s42, 3
      %p367 = por %p365, %p366
      %p369 = scmp.ne.s32.totalorder %s354, %s368
      %p370 = scmp.eq.s32.totalorder %s42, 0
      %p371 = por %p369, %p370
      %s373 = sadd.s32 %s372, 1
      %p376 = scmp.eq.s32.totalorder %s36, 3
      %p377 = scmp.ne.s32.totalorder %s372, %s374
      %p378 = scmp.eq.s32.totalorder %s36, 0
      %p379 = por %p377, %p378
      %p380 = scmp.ne.s32.totalorder %s372, %s374
      %p381 = scmp.eq.s32.totalorder %s41, 3
      %p382 = por %p380, %p381
      %p383 = scmp.ne.s32.totalorder %s374, %s375
      %p384 = scmp.eq.s32.totalorder %s41, 0
      %p385 = por %p383, %p384
      %p386 = scmp.ne.s32.totalorder %s374, %s375
      %p387 = scmp.eq.s32.totalorder %s42, 3
      %p388 = por %p386, %p387
      %p390 = scmp.ne.s32.totalorder %s375, %s389
      %p391 = scmp.eq.s32.totalorder %s42, 0
      %p392 = por %p390, %p391
      %s394 = sadd.s32 %s393, 1
      %p397 = scmp.eq.s32.totalorder %s36, 3
      %p398 = scmp.ne.s32.totalorder %s393, %s395
      %p399 = scmp.eq.s32.totalorder %s36, 0
      %p400 = por %p398, %p399
      %p401 = scmp.ne.s32.totalorder %s393, %s395
      %p402 = scmp.eq.s32.totalorder %s41, 3
      %p403 = por %p401, %p402
      %p404 = scmp.ne.s32.totalorder %s395, %s396
      %p405 = scmp.eq.s32.totalorder %s41, 0
      %p406 = por %p404, %p405
      %p407 = scmp.ne.s32.totalorder %s395, %s396
      %p408 = scmp.eq.s32.totalorder %s42, 3
      %p409 = por %p407, %p408
      %p411 = scmp.ne.s32.totalorder %s396, %s410
      %p412 = scmp.eq.s32.totalorder %s42, 0
      %p413 = por %p411, %p412
      %s415 = sadd.s32 %s414, 1
      %p418 = scmp.eq.s32.totalorder %s36, 3
      %p419 = scmp.ne.s32.totalorder %s414, %s416
      %p420 = scmp.eq.s32.totalorder %s36, 0
      %p421 = por %p419, %p420
      %p422 = scmp.ne.s32.totalorder %s414, %s416
      %p423 = scmp.eq.s32.totalorder %s41, 3
      %p424 = por %p422, %p423
      %p425 = scmp.ne.s32.totalorder %s416, %s417
      %p426 = scmp.eq.s32.totalorder %s41, 0
      %p427 = por %p425, %p426
      %p428 = scmp.ne.s32.totalorder %s416, %s417
      %p429 = scmp.eq.s32.totalorder %s42, 3
      %p430 = por %p428, %p429
      %p432 = scmp.ne.s32.totalorder %s417, %s431
      %p433 = scmp.eq.s32.totalorder %s42, 0
      %p434 = por %p432, %p433
      %s436 = sadd.s32 %s435, 1
      %p439 = scmp.eq.s32.totalorder %s36, 3
      %p440 = scmp.ne.s32.totalorder %s435, %s437
      %p441 = scmp.eq.s32.totalorder %s36, 0
      %p442 = por %p440, %p441
      %p443 = scmp.ne.s32.totalorder %s435, %s437
      %p444 = scmp.eq.s32.totalorder %s41, 3
      %p445 = por %p443, %p444
      %p446 = scmp.ne.s32.totalorder %s437, %s438
      %p447 = scmp.eq.s32.totalorder %s41, 0
      %p448 = por %p446, %p447
      %p449 = scmp.ne.s32.totalorder %s437, %s438
      %p450 = scmp.eq.s32.totalorder %s42, 3
      %p451 = por %p449, %p450
      %p453 = scmp.ne.s32.totalorder %s438, %s452
      %p454 = scmp.eq.s32.totalorder %s42, 0
      %p455 = por %p453, %p454
      %s457 = sadd.s32 %s456, 1
      %p460 = scmp.eq.s32.totalorder %s36, 3
      %p461 = scmp.ne.s32.totalorder %s456, %s458
      %p462 = scmp.eq.s32.totalorder %s36, 0
      %p463 = por %p461, %p462
      %p464 = scmp.ne.s32.totalorder %s456, %s458
      %p465 = scmp.eq.s32.totalorder %s41, 3
      %p466 = por %p464, %p465
      %p467 = scmp.ne.s32.totalorder %s458, %s459
      %p468 = scmp.eq.s32.totalorder %s41, 0
      %p469 = por %p467, %p468
      %p470 = scmp.ne.s32.totalorder %s458, %s459
      %p471 = scmp.eq.s32.totalorder %s42, 3
      %p472 = por %p470, %p471
      %p474 = scmp.ne.s32.totalorder %s459, %s473
      %p475 = scmp.eq.s32.totalorder %s42, 0
      %p476 = por %p474, %p475
      %s478 = sadd.s32 %s477, 1
      %p481 = scmp.eq.s32.totalorder %s36, 3
      %p482 = scmp.ne.s32.totalorder %s477, %s479
      %p483 = scmp.eq.s32.totalorder %s36, 0
      %p484 = por %p482, %p483
      %p485 = scmp.ne.s32.totalorder %s477, %s479
      %p486 = scmp.eq.s32.totalorder %s41, 3
      %p487 = por %p485, %p486
      %p488 = scmp.ne.s32.totalorder %s479, %s480
      %p489 = scmp.eq.s32.totalorder %s41, 0
      %p490 = por %p488, %p489
      %p491 = scmp.ne.s32.totalorder %s479, %s480
      %p492 = scmp.eq.s32.totalorder %s42, 3
      %p493 = por %p491, %p492
      %p495 = scmp.ne.s32.totalorder %s480, %s494
      %p496 = scmp.eq.s32.totalorder %s42, 0
      %p497 = por %p495, %p496
      %s499 = sadd.s32 %s498, 1
      %p502 = scmp.eq.s32.totalorder %s36, 3
      %p503 = scmp.ne.s32.totalorder %s498, %s500
      %p504 = scmp.eq.s32.totalorder %s36, 0
      %p505 = por %p503, %p504
      %p506 = scmp.ne.s32.totalorder %s498, %s500
      %p507 = scmp.eq.s32.totalorder %s41, 3
      %p508 = por %p506, %p507
      %p509 = scmp.ne.s32.totalorder %s500, %s501
      %p510 = scmp.eq.s32.totalorder %s41, 0
      %p511 = por %p509, %p510
      %p512 = scmp.ne.s32.totalorder %s500, %s501
      %p513 = scmp.eq.s32.totalorder %s42, 3
      %p514 = por %p512, %p513
      %p516 = scmp.ne.s32.totalorder %s501, %s515
      %p517 = scmp.eq.s32.totalorder %s42, 0
      %p518 = por %p516, %p517
      %s520 = sadd.s32 %s519, 1
      %p523 = scmp.eq.s32.totalorder %s36, 3
      %p524 = scmp.ne.s32.totalorder %s519, %s521
      %p525 = scmp.eq.s32.totalorder %s36, 0
      %p526 = por %p524, %p525
      %p527 = scmp.ne.s32.totalorder %s519, %s521
      %p528 = scmp.eq.s32.totalorder %s41, 3
      %p529 = por %p527, %p528
      %p530 = scmp.ne.s32.totalorder %s521, %s522
      %p531 = scmp.eq.s32.totalorder %s41, 0
      %p532 = por %p530, %p531
      %p533 = scmp.ne.s32.totalorder %s521, %s522
      %p534 = scmp.eq.s32.totalorder %s42, 3
      %p535 = por %p533, %p534
      %p537 = scmp.ne.s32.totalorder %s522, %s536
      %p538 = scmp.eq.s32.totalorder %s42, 0
      %p539 = por %p537, %p538
      %s541 = sadd.s32 %s540, 1
      %p544 = scmp.eq.s32.totalorder %s36, 3
      %p545 = scmp.ne.s32.totalorder %s540, %s542
      %p546 = scmp.eq.s32.totalorder %s36, 0
      %p547 = por %p545, %p546
      %p548 = scmp.ne.s32.totalorder %s540, %s542
      %p549 = scmp.eq.s32.totalorder %s41, 3
      %p550 = por %p548, %p549
      %p551 = scmp.ne.s32.totalorder %s542, %s543
      %p552 = scmp.eq.s32.totalorder %s41, 0
      %p553 = por %p551, %p552
      %p554 = scmp.ne.s32.totalorder %s542, %s543
      %p555 = scmp.eq.s32.totalorder %s42, 3
      %p556 = por %p554, %p555
      %p558 = scmp.ne.s32.totalorder %s543, %s557
      %p559 = scmp.eq.s32.totalorder %s42, 0
      %p560 = por %p558, %p559
      %s562 = sadd.s32 %s561, 1
      %p565 = scmp.eq.s32.totalorder %s36, 3
      %p566 = scmp.ne.s32.totalorder %s561, %s563
      %p567 = scmp.eq.s32.totalorder %s36, 0
      %p568 = por %p566, %p567
      %p569 = scmp.ne.s32.totalorder %s561, %s563
      %p570 = scmp.eq.s32.totalorder %s41, 3
      %p571 = por %p569, %p570
      %p572 = scmp.ne.s32.totalorder %s563, %s564
      %p573 = scmp.eq.s32.totalorder %s41, 0
      %p574 = por %p572, %p573
      %p575 = scmp.ne.s32.totalorder %s563, %s564
      %p576 = scmp.eq.s32.totalorder %s42, 3
      %p577 = por %p575, %p576
      %p579 = scmp.ne.s32.totalorder %s564, %s578
      %p580 = scmp.eq.s32.totalorder %s42, 0
      %p581 = por %p579, %p580
      %s582 = ssub.s32 %s43, %s55
      %s583 = ssub.s32 %s44, %s51
      %s584 = sor.u32 %s582, %s583
      %p585 = scmp.eq.s32.totalorder %s584, 0
      %s587 = sadd.s32 %s586, 1
      %s588 = scalar_select %p585, %s586, %s587
      %p591 = pneg %p585
      %p592 = scmp.eq.s32.totalorder %s36, 3
      %p593 = por %p591, %p592
      %p594 = scmp.ne.s32.totalorder %s586, %s589
      %p595 = scmp.eq.s32.totalorder %s36, 0
      %p596 = por %p594, %p595
      %p597 = scmp.ne.s32.totalorder %s586, %s589
      %p598 = scmp.eq.s32.totalorder %s41, 3
      %p599 = por %p597, %p598
      %p600 = scmp.ne.s32.totalorder %s589, %s590
      %p601 = scmp.eq.s32.totalorder %s41, 0
      %p602 = por %p600, %p601
      %p603 = scmp.ne.s32.totalorder %s589, %s590
      %p604 = scmp.eq.s32.totalorder %s42, 3
      %p605 = por %p603, %p604
      %p607 = scmp.ne.s32.totalorder %s590, %s606
      %p608 = scmp.eq.s32.totalorder %s42, 0
      %p609 = por %p607, %p608
      %p610 = scmp.le.s32.totalorder 1, %s36
      %p611 = scmp.lt.s32.totalorder %s36, 5
      %p612 = pnand %p610, %p611
      %p613 = pneg %p612
      // Predicated region
      $region9: #{tpu_custom_call.1} parent=5 // pred_check
        _
      $region10: #{tpu_custom_call.1} parent=5 // pred_check_branch
        %615 = sbr.rel (%p612) target = $region12
      $region11: #{tpu_custom_call.1} parent=5 // pred_region
        %s616 = ssub.s32 %s36, 1
        // Predicated region
        $region13: #{tpu_custom_call.1} parent=11 // pred_check
          %p617 = pneg %p149
        $region14: #{tpu_custom_call.1} parent=11 // pred_check_branch
          %619 = sbr.rel (%p617) target = $region16
        $region15: #{tpu_custom_call.1} parent=11 // pred_region
          _
        $region16: #{tpu_custom_call.1} parent=11 // pred_fallthru
          _
        // Predicated region
        $region17: #{tpu_custom_call.1} parent=11 // pred_check
          %p620 = pneg %p196
        $region18: #{tpu_custom_call.1} parent=11 // pred_check_branch
          %622 = sbr.rel (%p620) target = $region20
        $region19: #{tpu_custom_call.1} parent=11 // pred_region
          _
        $region20: #{tpu_custom_call.1} parent=11 // pred_fallthru
          _
        // Predicated region
        $region21: #{tpu_custom_call.1} parent=11 // pred_check
          %p623 = pneg %p217
        $region22: #{tpu_custom_call.1} parent=11 // pred_check_branch
          %625 = sbr.rel (%p623) target = $region24
        $region23: #{tpu_custom_call.1} parent=11 // pred_region
          %s627 = ssub.s32 16, 16
          %628 = vsyncadd [#allocation7], %s627
          %s630 = sshll.u32 [#allocation6], 4
          %s631 = int_to_ptr.vmem [resolvable:$true] %s630
          %633 = dma.hbm_to_vmem [thread:$0]  %s6, 16, %s631, [#allocation7]
        $region24: #{tpu_custom_call.1} parent=11 // pred_fallthru
          _
        // Predicated region
        $region25: #{tpu_custom_call.1} parent=11 // pred_check
          %p634 = pneg %p238
        $region26: #{tpu_custom_call.1} parent=11 // pred_check_branch
          %636 = sbr.rel (%p634) target = $region28
        $region27: #{tpu_custom_call.1} parent=11 // pred_region
          %s638 = ssub.s32 16, 16
          %639 = vsyncadd [#allocation10], %s638
          %s641 = sshll.u32 [#allocation9], 4
          %s642 = int_to_ptr.vmem [resolvable:$true] %s641
          %644 = dma.hbm_to_vmem [thread:$0]  %s7, 16, %s642, [#allocation10]
        $region28: #{tpu_custom_call.1} parent=11 // pred_fallthru
          _
        // Predicated region
        $region29: #{tpu_custom_call.1} parent=11 // pred_check
          %p645 = pneg %p259
        $region30: #{tpu_custom_call.1} parent=11 // pred_check_branch
          %647 = sbr.rel (%p645) target = $region32
        $region31: #{tpu_custom_call.1} parent=11 // pred_region
          _
        $region32: #{tpu_custom_call.1} parent=11 // pred_fallthru
          _
        // Predicated region
        $region33: #{tpu_custom_call.1} parent=11 // pred_check
          %p648 = pneg %p280
        $region34: #{tpu_custom_call.1} parent=11 // pred_check_branch
          %650 = sbr.rel (%p648) target = $region36
        $region35: #{tpu_custom_call.1} parent=11 // pred_region
          %s652 = ssub.s32 16, 16
          %653 = vsyncadd [#allocation10], %s652
          %s655 = sshll.u32 [#allocation11], 4
          %s656 = int_to_ptr.vmem [resolvable:$true] %s655
          %658 = dma.hbm_to_vmem [thread:$0]  %s9, 16, %s656, [#allocation10]
        $region36: #{tpu_custom_call.1} parent=11 // pred_fallthru
          _
        // Predicated region
        $region37: #{tpu_custom_call.1} parent=11 // pred_check
          %p659 = pneg %p301
        $region38: #{tpu_custom_call.1} parent=11 // pred_check_branch
          %661 = sbr.rel (%p659) target = $region40
        $region39: #{tpu_custom_call.1} parent=11 // pred_region
          _
        $region40: #{tpu_custom_call.1} parent=11 // pred_fallthru
          _
        // Predicated region
        $region41: #{tpu_custom_call.1} parent=11 // pred_check
          %p662 = pneg %p322
        $region42: #{tpu_custom_call.1} parent=11 // pred_check_branch
          %664 = sbr.rel (%p662) target = $region44
        $region43: #{tpu_custom_call.1} parent=11 // pred_region
          %s666 = ssub.s32 16, 16
          %667 = vsyncadd [#allocation13], %s666
          %s669 = sshll.u32 [#allocation12], 4
          %s670 = int_to_ptr.vmem [resolvable:$true] %s669
          %672 = dma.hbm_to_vmem [thread:$0]  %s11, 16, %s670, [#allocation13]
        $region44: #{tpu_custom_call.1} parent=11 // pred_fallthru
          _
        // Predicated region
        $region45: #{tpu_custom_call.1} parent=11 // pred_check
          %p673 = pneg %p343
        $region46: #{tpu_custom_call.1} parent=11 // pred_check_branch
          %675 = sbr.rel (%p673) target = $region48
        $region47: #{tpu_custom_call.1} parent=11 // pred_region
          _
        $region48: #{tpu_custom_call.1} parent=11 // pred_fallthru
          _
        // Predicated region
        $region49: #{tpu_custom_call.1} parent=11 // pred_check
          %p676 = pneg %p364
        $region50: #{tpu_custom_call.1} parent=11 // pred_check_branch
          %678 = sbr.rel (%p676) target = $region52
        $region51: #{tpu_custom_call.1} parent=11 // pred_region
          %s680 = ssub.s32 16, 16
          %681 = vsyncadd [#allocation13], %s680
          %s683 = sshll.u32 [#allocation14], 4
          %s684 = int_to_ptr.vmem [resolvable:$true] %s683
          %686 = dma.hbm_to_vmem [thread:$0]  %s13, 16, %s684, [#allocation13]
        $region52: #{tpu_custom_call.1} parent=11 // pred_fallthru
          _
        // Predicated region
        $region53: #{tpu_custom_call.1} parent=11 // pred_check
          %p687 = pneg %p385
        $region54: #{tpu_custom_call.1} parent=11 // pred_check_branch
          %689 = sbr.rel (%p687) target = $region56
        $region55: #{tpu_custom_call.1} parent=11 // pred_region
          _
        $region56: #{tpu_custom_call.1} parent=11 // pred_fallthru
          _
        // Predicated region
        $region57: #{tpu_custom_call.1} parent=11 // pred_check
          %p690 = pneg %p406
        $region58: #{tpu_custom_call.1} parent=11 // pred_check_branch
          %692 = sbr.rel (%p690) target = $region60
        $region59: #{tpu_custom_call.1} parent=11 // pred_region
          _
        $region60: #{tpu_custom_call.1} parent=11 // pred_fallthru
          _
        // Predicated region
        $region61: #{tpu_custom_call.1} parent=11 // pred_check
          %p693 = pneg %p427
        $region62: #{tpu_custom_call.1} parent=11 // pred_check_branch
          %695 = sbr.rel (%p693) target = $region64
        $region63: #{tpu_custom_call.1} parent=11 // pred_region
          _
        $region64: #{tpu_custom_call.1} parent=11 // pred_fallthru
          _
        // Predicated region
        $region65: #{tpu_custom_call.1} parent=11 // pred_check
          %p696 = pneg %p448
        $region66: #{tpu_custom_call.1} parent=11 // pred_check_branch
          %698 = sbr.rel (%p696) target = $region68
        $region67: #{tpu_custom_call.1} parent=11 // pred_region
          _
        $region68: #{tpu_custom_call.1} parent=11 // pred_fallthru
          _
        // Predicated region
        $region69: #{tpu_custom_call.1} parent=11 // pred_check
          %p699 = pneg %p469
        $region70: #{tpu_custom_call.1} parent=11 // pred_check_branch
          %701 = sbr.rel (%p699) target = $region72
        $region71: #{tpu_custom_call.1} parent=11 // pred_region
          _
        $region72: #{tpu_custom_call.1} parent=11 // pred_fallthru
          _
        // Predicated region
        $region73: #{tpu_custom_call.1} parent=11 // pred_check
          %p702 = pneg %p490
        $region74: #{tpu_custom_call.1} parent=11 // pred_check_branch
          %704 = sbr.rel (%p702) target = $region76
        $region75: #{tpu_custom_call.1} parent=11 // pred_region
          _
        $region76: #{tpu_custom_call.1} parent=11 // pred_fallthru
          _
        // Predicated region
        $region77: #{tpu_custom_call.1} parent=11 // pred_check
          %p705 = pneg %p511
        $region78: #{tpu_custom_call.1} parent=11 // pred_check_branch
          %707 = sbr.rel (%p705) target = $region80
        $region79: #{tpu_custom_call.1} parent=11 // pred_region
          _
        $region80: #{tpu_custom_call.1} parent=11 // pred_fallthru
          _
        // Predicated region
        $region81: #{tpu_custom_call.1} parent=11 // pred_check
          %p708 = pneg %p532
        $region82: #{tpu_custom_call.1} parent=11 // pred_check_branch
          %710 = sbr.rel (%p708) target = $region84
        $region83: #{tpu_custom_call.1} parent=11 // pred_region
          _
        $region84: #{tpu_custom_call.1} parent=11 // pred_fallthru
          _
        // Predicated region
        $region85: #{tpu_custom_call.1} parent=11 // pred_check
          %p711 = pneg %p553
        $region86: #{tpu_custom_call.1} parent=11 // pred_check_branch
          %713 = sbr.rel (%p711) target = $region88
        $region87: #{tpu_custom_call.1} parent=11 // pred_region
          _
        $region88: #{tpu_custom_call.1} parent=11 // pred_fallthru
          _
        // Predicated region
        $region89: #{tpu_custom_call.1} parent=11 // pred_check
          %p714 = pneg %p574
        $region90: #{tpu_custom_call.1} parent=11 // pred_check_branch
          %716 = sbr.rel (%p714) target = $region92
        $region91: #{tpu_custom_call.1} parent=11 // pred_region
          _
        $region92: #{tpu_custom_call.1} parent=11 // pred_fallthru
          _
      $region12: #{tpu_custom_call.1} parent=5 // pred_fallthru
        _
      %p717 = scmp.lt.s32.totalorder %s36, 4
      // Predicated region
      $region93: #{tpu_custom_call.1} parent=5 // pred_check
        %p718 = pneg %p717
      $region94: #{tpu_custom_call.1} parent=5 // pred_check_branch
        %720 = sbr.rel (%p718) target = $region96
      $region95: #{tpu_custom_call.1} parent=5 // pred_region
        // Predicated region
        $region97: #{tpu_custom_call.1} parent=95 // pred_check
          %p721 = pneg %p68
        $region98: #{tpu_custom_call.1} parent=95 // pred_check_branch
          %723 = sbr.rel (%p721) target = $region100
        $region99: #{tpu_custom_call.1} parent=95 // pred_region
          %p724 = scmp.lt.s32.totalorder %s43, 1
          %s725 = scalar_select %p724, %s43, 1
          %s726 = smul.addr %s725, 2
          %s727 = smul.addr %s726, 8
          %s728 = scalar_lea.vmem %s0, %s727
        $region100: #{tpu_custom_call.1} parent=95 // pred_fallthru
          _
        // Predicated region
        $region101: #{tpu_custom_call.1} parent=95 // pred_check
          %p729 = pneg %p96
        $region102: #{tpu_custom_call.1} parent=95 // pred_check_branch
          %731 = sbr.rel (%p729) target = $region104
        $region103: #{tpu_custom_call.1} parent=95 // pred_region
          %p732 = scmp.lt.s32.totalorder %s43, 1
          %s733 = scalar_select %p732, %s43, 1
          %p734 = scmp.lt.s32.totalorder %s44, 1
          %s735 = scalar_select %p734, %s44, 1
          %s736 = smul.addr %s733, 2
          %s737 = sadd.s32 %s735, %s736
          %s738 = smul.addr %s737, 8
          %s739 = scalar_lea.vmem %s1, %s738
        $region104: #{tpu_custom_call.1} parent=95 // pred_fallthru
          _
        // Predicated region
        $region105: #{tpu_custom_call.1} parent=95 // pred_check
          %p740 = pneg %p122
        $region106: #{tpu_custom_call.1} parent=95 // pred_check_branch
          %742 = sbr.rel (%p740) target = $region108
        $region107: #{tpu_custom_call.1} parent=95 // pred_region
          %p743 = scmp.lt.s32.totalorder %s44, 1
          %s744 = scalar_select %p743, %s44, 1
          %s745 = smul.addr %s744, 8
          %s746 = scalar_lea.vmem %s2, %s745
        $region108: #{tpu_custom_call.1} parent=95 // pred_fallthru
          _
        // Predicated region
        $region109: #{tpu_custom_call.1} parent=95 // pred_check
          %p747 = pneg %p169
        $region110: #{tpu_custom_call.1} parent=95 // pred_check_branch
          %749 = sbr.rel (%p747) target = $region112
        $region111: #{tpu_custom_call.1} parent=95 // pred_region
          %p750 = scmp.lt.s32.totalorder %s44, 1
          %s751 = scalar_select %p750, %s44, 1
          %s752 = smul.addr %s751, 8
          %s753 = scalar_lea.vmem %s4, %s752
        $region112: #{tpu_custom_call.1} parent=95 // pred_fallthru
          _
      $region96: #{tpu_custom_call.1} parent=5 // pred_fallthru
        _
      %p754 = scmp.le.s32.totalorder 1, %s36
      %p755 = scmp.lt.s32.totalorder %s36, 5
      %p756 = pnand %p754, %p755
      %p757 = pneg %p756
      // Predicated region
      $region113: #{tpu_custom_call.1} parent=5 // pred_check
        _
      $region114: #{tpu_custom_call.1} parent=5 // pred_check_branch
        %759 = sbr.rel (%p756) target = $region116
      $region115: #{tpu_custom_call.1} parent=5 // pred_region
        %s760 = ssub.s32 %s36, 1
        // Predicated region
        $region117: #{tpu_custom_call.1} parent=115 // pred_check
          %p761 = pneg %p217
        $region118: #{tpu_custom_call.1} parent=115 // pred_check_branch
          %763 = sbr.rel (%p761) target = $region120
        $region119: #{tpu_custom_call.1} parent=115 // pred_region
          %764 = dma.done [#allocation7], 16
        $region120: #{tpu_custom_call.1} parent=115 // pred_fallthru
          _
        // Predicated region
        $region121: #{tpu_custom_call.1} parent=115 // pred_check
          %p765 = pneg %p238
        $region122: #{tpu_custom_call.1} parent=115 // pred_check_branch
          %767 = sbr.rel (%p765) target = $region124
        $region123: #{tpu_custom_call.1} parent=115 // pred_region
          %768 = dma.done [#allocation10], 16
        $region124: #{tpu_custom_call.1} parent=115 // pred_fallthru
          _
        // Predicated region
        $region125: #{tpu_custom_call.1} parent=115 // pred_check
          %p769 = pneg %p280
        $region126: #{tpu_custom_call.1} parent=115 // pred_check_branch
          %771 = sbr.rel (%p769) target = $region128
        $region127: #{tpu_custom_call.1} parent=115 // pred_region
          %772 = dma.done [#allocation10], 16
        $region128: #{tpu_custom_call.1} parent=115 // pred_fallthru
          _
        // Predicated region
        $region129: #{tpu_custom_call.1} parent=115 // pred_check
          %p773 = pneg %p322
        $region130: #{tpu_custom_call.1} parent=115 // pred_check_branch
          %775 = sbr.rel (%p773) target = $region132
        $region131: #{tpu_custom_call.1} parent=115 // pred_region
          %776 = dma.done [#allocation13], 16
        $region132: #{tpu_custom_call.1} parent=115 // pred_fallthru
          _
        // Predicated region
        $region133: #{tpu_custom_call.1} parent=115 // pred_check
          %p777 = pneg %p364
        $region134: #{tpu_custom_call.1} parent=115 // pred_check_branch
          %779 = sbr.rel (%p777) target = $region136
        $region135: #{tpu_custom_call.1} parent=115 // pred_region
          %780 = dma.done [#allocation13], 16
        $region136: #{tpu_custom_call.1} parent=115 // pred_fallthru
          _
        %p781 = scmp.lt.s32.totalorder %s45, 1
        %s782 = scalar_select %p781, %s45, 1
        %s783 = smul.addr %s782, 2
        %s784 = smul.addr %s783, 8
        %s785 = scalar_lea.vmem %s0, %s784
        %p786 = pneg %p74
        %p787 = pneg %p71
        %p788 = scmp.lt.s32.totalorder %s45, 1
        %s789 = scalar_select %p788, %s45, 1
        %p790 = scmp.lt.s32.totalorder %s46, 1
        %s791 = scalar_select %p790, %s46, 1
        %s792 = smul.addr %s789, 2
        %s793 = sadd.s32 %s791, %s792
        %s794 = smul.addr %s793, 8
        %s795 = scalar_lea.vmem %s1, %s794
        %p796 = pneg %p102
        %p797 = pneg %p99
        %p798 = scmp.lt.s32.totalorder %s46, 1
        %s799 = scalar_select %p798, %s46, 1
        %s800 = smul.addr %s799, 8
        %s801 = scalar_lea.vmem %s2, %s800
        %p802 = pneg %p128
        %p803 = pneg %p125
        %p804 = pneg %p149
        %p805 = pneg %p146
        %p806 = scmp.lt.s32.totalorder %s46, 1
        %s807 = scalar_select %p806, %s46, 1
        %s808 = smul.addr %s807, 8
        %s809 = scalar_lea.vmem %s4, %s808
        %p810 = pneg %p175
        %p811 = pneg %p172
        %p812 = pneg %p196
        %p813 = pneg %p193
        %p814 = pneg %p217
        %p815 = pneg %p214
        %p816 = pneg %p238
        %p817 = pneg %p235
        %p818 = pneg %p259
        %p819 = pneg %p256
        %p820 = pneg %p280
        %p821 = pneg %p277
        %p822 = pneg %p301
        %p823 = pneg %p298
        %p824 = pneg %p322
        %p825 = pneg %p319
        %p826 = pneg %p343
        %p827 = pneg %p340
        %p828 = pneg %p364
        %p829 = pneg %p361
        %p830 = pneg %p385
        %p831 = pneg %p382
        %p832 = pneg %p406
        %p833 = pneg %p403
        %p834 = pneg %p427
        %p835 = pneg %p424
        %p836 = pneg %p448
        %p837 = pneg %p445
        %p838 = pneg %p469
        %p839 = pneg %p466
        %p840 = pneg %p490
        %p841 = pneg %p487
        %p842 = pneg %p511
        %p843 = pneg %p508
        %p844 = pneg %p532
        %p845 = pneg %p529
        %p846 = pneg %p553
        %p847 = pneg %p550
        %p848 = pneg %p574
        %p849 = pneg %p571
        %p850 = pneg %p602
        %p851 = pneg %p599
        %s852 = sand.u32 %s589, 1
        %s853 = scalar_lea.sflag [#allocation8], %s852
        %s854 = sand.u32 %s589, 1
        %s855 = smul.addr %s854, 8
        %s856 = scalar_lea.vmem [#allocation15], %s855
        %p857 = scmp.lt.s32.totalorder %s45, 1
        %s858 = scalar_select %p857, %s45, 1
        %s859 = smul.addr %s858, 2
        %s860 = smul.addr %s859, 8
        %s861 = scalar_lea.vmem %s0, %s860
        %p862 = scmp.lt.s32.totalorder %s45, 1
        %s863 = scalar_select %p862, %s45, 1
        %p864 = scmp.lt.s32.totalorder %s46, 1
        %s865 = scalar_select %p864, %s46, 1
        %s866 = smul.addr %s863, 2
        %s867 = sadd.s32 %s865, %s866
        %s868 = smul.addr %s867, 8
        %s869 = scalar_lea.vmem %s1, %s868
        %p870 = scmp.lt.s32.totalorder %s46, 1
        %s871 = scalar_select %p870, %s46, 1
        %s872 = smul.addr %s871, 8
        %s873 = scalar_lea.vmem %s2, %s872
        %p874 = scmp.lt.s32.totalorder %s46, 1
        %s875 = scalar_select %p874, %s46, 1
        %s876 = smul.addr %s875, 8
        %s877 = scalar_lea.vmem %s4, %s876
        %v879 = vld [vmem:[%s869] sm:$0xff]
        %p880 = scmp.eq.s32.totalorder %s46, 0
        // Predicated region
        $region137: #{tpu_custom_call.1} parent=115 // pred_check
          %p881 = pneg %p880
        $region138: #{tpu_custom_call.1} parent=115 // pred_check_branch
          %883 = sbr.rel (%p881) target = $region140
        $region139: #{tpu_custom_call.1} parent=115 // pred_region
          %v884 = vld [vmem:[%s861] sm:$0xff]
          %v885 = vld [vmem:[%s861 + $0x8] sm:$0xff]
          %v886 = vpack.c.bf16 %v885, %v884
          %v887 = vld [vmem:[%s10] sm:$0xf]
          %v888 = vld [vmem:[%s10 + $0x4] sm:$0xf]
          %v889 = vld [vmem:[%s10 + $0x8] sm:$0xf]
          %v890 = vld [vmem:[%s10 + $0xc] sm:$0xf]
          %v891 = vld [vmem:[#allocation12] sm:$0x1]
          %v893 = vlaneseq
          %v894 = vshrl.u32 %v893, 7
          %v895 = vsub.s32 0, %v894
          %v896 = vrot.slane %v891, %v895
          %v902 = vunpack.c.l.b16 %v887
          %v903 = vunpack.c.l.b16 %v888
          %v904 = vunpack.c.l.b16 %v889
          %v905 = vunpack.c.l.b16 %v890
          %v906 = vpack.c.b16 %v903, %v902
          %v907 = vpack.c.b16 %v905, %v904
          %vm910 = vcmask 261120
          %v912 = vsel %vm910, %v886, 0
          %914 = vmatprep.subr.bf16.mxu0 0
          %915 = vmatpush1.bf16.msra.mxu0 %v906
          %916 = vmatprep.subr.bf16.mxu0 0
          %917 = vmatpush1.bf16.msra.mxu0 %v907
          %918 = vmatprep.subr.bf16.mxu0 0
          %919 = vmatpush1.bf16.msra.mxu0 0
          %920 = vmatprep.subr.bf16.mxu0 0
          %921 = vmatpush1.bf16.msra.mxu0 0
          %922 = vmatprep.subr.bf16.mxu0 0
          %923 = vmatpush1.bf16.msra.mxu0 0
          %924 = vmatprep.subr.bf16.mxu0 0
          %925 = vmatpush1.bf16.msra.mxu0 0
          %926 = vmatprep.subr.bf16.mxu0 0
          %927 = vmatpush1.bf16.msra.mxu0 0
          %928 = vmatprep.subr.bf16.mxu0 0
          %929 = vmatpush1.bf16.msra.mxu0 0
          %930 = vmatprep.subr.bf16.mxu0 0
          %931 = vmatpush1.bf16.msra.mxu0 0
          %932 = vmatprep.subr.bf16.mxu0 0
          %933 = vmatpush1.bf16.msra.mxu0 0
          %934 = vmatprep.subr.bf16.mxu0 0
          %935 = vmatpush1.bf16.msra.mxu0 0
          %936 = vmatprep.subr.bf16.mxu0 0
          %937 = vmatpush1.bf16.msra.mxu0 0
          %938 = vmatprep.subr.bf16.mxu0 0
          %939 = vmatpush1.bf16.msra.mxu0 0
          %940 = vmatprep.subr.bf16.mxu0 0
          %941 = vmatpush1.bf16.msra.mxu0 0
          %942 = vmatprep.subr.bf16.mxu0 0
          %943 = vmatpush1.bf16.msra.mxu0 0
          %944 = vmatprep.subr.bf16.mxu0 0
          %945 = vmatpush1.bf16.msra.mxu0 0
          %946 = vmatprep.mubr.bf16.mxu0 0
          %947 = vmatmul.mubr.bf16.gmra.mrb[0].mxu0 %v912
          %v948 = vpop.f32.mrb[0].mxu0
          %v949 = vadd.f32 %v896, %v948
          %v950 = vpop.f32.mrb[0].mxu0
          %v951 = vpop.f32.mrb[0].mxu0
          %v952 = vadd.f32 %v896, %v951
          %v953 = vpop.f32.mrb[0].mxu0
          %954 = vdwg.mxu0
          %v955 = vpack.c.bf16 %v952, %v949
          %956 = vst.msk [vmem:[#allocation2] sm:$0xff] %vm910, %v955
          %v957 = vld [vmem:[%s12] sm:$0xf]
          %v958 = vld [vmem:[%s12 + $0x4] sm:$0xf]
          %v959 = vld [vmem:[%s12 + $0x8] sm:$0xf]
          %v960 = vld [vmem:[%s12 + $0xc] sm:$0xf]
          %v961 = vld [vmem:[#allocation14] sm:$0x1]
          %v963 = vlaneseq
          %v964 = vshrl.u32 %v963, 7
          %v965 = vsub.s32 0, %v964
          %v966 = vrot.slane %v961, %v965
          %v972 = vunpack.c.l.b16 %v957
          %v973 = vunpack.c.l.b16 %v958
          %v974 = vunpack.c.l.b16 %v959
          %v975 = vunpack.c.l.b16 %v960
          %v976 = vpack.c.b16 %v973, %v972
          %v977 = vpack.c.b16 %v975, %v974
          %980 = vmatprep.subr.bf16.mxu0 0
          %981 = vmatpush1.bf16.msra.mxu0 %v976
          %982 = vmatprep.subr.bf16.mxu0 0
          %983 = vmatpush1.bf16.msra.mxu0 %v977
          %984 = vmatprep.subr.bf16.mxu0 0
          %985 = vmatpush1.bf16.msra.mxu0 0
          %986 = vmatprep.subr.bf16.mxu0 0
          %987 = vmatpush1.bf16.msra.mxu0 0
          %988 = vmatprep.subr.bf16.mxu0 0
          %989 = vmatpush1.bf16.msra.mxu0 0
          %990 = vmatprep.subr.bf16.mxu0 0
          %991 = vmatpush1.bf16.msra.mxu0 0
          %992 = vmatprep.subr.bf16.mxu0 0
          %993 = vmatpush1.bf16.msra.mxu0 0
          %994 = vmatprep.subr.bf16.mxu0 0
          %995 = vmatpush1.bf16.msra.mxu0 0
          %996 = vmatprep.subr.bf16.mxu0 0
          %997 = vmatpush1.bf16.msra.mxu0 0
          %998 = vmatprep.subr.bf16.mxu0 0
          %999 = vmatpush1.bf16.msra.mxu0 0
          %1000 = vmatprep.subr.bf16.mxu0 0
          %1001 = vmatpush1.bf16.msra.mxu0 0
          %1002 = vmatprep.subr.bf16.mxu0 0
          %1003 = vmatpush1.bf16.msra.mxu0 0
          %1004 = vmatprep.subr.bf16.mxu0 0
          %1005 = vmatpush1.bf16.msra.mxu0 0
          %1006 = vmatprep.subr.bf16.mxu0 0
          %1007 = vmatpush1.bf16.msra.mxu0 0
          %1008 = vmatprep.subr.bf16.mxu0 0
          %1009 = vmatpush1.bf16.msra.mxu0 0
          %1010 = vmatprep.subr.bf16.mxu0 0
          %1011 = vmatpush1.bf16.msra.mxu0 0
          %1012 = vmatprep.mubr.bf16.mxu0 0
          %1013 = vmatmul.mubr.bf16.gmra.mrb[0].mxu0 %v912
          %v1014 = vpop.f32.mrb[0].mxu0
          %v1015 = vadd.f32 %v966, %v1014
          %v1016 = vpop.f32.mrb[0].mxu0
          %v1017 = vpop.f32.mrb[0].mxu0
          %v1018 = vadd.f32 %v966, %v1017
          %v1019 = vpop.f32.mrb[0].mxu0
          %1020 = vdwg.mxu0
          %v1021 = vpack.c.bf16 %v1018, %v1015
          %1022 = vst.msk [vmem:[#allocation3] sm:$0xff] %vm910, %v1021
          %v1023 = vld [vmem:[%s3] sm:$0xff]
          %v1024 = vld [vmem:[%s3 + $0x8] sm:$0xff]
          %1025 = vxpose.xlu0.b32.start [1/16] %v1023, 128
          %1026 = vxpose.xlu0.b32.cont [2/16] %v1024, 128
          %1027 = vxpose.xlu0.b32.cont [3/16] 0.0, 128
          %1028 = vxpose.xlu0.b32.cont [4/16] 0.0, 128
          %1029 = vxpose.xlu0.b32.cont [5/16] 0.0, 128
          %1030 = vxpose.xlu0.b32.cont [6/16] 0.0, 128
          %1031 = vxpose.xlu0.b32.cont [7/16] 0.0, 128
          %1032 = vxpose.xlu0.b32.cont [8/16] 0.0, 128
          %1033 = vxpose.xlu0.b32.cont [9/16] 0.0, 128
          %1034 = vxpose.xlu0.b32.cont [10/16] 0.0, 128
          %1035 = vxpose.xlu0.b32.cont [11/16] 0.0, 128
          %1036 = vxpose.xlu0.b32.cont [12/16] 0.0, 128
          %1037 = vxpose.xlu0.b32.cont [13/16] 0.0, 128
          %1038 = vxpose.xlu0.b32.cont [14/16] 0.0, 128
          %1039 = vxpose.xlu0.b32.cont [15/16] 0.0, 128
          %1040 = vxpose.xlu0.b32.end [16/16] 0.0, 128
          %v1041 = vpop.trf.xlu0
          %v1042 = vpop.trf.xlu0
          %v1043 = vpop.trf.xlu0
          %v1044 = vpop.trf.xlu0
          %v1045 = vpop.trf.xlu0
          %v1046 = vpop.trf.xlu0
          %v1047 = vpop.trf.xlu0
          %v1048 = vpop.trf.xlu0
          %v1049 = vpop.trf.xlu0
          %v1050 = vpop.trf.xlu0
          %v1051 = vpop.trf.xlu0
          %v1052 = vpop.trf.xlu0
          %v1053 = vpop.trf.xlu0
          %v1054 = vpop.trf.xlu0
          %v1055 = vpop.trf.xlu0
          %v1056 = vpop.trf.xlu0
          %vm1057 = vcmask 130048
          %v1059 = vsel %vm1057, %v1041, 0
          %1061 = vmatprep.subr.mxu0 0.0
          %1062 = vmatpush1.msra.mxu0 %v884
          %1063 = vmatprep.subr.mxu0 0.0
          %1064 = vmatpush1.msra.mxu0 %v885
          %1065 = vmatprep.subr.mxu0 0.0
          %1066 = vmatpush1.msra.mxu0 0.0
          %1067 = vmatprep.subr.mxu0 0.0
          %1068 = vmatpush1.msra.mxu0 0.0
          %1069 = vmatprep.subr.mxu0 0.0
          %1070 = vmatpush1.msra.mxu0 0.0
          %1071 = vmatprep.subr.mxu0 0.0
          %1072 = vmatpush1.msra.mxu0 0.0
          %1073 = vmatprep.subr.mxu0 0.0
          %1074 = vmatpush1.msra.mxu0 0.0
          %1075 = vmatprep.subr.mxu0 0.0
          %1076 = vmatpush1.msra.mxu0 0.0
          %1077 = vmatprep.subr.mxu0 0.0
          %1078 = vmatpush1.msra.mxu0 0.0
          %1079 = vmatprep.subr.mxu0 0.0
          %1080 = vmatpush1.msra.mxu0 0.0
          %1081 = vmatprep.subr.mxu0 0.0
          %1082 = vmatpush1.msra.mxu0 0.0
          %1083 = vmatprep.subr.mxu0 0.0
          %1084 = vmatpush1.msra.mxu0 0.0
          %1085 = vmatprep.subr.mxu0 0.0
          %1086 = vmatpush1.msra.mxu0 0.0
          %1087 = vmatprep.subr.mxu0 0.0
          %1088 = vmatpush1.msra.mxu0 0.0
          %1089 = vmatprep.subr.mxu0 0.0
          %1090 = vmatpush1.msra.mxu0 0.0
          %1091 = vmatprep.subr.mxu0 0.0
          %1092 = vmatpush1.msra.mxu0 0.0
          %1093 = vmatprep.subr.mxu0 0.0
          %1094 = vmatpush1.msra.mxu0 0.0
          %1095 = vmatprep.subr.mxu0 0.0
          %1096 = vmatpush1.msra.mxu0 0.0
          %1097 = vmatprep.subr.mxu0 0.0
          %1098 = vmatpush1.msra.mxu0 0.0
          %1099 = vmatprep.subr.mxu0 0.0
          %1100 = vmatpush1.msra.mxu0 0.0
          %1101 = vmatprep.subr.mxu0 0.0
          %1102 = vmatpush1.msra.mxu0 0.0
          %1103 = vmatprep.subr.mxu0 0.0
          %1104 = vmatpush1.msra.mxu0 0.0
          %1105 = vmatprep.subr.mxu0 0.0
          %1106 = vmatpush1.msra.mxu0 0.0
          %1107 = vmatprep.subr.mxu0 0.0
          %1108 = vmatpush1.msra.mxu0 0.0
          %1109 = vmatprep.subr.mxu0 0.0
          %1110 = vmatpush1.msra.mxu0 0.0
          %1111 = vmatprep.subr.mxu0 0.0
          %1112 = vmatpush1.msra.mxu0 0.0
          %1113 = vmatprep.subr.mxu0 0.0
          %1114 = vmatpush1.msra.mxu0 0.0
          %1115 = vmatprep.subr.mxu0 0.0
          %1116 = vmatpush1.msra.mxu0 0.0
          %1117 = vmatprep.subr.mxu0 0.0
          %1118 = vmatpush1.msra.mxu0 0.0
          %1119 = vmatprep.subr.mxu0 0.0
          %1120 = vmatpush1.msra.mxu0 0.0
          %1121 = vmatprep.subr.mxu0 0.0
          %1122 = vmatpush1.msra.mxu0 0.0
          %1123 = vmatprep.subr.mxu0 0.0
          %1124 = vmatpush1.msra.mxu0 0.0
          %1125 = vmatprep.mubr.f32.mxu0 0.0
          %1126 = vmatmul.mubr.f32.gmra.mrb[0].mxu0 %v1059
          %v1127 = vpop.f32.mrb[0].mxu0
          %v1128 = vadd.f32 0.0, %v1127
          %v1129 = vpop.f32.mrb[0].mxu0
          %1130 = vdwg.mxu0
          %vm1131 = vcmask 258048
          %1132 = vst.msk [vmem:[#allocation4] sm:$0x1f] %vm1131, %v1128
        $region140: #{tpu_custom_call.1} parent=115 // pred_fallthru
          _
        %v1133 = vld [vmem:[%s877] sm:$0xff]
        %v1134 = vld [vmem:[#allocation4] sm:$0x1f]
        %vm1135 = vcmask 39936
        %v1137 = vsel %vm1135, %v1133, 0
        %vm1139 = vcmask 1044480
        %v1141 = vsel %vm1139, %v1134, 0
        %1143 = vmatprep.subr.mxu0 0.0
        %1144 = vmatpush1.msra.mxu0 %v1141
        %1145 = vmatprep.subr.mxu0 0.0
        %1146 = vmatpush1.msra.mxu0 0.0
        %1147 = vmatprep.subr.mxu0 0.0
        %1148 = vmatpush1.msra.mxu0 0.0
        %1149 = vmatprep.subr.mxu0 0.0
        %1150 = vmatpush1.msra.mxu0 0.0
        %1151 = vmatprep.subr.mxu0 0.0
        %1152 = vmatpush1.msra.mxu0 0.0
        %1153 = vmatprep.subr.mxu0 0.0
        %1154 = vmatpush1.msra.mxu0 0.0
        %1155 = vmatprep.subr.mxu0 0.0
        %1156 = vmatpush1.msra.mxu0 0.0
        %1157 = vmatprep.subr.mxu0 0.0
        %1158 = vmatpush1.msra.mxu0 0.0
        %1159 = vmatprep.subr.mxu0 0.0
        %1160 = vmatpush1.msra.mxu0 0.0
        %1161 = vmatprep.subr.mxu0 0.0
        %1162 = vmatpush1.msra.mxu0 0.0
        %1163 = vmatprep.subr.mxu0 0.0
        %1164 = vmatpush1.msra.mxu0 0.0
        %1165 = vmatprep.subr.mxu0 0.0
        %1166 = vmatpush1.msra.mxu0 0.0
        %1167 = vmatprep.subr.mxu0 0.0
        %1168 = vmatpush1.msra.mxu0 0.0
        %1169 = vmatprep.subr.mxu0 0.0
        %1170 = vmatpush1.msra.mxu0 0.0
        %1171 = vmatprep.subr.mxu0 0.0
        %1172 = vmatpush1.msra.mxu0 0.0
        %1173 = vmatprep.subr.mxu0 0.0
        %1174 = vmatpush1.msra.mxu0 0.0
        %1175 = vmatprep.subr.mxu0 0.0
        %1176 = vmatpush1.msra.mxu0 0.0
        %1177 = vmatprep.subr.mxu0 0.0
        %1178 = vmatpush1.msra.mxu0 0.0
        %1179 = vmatprep.subr.mxu0 0.0
        %1180 = vmatpush1.msra.mxu0 0.0
        %1181 = vmatprep.subr.mxu0 0.0
        %1182 = vmatpush1.msra.mxu0 0.0
        %1183 = vmatprep.subr.mxu0 0.0
        %1184 = vmatpush1.msra.mxu0 0.0
        %1185 = vmatprep.subr.mxu0 0.0
        %1186 = vmatpush1.msra.mxu0 0.0
        %1187 = vmatprep.subr.mxu0 0.0
        %1188 = vmatpush1.msra.mxu0 0.0
        %1189 = vmatprep.subr.mxu0 0.0
        %1190 = vmatpush1.msra.mxu0 0.0
        %1191 = vmatprep.subr.mxu0 0.0
        %1192 = vmatpush1.msra.mxu0 0.0
        %1193 = vmatprep.subr.mxu0 0.0
        %1194 = vmatpush1.msra.mxu0 0.0
        %1195 = vmatprep.subr.mxu0 0.0
        %1196 = vmatpush1.msra.mxu0 0.0
        %1197 = vmatprep.subr.mxu0 0.0
        %1198 = vmatpush1.msra.mxu0 0.0
        %1199 = vmatprep.subr.mxu0 0.0
        %1200 = vmatpush1.msra.mxu0 0.0
        %1201 = vmatprep.subr.mxu0 0.0
        %1202 = vmatpush1.msra.mxu0 0.0
        %1203 = vmatprep.subr.mxu0 0.0
        %1204 = vmatpush1.msra.mxu0 0.0
        %1205 = vmatprep.subr.mxu0 0.0
        %1206 = vmatpush1.msra.mxu0 0.0
        %1207 = vmatprep.mubr.f32.mxu0 0.0
        %1208 = vmatmul.mubr.f32.gmra.mrb[0].mxu0 %v1137
        %v1209 = vpop.f32.mrb[0].mxu0
        %v1210 = vadd.f32 0.0, %v1209
        %v1211 = vpop.f32.mrb[0].mxu0
        %1212 = vdwg.mxu0
        %v1213 = vld [vmem:[%s5] sm:$0x1]
        %v1214 = vmul.f32 %v1213, %v1213
        %v1215 = vsub.f32 %v879, %v1210
        %v1217 = vlaneseq
        %v1218 = vshrl.u32 %v1217, 7
        %v1219 = vsub.s32 0, %v1218
        %v1220 = vrot.slane %v1214, %v1219
        %v1222 = vmul.f32 %v1220, %v1215
        %v1223 = vadd.f32 %v1210, %v1222
        %v1224 = vadd.f32 %v1223, %v879
        %v1225 = vld [vmem:[#allocation6] sm:$0x1]
        %v1226 = vld [vmem:[#allocation9] sm:$0x1]
        %vm1227 = vcmask 261120
        %v1228 = vsel %vm1227, %v1224, 0.0
        %1229 = vadd.xlane.f32.xlu0 %v1228
        %v1230 = vpop.xlane.xlu0 %1229
        %v1231 = vrcp.pop 32.0
        %v1232 = vmul.f32 %v1230, %v1231
        %v1233 = vsub.f32 %v1224, %v1232
        %v1234 = vmul.f32 %v1233, %v1233
        %v1235 = vsel %vm1227, %v1234, 0.0
        %1236 = vadd.xlane.f32.xlu0 %v1235
        %v1237 = vpop.xlane.xlu0 %1236
        %v1238 = vmul.f32 %v1237, %v1231
        %v1239 = vadd.f32 %v1238, 1e-12
        %v1240 = vrsqrt.pop %v1239
        %v1241 = vmul.f32 %v1233, %v1240
        %v1243 = vlaneseq
        %v1244 = vshrl.u32 %v1243, 7
        %v1245 = vsub.s32 0, %v1244
        %v1246 = vrot.slane %v1225, %v1245
        %v1248 = vmul.f32 %v1246, %v1241
        %v1250 = vlaneseq
        %v1251 = vshrl.u32 %v1250, 7
        %v1252 = vsub.s32 0, %v1251
        %v1253 = vrot.slane %v1226, %v1252
        %v1255 = vadd.f32 %v1248, %v1253
        %v1256 = vpack.c.bf16 %v879, %v879
        %v1257 = vld [vmem:[%s8] sm:$0xf]
        %v1258 = vld [vmem:[%s8 + $0x4] sm:$0xf]
        %v1259 = vld [vmem:[%s8 + $0x8] sm:$0xf]
        %v1260 = vld [vmem:[%s8 + $0xc] sm:$0xf]
        %v1261 = vld [vmem:[#allocation11] sm:$0x1]
        %v1263 = vlaneseq
        %v1264 = vshrl.u32 %v1263, 7
        %v1265 = vsub.s32 0, %v1264
        %v1266 = vrot.slane %v1261, %v1265
        %v1272 = vunpack.c.l.b16 %v1257
        %v1273 = vunpack.c.l.b16 %v1258
        %v1274 = vunpack.c.l.b16 %v1259
        %v1275 = vunpack.c.l.b16 %v1260
        %v1276 = vpack.c.b16 %v1273, %v1272
        %v1277 = vpack.c.b16 %v1275, %v1274
        %v1281 = vsel %vm1227, %v1256, 0
        %1283 = vmatprep.subr.bf16.mxu0 0
        %1284 = vmatpush1.bf16.msra.mxu0 %v1276
        %1285 = vmatprep.subr.bf16.mxu0 0
        %1286 = vmatpush1.bf16.msra.mxu0 %v1277
        %1287 = vmatprep.subr.bf16.mxu0 0
        %1288 = vmatpush1.bf16.msra.mxu0 0
        %1289 = vmatprep.subr.bf16.mxu0 0
        %1290 = vmatpush1.bf16.msra.mxu0 0
        %1291 = vmatprep.subr.bf16.mxu0 0
        %1292 = vmatpush1.bf16.msra.mxu0 0
        %1293 = vmatprep.subr.bf16.mxu0 0
        %1294 = vmatpush1.bf16.msra.mxu0 0
        %1295 = vmatprep.subr.bf16.mxu0 0
        %1296 = vmatpush1.bf16.msra.mxu0 0
        %1297 = vmatprep.subr.bf16.mxu0 0
        %1298 = vmatpush1.bf16.msra.mxu0 0
        %1299 = vmatprep.subr.bf16.mxu0 0
        %1300 = vmatpush1.bf16.msra.mxu0 0
        %1301 = vmatprep.subr.bf16.mxu0 0
        %1302 = vmatpush1.bf16.msra.mxu0 0
        %1303 = vmatprep.subr.bf16.mxu0 0
        %1304 = vmatpush1.bf16.msra.mxu0 0
        %1305 = vmatprep.subr.bf16.mxu0 0
        %1306 = vmatpush1.bf16.msra.mxu0 0
        %1307 = vmatprep.subr.bf16.mxu0 0
        %1308 = vmatpush1.bf16.msra.mxu0 0
        %1309 = vmatprep.subr.bf16.mxu0 0
        %1310 = vmatpush1.bf16.msra.mxu0 0
        %1311 = vmatprep.subr.bf16.mxu0 0
        %1312 = vmatpush1.bf16.msra.mxu0 0
        %1313 = vmatprep.subr.bf16.mxu0 0
        %1314 = vmatpush1.bf16.msra.mxu0 0
        %1315 = vmatprep.mubr.bf16.mxu0 0
        %1316 = vmatmul.mubr.bf16.gmra.mrb[0].mxu0 %v1281
        %v1317 = vpop.f32.mrb[0].mxu0
        %v1318 = vadd.f32 %v1266, %v1317
        %v1319 = vpop.f32.mrb[0].mxu0
        %v1320 = vpop.f32.mrb[0].mxu0
        %v1321 = vpop.f32.mrb[0].mxu0
        %1322 = vdwg.mxu0
        %v1323 = vld [vmem:[%s873] sm:$0xff]
        %v1324 = vpack.c.bf16 %v1318, %v1318
        %v1325 = vld [vmem:[#allocation2] sm:$0xff]
        %vm1326 = vcmask 130048
        %v1328 = vsel %vm1326, %v1324, 0
        %v1331 = vsel %vm1326, %v1325, 0
        %1333 = vmatprep.subr.bf16.mxu0 0
        %1334 = vmatpush1.bf16.xpose.msra.mxu0 %v1331
        %1335 = vmatprep.subr.bf16.mxu0 0
        %1336 = vmatpush1.bf16.xpose.msra.mxu0 0
        %1337 = vmatprep.subr.bf16.mxu0 0
        %1338 = vmatpush1.bf16.xpose.msra.mxu0 0
        %1339 = vmatprep.subr.bf16.mxu0 0
        %1340 = vmatpush1.bf16.xpose.msra.mxu0 0
        %1341 = vmatprep.subr.bf16.mxu0 0
        %1342 = vmatpush1.bf16.xpose.msra.mxu0 0
        %1343 = vmatprep.subr.bf16.mxu0 0
        %1344 = vmatpush1.bf16.xpose.msra.mxu0 0
        %1345 = vmatprep.subr.bf16.mxu0 0
        %1346 = vmatpush1.bf16.xpose.msra.mxu0 0
        %1347 = vmatprep.subr.bf16.mxu0 0
        %1348 = vmatpush1.bf16.xpose.msra.mxu0 0
        %1349 = vmatprep.subr.bf16.mxu0 0
        %1350 = vmatpush1.bf16.xpose.msra.mxu0 0
        %1351 = vmatprep.subr.bf16.mxu0 0
        %1352 = vmatpush1.bf16.xpose.msra.mxu0 0
        %1353 = vmatprep.subr.bf16.mxu0 0
        %1354 = vmatpush1.bf16.xpose.msra.mxu0 0
        %1355 = vmatprep.subr.bf16.mxu0 0
        %1356 = vmatpush1.bf16.xpose.msra.mxu0 0
        %1357 = vmatprep.subr.bf16.mxu0 0
        %1358 = vmatpush1.bf16.xpose.msra.mxu0 0
        %1359 = vmatprep.subr.bf16.mxu0 0
        %1360 = vmatpush1.bf16.xpose.msra.mxu0 0
        %1361 = vmatprep.subr.bf16.mxu0 0
        %1362 = vmatpush1.bf16.xpose.msra.mxu0 0
        %1363 = vmatprep.subr.bf16.mxu0 0
        %1364 = vmatpush1.bf16.xpose.msra.mxu0 0
        %1365 = vmatprep.mubr.bf16.mxu0 0
        %1366 = vmatmul.mubr.bf16.gmra.mrb[0].mxu0 %v1328
        %v1367 = vpop.f32.mrb[0].mxu0
        %v1368 = vadd.f32 0.0, %v1367
        %v1369 = vpop.f32.mrb[0].mxu0
        %v1370 = vpop.f32.mrb[0].mxu0
        %v1371 = vpop.f32.mrb[0].mxu0
        %1372 = vdwg.mxu0
        %v1373 = vmul.f32 %v1368, 0.25
        %v1374 = vadd.f32 %v1373, %v1323
        %v1375 = vsel %vm1326, %v1374, -inf
        %1376 = vmax.xlane.f32.xlu0 %v1375
        %v1377 = vpop.xlane.xlu0 %1376
        %v1378 = vsub.f32 %v1374, %v1377
        %v1379 = vmul.f32 %v1378, 1.442695
        %v1380 = vpow.pop %v1379
        %v1381 = vsel %vm1326, %v1380, 0.0
        %1382 = vadd.xlane.f32.xlu0 %v1381
        %v1383 = vpop.xlane.xlu0 %1382
        %v1384 = vrcp.pop %v1383
        %v1385 = vmul.f32 %v1380, %v1384
        %v1386 = vpack.c.bf16 %v1385, %v1385
        %v1387 = vld [vmem:[#allocation3] sm:$0xff]
        %v1389 = vsel %vm1326, %v1386, 0
        %1391 = vmatprep.subr.bf16.mxu0 0
        %1392 = vmatpush1.bf16.msra.mxu0 %v1387
        %1393 = vmatprep.subr.bf16.mxu0 0
        %1394 = vmatpush1.bf16.msra.mxu0 0
        %1395 = vmatprep.subr.bf16.mxu0 0
        %1396 = vmatpush1.bf16.msra.mxu0 0
        %1397 = vmatprep.subr.bf16.mxu0 0
        %1398 = vmatpush1.bf16.msra.mxu0 0
        %1399 = vmatprep.subr.bf16.mxu0 0
        %1400 = vmatpush1.bf16.msra.mxu0 0
        %1401 = vmatprep.subr.bf16.mxu0 0
        %1402 = vmatpush1.bf16.msra.mxu0 0
        %1403 = vmatprep.subr.bf16.mxu0 0
        %1404 = vmatpush1.bf16.msra.mxu0 0
        %1405 = vmatprep.subr.bf16.mxu0 0
        %1406 = vmatpush1.bf16.msra.mxu0 0
        %1407 = vmatprep.subr.bf16.mxu0 0
        %1408 = vmatpush1.bf16.msra.mxu0 0
        %1409 = vmatprep.subr.bf16.mxu0 0
        %1410 = vmatpush1.bf16.msra.mxu0 0
        %1411 = vmatprep.subr.bf16.mxu0 0
        %1412 = vmatpush1.bf16.msra.mxu0 0
        %1413 = vmatprep.subr.bf16.mxu0 0
        %1414 = vmatpush1.bf16.msra.mxu0 0
        %1415 = vmatprep.subr.bf16.mxu0 0
        %1416 = vmatpush1.bf16.msra.mxu0 0
        %1417 = vmatprep.subr.bf16.mxu0 0
        %1418 = vmatpush1.bf16.msra.mxu0 0
        %1419 = vmatprep.subr.bf16.mxu0 0
        %1420 = vmatpush1.bf16.msra.mxu0 0
        %1421 = vmatprep.subr.bf16.mxu0 0
        %1422 = vmatpush1.bf16.msra.mxu0 0
        %1423 = vmatprep.mubr.bf16.mxu0 0
        %1424 = vmatmul.mubr.bf16.gmra.mrb[0].mxu0 %v1389
        %v1425 = vpop.f32.mrb[0].mxu0
        %v1426 = vadd.f32 0.0, %v1425
        %v1427 = vpop.f32.mrb[0].mxu0
        %v1428 = vpop.f32.mrb[0].mxu0
        %v1429 = vpop.f32.mrb[0].mxu0
        %1430 = vdwg.mxu0
        %1431 = vst.msk [vmem:[#allocation5] sm:$0xff] %vm1326, %v1426
        %v1432 = vld [vmem:[#allocation2] sm:$0xff]
        %1434 = vrot.lane.b32.xlu0 %v1324, 112
        %v1435 = vpop.permute.xlu0 %1434
        %1437 = vrot.lane.b32.xlu0 %v1432, 112
        %v1438 = vpop.permute.xlu0 %1437
        %v1440 = vsel %vm1326, %v1435, 0
        %v1443 = vsel %vm1326, %v1438, 0
        %1445 = vmatprep.subr.bf16.mxu0 0
        %1446 = vmatpush1.bf16.xpose.msra.mxu0 %v1443
        %1447 = vmatprep.subr.bf16.mxu0 0
        %1448 = vmatpush1.bf16.xpose.msra.mxu0 0
        %1449 = vmatprep.subr.bf16.mxu0 0
        %1450 = vmatpush1.bf16.xpose.msra.mxu0 0
        %1451 = vmatprep.subr.bf16.mxu0 0
        %1452 = vmatpush1.bf16.xpose.msra.mxu0 0
        %1453 = vmatprep.subr.bf16.mxu0 0
        %1454 = vmatpush1.bf16.xpose.msra.mxu0 0
        %1455 = vmatprep.subr.bf16.mxu0 0
        %1456 = vmatpush1.bf16.xpose.msra.mxu0 0
        %1457 = vmatprep.subr.bf16.mxu0 0
        %1458 = vmatpush1.bf16.xpose.msra.mxu0 0
        %1459 = vmatprep.subr.bf16.mxu0 0
        %1460 = vmatpush1.bf16.xpose.msra.mxu0 0
        %1461 = vmatprep.subr.bf16.mxu0 0
        %1462 = vmatpush1.bf16.xpose.msra.mxu0 0
        %1463 = vmatprep.subr.bf16.mxu0 0
        %1464 = vmatpush1.bf16.xpose.msra.mxu0 0
        %1465 = vmatprep.subr.bf16.mxu0 0
        %1466 = vmatpush1.bf16.xpose.msra.mxu0 0
        %1467 = vmatprep.subr.bf16.mxu0 0
        %1468 = vmatpush1.bf16.xpose.msra.mxu0 0
        %1469 = vmatprep.subr.bf16.mxu0 0
        %1470 = vmatpush1.bf16.xpose.msra.mxu0 0
        %1471 = vmatprep.subr.bf16.mxu0 0
        %1472 = vmatpush1.bf16.xpose.msra.mxu0 0
        %1473 = vmatprep.subr.bf16.mxu0 0
        %1474 = vmatpush1.bf16.xpose.msra.mxu0 0
        %1475 = vmatprep.subr.bf16.mxu0 0
        %1476 = vmatpush1.bf16.xpose.msra.mxu0 0
        %1477 = vmatprep.mubr.bf16.mxu0 0
        %1478 = vmatmul.mubr.bf16.gmra.mrb[0].mxu0 %v1440
        %v1479 = vpop.f32.mrb[0].mxu0
        %v1480 = vadd.f32 0.0, %v1479
        %v1481 = vpop.f32.mrb[0].mxu0
        %v1482 = vpop.f32.mrb[0].mxu0
        %v1483 = vpop.f32.mrb[0].mxu0
        %1484 = vdwg.mxu0
        %v1485 = vmul.f32 %v1480, 0.25
        %v1486 = vadd.f32 %v1485, %v1323
        %v1487 = vsel %vm1326, %v1486, -inf
        %1488 = vmax.xlane.f32.xlu0 %v1487
        %v1489 = vpop.xlane.xlu0 %1488
        %v1490 = vsub.f32 %v1486, %v1489
        %v1491 = vmul.f32 %v1490, 1.442695
        %v1492 = vpow.pop %v1491
        %v1493 = vsel %vm1326, %v1492, 0.0
        %1494 = vadd.xlane.f32.xlu0 %v1493
        %v1495 = vpop.xlane.xlu0 %1494
        %v1496 = vrcp.pop %v1495
        %v1497 = vmul.f32 %v1492, %v1496
        %v1498 = vpack.c.bf16 %v1497, %v1497
        %v1499 = vld [vmem:[#allocation3] sm:$0xff]
        %1501 = vrot.lane.b32.xlu0 %v1499, 112
        %v1502 = vpop.permute.xlu0 %1501
        %v1505 = vsel %vm1326, %v1498, 0
        %1507 = vmatprep.subr.bf16.mxu0 0
        %1508 = vmatpush1.bf16.msra.mxu0 %v1502
        %1509 = vmatprep.subr.bf16.mxu0 0
        %1510 = vmatpush1.bf16.msra.mxu0 0
        %1511 = vmatprep.subr.bf16.mxu0 0
        %1512 = vmatpush1.bf16.msra.mxu0 0
        %1513 = vmatprep.subr.bf16.mxu0 0
        %1514 = vmatpush1.bf16.msra.mxu0 0
        %1515 = vmatprep.subr.bf16.mxu0 0
        %1516 = vmatpush1.bf16.msra.mxu0 0
        %1517 = vmatprep.subr.bf16.mxu0 0
        %1518 = vmatpush1.bf16.msra.mxu0 0
        %1519 = vmatprep.subr.bf16.mxu0 0
        %1520 = vmatpush1.bf16.msra.mxu0 0
        %1521 = vmatprep.subr.bf16.mxu0 0
        %1522 = vmatpush1.bf16.msra.mxu0 0
        %1523 = vmatprep.subr.bf16.mxu0 0
        %1524 = vmatpush1.bf16.msra.mxu0 0
        %1525 = vmatprep.subr.bf16.mxu0 0
        %1526 = vmatpush1.bf16.msra.mxu0 0
        %1527 = vmatprep.subr.bf16.mxu0 0
        %1528 = vmatpush1.bf16.msra.mxu0 0
        %1529 = vmatprep.subr.bf16.mxu0 0
        %1530 = vmatpush1.bf16.msra.mxu0 0
        %1531 = vmatprep.subr.bf16.mxu0 0
        %1532 = vmatpush1.bf16.msra.mxu0 0
        %1533 = vmatprep.subr.bf16.mxu0 0
        %1534 = vmatpush1.bf16.msra.mxu0 0
        %1535 = vmatprep.subr.bf16.mxu0 0
        %1536 = vmatpush1.bf16.msra.mxu0 0
        %1537 = vmatprep.subr.bf16.mxu0 0
        %1538 = vmatpush1.bf16.msra.mxu0 0
        %1539 = vmatprep.mubr.bf16.mxu0 0
        %1540 = vmatmul.mubr.bf16.gmra.mrb[0].mxu0 %v1505
        %v1541 = vpop.f32.mrb[0].mxu0
        %v1542 = vadd.f32 0.0, %v1541
        %v1543 = vpop.f32.mrb[0].mxu0
        %v1544 = vpop.f32.mrb[0].mxu0
        %v1545 = vpop.f32.mrb[0].mxu0
        %1546 = vdwg.mxu0
        %1548 = vrot.lane.b32.xlu0 %v1542, 16
        %v1549 = vpop.permute.xlu0 %1548
        %vm1551 = vcmask 261248
        %1552 = vst.msk [vmem:[#allocation5] sm:$0xff] %vm1551, %v1549
        %v1553 = vld [vmem:[#allocation5] sm:$0xff]
        %v1554 = vpack.c.bf16 %v1553, %v1553
        %v1555 = vld [vmem:[%s14] sm:$0xf]
        %v1556 = vld [vmem:[%s14 + $0x4] sm:$0xf]
        %v1557 = vld [vmem:[%s14 + $0x8] sm:$0xf]
        %v1558 = vld [vmem:[%s14 + $0xc] sm:$0xf]
        %v1559 = vld [vmem:[%s15] sm:$0x1]
        %v1561 = vlaneseq
        %v1562 = vshrl.u32 %v1561, 7
        %v1563 = vsub.s32 0, %v1562
        %v1564 = vrot.slane %v1559, %v1563
        %v1570 = vunpack.c.l.b16 %v1555
        %v1571 = vunpack.c.l.b16 %v1556
        %v1572 = vunpack.c.l.b16 %v1557
        %v1573 = vunpack.c.l.b16 %v1558
        %v1574 = vpack.c.b16 %v1571, %v1570
        %v1575 = vpack.c.b16 %v1573, %v1572
        %v1579 = vsel %vm1227, %v1554, 0
        %1581 = vmatprep.subr.bf16.mxu0 0
        %1582 = vmatpush1.bf16.msra.mxu0 %v1574
        %1583 = vmatprep.subr.bf16.mxu0 0
        %1584 = vmatpush1.bf16.msra.mxu0 %v1575
        %1585 = vmatprep.subr.bf16.mxu0 0
        %1586 = vmatpush1.bf16.msra.mxu0 0
        %1587 = vmatprep.subr.bf16.mxu0 0
        %1588 = vmatpush1.bf16.msra.mxu0 0
        %1589 = vmatprep.subr.bf16.mxu0 0
        %1590 = vmatpush1.bf16.msra.mxu0 0
        %1591 = vmatprep.subr.bf16.mxu0 0
        %1592 = vmatpush1.bf16.msra.mxu0 0
        %1593 = vmatprep.subr.bf16.mxu0 0
        %1594 = vmatpush1.bf16.msra.mxu0 0
        %1595 = vmatprep.subr.bf16.mxu0 0
        %1596 = vmatpush1.bf16.msra.mxu0 0
        %1597 = vmatprep.subr.bf16.mxu0 0
        %1598 = vmatpush1.bf16.msra.mxu0 0
        %1599 = vmatprep.subr.bf16.mxu0 0
        %1600 = vmatpush1.bf16.msra.mxu0 0
        %1601 = vmatprep.subr.bf16.mxu0 0
        %1602 = vmatpush1.bf16.msra.mxu0 0
        %1603 = vmatprep.subr.bf16.mxu0 0
        %1604 = vmatpush1.bf16.msra.mxu0 0
        %1605 = vmatprep.subr.bf16.mxu0 0
        %1606 = vmatpush1.bf16.msra.mxu0 0
        %1607 = vmatprep.subr.bf16.mxu0 0
        %1608 = vmatpush1.bf16.msra.mxu0 0
        %1609 = vmatprep.subr.bf16.mxu0 0
        %1610 = vmatpush1.bf16.msra.mxu0 0
        %1611 = vmatprep.subr.bf16.mxu0 0
        %1612 = vmatpush1.bf16.msra.mxu0 0
        %1613 = vmatprep.mubr.bf16.mxu0 0
        %1614 = vmatmul.mubr.bf16.gmra.mrb[0].mxu0 %v1579
        %v1615 = vpop.f32.mrb[0].mxu0
        %v1616 = vadd.f32 %v1564, %v1615
        %v1617 = vpop.f32.mrb[0].mxu0
        %v1618 = vpop.f32.mrb[0].mxu0
        %v1619 = vpop.f32.mrb[0].mxu0
        %1620 = vdwg.mxu0
        %v1621 = vadd.f32 %v1616, %v879
        %v1622 = vld [vmem:[%s16] sm:$0x1]
        %v1623 = vld [vmem:[%s17] sm:$0x1]
        %v1624 = vsel %vm1227, %v1621, 0.0
        %1625 = vadd.xlane.f32.xlu0 %v1624
        %v1626 = vpop.xlane.xlu0 %1625
        %v1627 = vmul.f32 %v1626, %v1231
        %v1628 = vsub.f32 %v1621, %v1627
        %v1629 = vmul.f32 %v1628, %v1628
        %v1630 = vsel %vm1227, %v1629, 0.0
        %1631 = vadd.xlane.f32.xlu0 %v1630
        %v1632 = vpop.xlane.xlu0 %1631
        %v1633 = vmul.f32 %v1632, %v1231
        %v1634 = vadd.f32 %v1633, 1e-12
        %v1635 = vrsqrt.pop %v1634
        %v1636 = vmul.f32 %v1628, %v1635
        %v1638 = vlaneseq
        %v1639 = vshrl.u32 %v1638, 7
        %v1640 = vsub.s32 0, %v1639
        %v1641 = vrot.slane %v1622, %v1640
        %v1643 = vmul.f32 %v1641, %v1636
        %v1645 = vlaneseq
        %v1646 = vshrl.u32 %v1645, 7
        %v1647 = vsub.s32 0, %v1646
        %v1648 = vrot.slane %v1623, %v1647
        %v1650 = vadd.f32 %v1643, %v1648
        %v1651 = vmul.f32 %v1255, 0.5
        %v1652 = vmul.f32 %v1650, 0.5
        %v1653 = vadd.f32 %v1651, %v1652
        %v1654 = vpack.c.bf16 %v1653, %v1653
        %v1655 = vld [vmem:[%s18] sm:$0xf]
        %v1656 = vld [vmem:[%s18 + $0x4] sm:$0xf]
        %v1657 = vld [vmem:[%s18 + $0x8] sm:$0xf]
        %v1658 = vld [vmem:[%s18 + $0xc] sm:$0xf]
        %v1659 = vld [vmem:[%s19] sm:$0x1]
        %v1661 = vlaneseq
        %v1662 = vshrl.u32 %v1661, 7
        %v1663 = vsub.s32 0, %v1662
        %v1664 = vrot.slane %v1659, %v1663
        %v1670 = vunpack.c.l.b16 %v1655
        %v1671 = vunpack.c.l.b16 %v1656
        %v1672 = vunpack.c.l.b16 %v1657
        %v1673 = vunpack.c.l.b16 %v1658
        %v1674 = vpack.c.b16 %v1671, %v1670
        %v1675 = vpack.c.b16 %v1673, %v1672
        %v1679 = vsel %vm1227, %v1654, 0
        %1681 = vmatprep.subr.bf16.mxu0 0
        %1682 = vmatpush1.bf16.msra.mxu0 %v1674
        %1683 = vmatprep.subr.bf16.mxu0 0
        %1684 = vmatpush1.bf16.msra.mxu0 %v1675
        %1685 = vmatprep.subr.bf16.mxu0 0
        %1686 = vmatpush1.bf16.msra.mxu0 0
        %1687 = vmatprep.subr.bf16.mxu0 0
        %1688 = vmatpush1.bf16.msra.mxu0 0
        %1689 = vmatprep.subr.bf16.mxu0 0
        %1690 = vmatpush1.bf16.msra.mxu0 0
        %1691 = vmatprep.subr.bf16.mxu0 0
        %1692 = vmatpush1.bf16.msra.mxu0 0
        %1693 = vmatprep.subr.bf16.mxu0 0
        %1694 = vmatpush1.bf16.msra.mxu0 0
        %1695 = vmatprep.subr.bf16.mxu0 0
        %1696 = vmatpush1.bf16.msra.mxu0 0
        %1697 = vmatprep.subr.bf16.mxu0 0
        %1698 = vmatpush1.bf16.msra.mxu0 0
        %1699 = vmatprep.subr.bf16.mxu0 0
        %1700 = vmatpush1.bf16.msra.mxu0 0
        %1701 = vmatprep.subr.bf16.mxu0 0
        %1702 = vmatpush1.bf16.msra.mxu0 0
        %1703 = vmatprep.subr.bf16.mxu0 0
        %1704 = vmatpush1.bf16.msra.mxu0 0
        %1705 = vmatprep.subr.bf16.mxu0 0
        %1706 = vmatpush1.bf16.msra.mxu0 0
        %1707 = vmatprep.subr.bf16.mxu0 0
        %1708 = vmatpush1.bf16.msra.mxu0 0
        %1709 = vmatprep.subr.bf16.mxu0 0
        %1710 = vmatpush1.bf16.msra.mxu0 0
        %1711 = vmatprep.subr.bf16.mxu0 0
        %1712 = vmatpush1.bf16.msra.mxu0 0
        %1713 = vmatprep.mubr.bf16.mxu0 0
        %1714 = vmatmul.mubr.bf16.gmra.mrb[0].mxu0 %v1679
        %v1715 = vpop.f32.mrb[0].mxu0
        %v1716 = vadd.f32 %v1664, %v1715
        %v1717 = vpop.f32.mrb[0].mxu0
        %v1718 = vpop.f32.mrb[0].mxu0
        %v1719 = vpop.f32.mrb[0].mxu0
        %1720 = vdwg.mxu0
        %v1721 = vmul.f32 %v1716, 0.5
        %v1722 = vmul.f32 %v1716, 0.70710677
        %v1723 = verf.f32.pop %v1722
        %v1724 = vadd.f32 %v1723, 1.0
        %v1725 = vmul.f32 %v1721, %v1724
        %v1726 = vpack.c.bf16 %v1725, %v1725
        %v1727 = vld [vmem:[%s20] sm:$0xf]
        %v1728 = vld [vmem:[%s20 + $0x4] sm:$0xf]
        %v1729 = vld [vmem:[%s20 + $0x8] sm:$0xf]
        %v1730 = vld [vmem:[%s20 + $0xc] sm:$0xf]
        %v1731 = vld [vmem:[%s20 + $0x10] sm:$0xf]
        %v1732 = vld [vmem:[%s20 + $0x14] sm:$0xf]
        %v1733 = vld [vmem:[%s20 + $0x18] sm:$0xf]
        %v1734 = vld [vmem:[%s20 + $0x1c] sm:$0xf]
        %v1735 = vld [vmem:[%s20 + $0x20] sm:$0xf]
        %v1736 = vld [vmem:[%s20 + $0x24] sm:$0xf]
        %v1737 = vld [vmem:[%s20 + $0x28] sm:$0xf]
        %v1738 = vld [vmem:[%s20 + $0x2c] sm:$0xf]
        %v1739 = vld [vmem:[%s20 + $0x30] sm:$0xf]
        %v1740 = vld [vmem:[%s20 + $0x34] sm:$0xf]
        %v1741 = vld [vmem:[%s20 + $0x38] sm:$0xf]
        %v1742 = vld [vmem:[%s20 + $0x3c] sm:$0xf]
        %v1743 = vld [vmem:[%s21] sm:$0x1]
        %v1745 = vlaneseq
        %v1746 = vshrl.u32 %v1745, 7
        %v1747 = vsub.s32 0, %v1746
        %v1748 = vrot.slane %v1743, %v1747
        %v1766 = vunpack.c.l.b16 %v1727
        %v1767 = vunpack.c.l.b16 %v1728
        %v1768 = vunpack.c.l.b16 %v1729
        %v1769 = vunpack.c.l.b16 %v1730
        %v1770 = vunpack.c.l.b16 %v1731
        %v1771 = vunpack.c.l.b16 %v1732
        %v1772 = vunpack.c.l.b16 %v1733
        %v1773 = vunpack.c.l.b16 %v1734
        %v1774 = vunpack.c.l.b16 %v1735
        %v1775 = vunpack.c.l.b16 %v1736
        %v1776 = vunpack.c.l.b16 %v1737
        %v1777 = vunpack.c.l.b16 %v1738
        %v1778 = vunpack.c.l.b16 %v1739
        %v1779 = vunpack.c.l.b16 %v1740
        %v1780 = vunpack.c.l.b16 %v1741
        %v1781 = vunpack.c.l.b16 %v1742
        %v1782 = vpack.c.b16 %v1767, %v1766
        %v1783 = vpack.c.b16 %v1769, %v1768
        %v1784 = vpack.c.b16 %v1771, %v1770
        %v1785 = vpack.c.b16 %v1773, %v1772
        %v1786 = vpack.c.b16 %v1775, %v1774
        %v1787 = vpack.c.b16 %v1777, %v1776
        %v1788 = vpack.c.b16 %v1779, %v1778
        %v1789 = vpack.c.b16 %v1781, %v1780
        %1798 = vmatprep.subr.bf16.mxu0 0
        %1799 = vmatpush1.bf16.msra.mxu0 %v1782
        %1800 = vmatprep.subr.bf16.mxu0 0
        %1801 = vmatpush1.bf16.msra.mxu0 %v1783
        %1802 = vmatprep.subr.bf16.mxu0 0
        %1803 = vmatpush1.bf16.msra.mxu0 %v1784
        %1804 = vmatprep.subr.bf16.mxu0 0
        %1805 = vmatpush1.bf16.msra.mxu0 %v1785
        %1806 = vmatprep.subr.bf16.mxu0 0
        %1807 = vmatpush1.bf16.msra.mxu0 %v1786
        %1808 = vmatprep.subr.bf16.mxu0 0
        %1809 = vmatpush1.bf16.msra.mxu0 %v1787
        %1810 = vmatprep.subr.bf16.mxu0 0
        %1811 = vmatpush1.bf16.msra.mxu0 %v1788
        %1812 = vmatprep.subr.bf16.mxu0 0
        %1813 = vmatpush1.bf16.msra.mxu0 %v1789
        %1814 = vmatprep.subr.bf16.mxu0 0
        %1815 = vmatpush1.bf16.msra.mxu0 0
        %1816 = vmatprep.subr.bf16.mxu0 0
        %1817 = vmatpush1.bf16.msra.mxu0 0
        %1818 = vmatprep.subr.bf16.mxu0 0
        %1819 = vmatpush1.bf16.msra.mxu0 0
        %1820 = vmatprep.subr.bf16.mxu0 0
        %1821 = vmatpush1.bf16.msra.mxu0 0
        %1822 = vmatprep.subr.bf16.mxu0 0
        %1823 = vmatpush1.bf16.msra.mxu0 0
        %1824 = vmatprep.subr.bf16.mxu0 0
        %1825 = vmatpush1.bf16.msra.mxu0 0
        %1826 = vmatprep.subr.bf16.mxu0 0
        %1827 = vmatpush1.bf16.msra.mxu0 0
        %1828 = vmatprep.subr.bf16.mxu0 0
        %1829 = vmatpush1.bf16.msra.mxu0 0
        %1830 = vmatprep.mubr.bf16.mxu0 0
        %1831 = vmatmul.mubr.bf16.gmra.mrb[0].mxu0 %v1726
        %v1832 = vpop.f32.mrb[0].mxu0
        %v1833 = vadd.f32 %v1748, %v1832
        %v1834 = vpop.f32.mrb[0].mxu0
        %v1835 = vpop.f32.mrb[0].mxu0
        %v1836 = vpop.f32.mrb[0].mxu0
        %1837 = vdwg.mxu0
        %v1838 = vadd.f32 %v1833, %v1653
        %v1839 = vld [vmem:[%s22] sm:$0x1]
        %v1840 = vld [vmem:[%s23] sm:$0x1]
        %v1841 = vsel %vm1227, %v1838, 0.0
        %1842 = vadd.xlane.f32.xlu0 %v1841
        %v1843 = vpop.xlane.xlu0 %1842
        %v1844 = vmul.f32 %v1843, %v1231
        %v1845 = vsub.f32 %v1838, %v1844
        %v1846 = vmul.f32 %v1845, %v1845
        %v1847 = vsel %vm1227, %v1846, 0.0
        %1848 = vadd.xlane.f32.xlu0 %v1847
        %v1849 = vpop.xlane.xlu0 %1848
        %v1850 = vmul.f32 %v1849, %v1231
        %v1851 = vadd.f32 %v1850, 1e-12
        %v1852 = vrsqrt.pop %v1851
        %v1853 = vmul.f32 %v1845, %v1852
        %v1855 = vlaneseq
        %v1856 = vshrl.u32 %v1855, 7
        %v1857 = vsub.s32 0, %v1856
        %v1858 = vrot.slane %v1839, %v1857
        %v1860 = vmul.f32 %v1858, %v1853
        %v1862 = vlaneseq
        %v1863 = vshrl.u32 %v1862, 7
        %v1864 = vsub.s32 0, %v1863
        %v1865 = vrot.slane %v1840, %v1864
        %v1867 = vadd.f32 %v1860, %v1865
        %1868 = vst.msk [vmem:[%s856] sm:$0xff] %vm1227, %v1867
        %s1869 = sand.u32 %s589, 1
        %s1870 = scalar_lea.sflag [#allocation8], %s1869
        %s1871 = sand.u32 %s589, 1
        %s1872 = smul.addr %s1871, 8
        %s1873 = scalar_lea.vmem [#allocation15], %s1872
        // Predicated region
        $region141: #{tpu_custom_call.1} parent=115 // pred_check
          %p1874 = pneg %p599
        $region142: #{tpu_custom_call.1} parent=115 // pred_check_branch
          %1876 = sbr.rel (%p1874) target = $region144
        $region143: #{tpu_custom_call.1} parent=115 // pred_region
          %s1878 = ssub.s32 128, 128
          %1879 = vsyncadd %s1870, %s1878
          %s1880 = smul.addr %s45, 2
          %s1881 = sadd.s32 %s46, %s1880
          %s1882 = smul.addr %s1881, 128
          %s1883 = scalar_lea.hbm %s24, %s1882
          %s1885 = sshll.u32 %s1873, 4
          %s1886 = int_to_ptr.vmem [resolvable:$true] %s1885
          %1888 = dma.vmem_to_hbm [thread:$0]  %s1886, 128, %s1883, %s1870
        $region144: #{tpu_custom_call.1} parent=115 // pred_fallthru
          _
      $region116: #{tpu_custom_call.1} parent=5 // pred_fallthru
        _
      %p1889 = scmp.le.s32.totalorder 2, %s36
      // Predicated region
      $region145: #{tpu_custom_call.1} parent=5 // pred_check
        %p1890 = pneg %p1889
      $region146: #{tpu_custom_call.1} parent=5 // pred_check_branch
        %1892 = sbr.rel (%p1890) target = $region148
      $region147: #{tpu_custom_call.1} parent=5 // pred_region
        %s1893 = ssub.s32 %s36, 2
        // Predicated region
        $region149: #{tpu_custom_call.1} parent=147 // pred_check
          %p1894 = pneg %p605
        $region150: #{tpu_custom_call.1} parent=147 // pred_check_branch
          %1896 = sbr.rel (%p1894) target = $region152
        $region151: #{tpu_custom_call.1} parent=147 // pred_region
          %s1897 = sand.u32 %s590, 1
          %s1898 = scalar_lea.sflag [#allocation8], %s1897
          %s1899 = sand.u32 %s590, 1
          %s1900 = smul.addr %s1899, 8
          %s1901 = scalar_lea.vmem [#allocation15], %s1900
          %1902 = dma.done %s1898, 128
        $region152: #{tpu_custom_call.1} parent=147 // pred_fallthru
          _
      $region148: #{tpu_custom_call.1} parent=5 // pred_fallthru
        _
    $region6: #{tpu_custom_call.1} parent=1 // loop_footer
      %s40 = sadd.s32 1, %s36
    $region7: #{tpu_custom_call.1} parent=1 // loop_footer_branch
      %35 = sbr.rel target = $region3
    $region8: #{tpu_custom_call.1} parent=1 // loop_exit
      _
    %1903 = vsyncpa [#allocation7], 1
    %s1904 = scalar_lea.sflag [#allocation7], 1
    %1905 = vsyncpa %s1904, 1
    %1906 = vsyncpa [#allocation10], 1
    %1907 = vsyncpa [#allocation13], 1
    %1908 = vsyncpa [#allocation8], 1
    %s1909 = scalar_lea.sflag [#allocation8], 1
    %1910 = vsyncpa %s1909, 1

// kernel: tpu_custom_call.1
$region0: #{tpu_custom_call.1}
  #allocation0 [shape = 'u32[]', space=smem, size = 0x4, offset = 0x4, fixed_abs, tag = 'smem constant byte address 0x4 - core index']
  #allocation1 [shape = 'u32[144,128]{1,0:T(1,128)}', space=vmem, size = 0x12000, scoped, tag = 'internal scratch']
  #allocation2 [shape = 'bf16[16,32]{1,0:T(16,128)(2,1)}', space=vmem, size = 0x1000, scoped, tag = 'scratch operand']
  #allocation3 [shape = 'bf16[16,32]{1,0:T(16,128)(2,1)}', space=vmem, size = 0x1000, scoped, tag = 'scratch operand']
  #allocation4 [shape = 'f32[5,32]{1,0:T(8,128)}', space=vmem, size = 0x1000, scoped, tag = 'scratch operand']
  #allocation5 [shape = 'f32[8,32]{1,0:T(8,128)}', space=vmem, size = 0x1000, scoped, tag = 'scratch operand']
  %s0 = inlined_call_operand.vmem [shape: f32[2,16,32], index: 0, kind: input, shape index: {}]
  %s1 = inlined_call_operand.vmem [shape: f32[2,16,32], index: 1, kind: input, shape index: {}]
  %s2 = inlined_call_operand.vmem [shape: f32[16,16], index: 2, kind: input, shape index: {}]
  %s3 = inlined_call_operand.vmem [shape: f32[16,5], index: 3, kind: input, shape index: {}]
  %s4 = inlined_call_operand.vmem [shape: f32[16,5], index: 4, kind: input, shape index: {}]
  %s5 = inlined_call_operand.vmem [shape: f32[1,32], index: 5, kind: input, shape index: {}]
  %s6 = inlined_call_operand.hbm [shape: f32[1,32], index: 6, kind: input, shape index: {}]
  %s7 = inlined_call_operand.hbm [shape: f32[1,32], index: 7, kind: input, shape index: {}]
  %s8 = inlined_call_operand.vmem [shape: bf16[32,32], index: 8, kind: input, shape index: {}]
  %s9 = inlined_call_operand.hbm [shape: f32[1,32], index: 9, kind: input, shape index: {}]
  %s10 = inlined_call_operand.vmem [shape: bf16[32,32], index: 10, kind: input, shape index: {}]
  %s11 = inlined_call_operand.hbm [shape: f32[1,32], index: 11, kind: input, shape index: {}]
  %s12 = inlined_call_operand.vmem [shape: bf16[32,32], index: 12, kind: input, shape index: {}]
  %s13 = inlined_call_operand.hbm [shape: f32[1,32], index: 13, kind: input, shape index: {}]
  %s14 = inlined_call_operand.vmem [shape: bf16[32,32], index: 14, kind: input, shape index: {}]
  %s15 = inlined_call_operand.vmem [shape: f32[1,32], index: 15, kind: input, shape index: {}]
  %s16 = inlined_call_operand.vmem [shape: f32[1,32], index: 16, kind: input, shape index: {}]
  %s17 = inlined_call_operand.vmem [shape: f32[1,32], index: 17, kind: input, shape index: {}]
  %s18 = inlined_call_operand.vmem [shape: bf16[1,32,128], index: 18, kind: input, shape index: {}]
  %s19 = inlined_call_operand.vmem [shape: f32[1,1,128], index: 19, kind: input, shape index: {}]
  %s20 = inlined_call_operand.vmem [shape: bf16[1,128,32], index: 20, kind: input, shape index: {}]
  %s21 = inlined_call_operand.vmem [shape: f32[1,32], index: 21, kind: input, shape index: {}]
  %s22 = inlined_call_operand.vmem [shape: f32[1,32], index: 22, kind: input, shape index: {}]
  %s23 = inlined_call_operand.vmem [shape: f32[1,32], index: 23, kind: input, shape index: {}]
  %s24 = inlined_call_operand.hbm [shape: f32[2,16,32], index: 24, kind: output, shape index: {}]
  %s25 = sld [smem:[#allocation0]]
  $region153: #{tpu_custom_call.1} parent=0
    _
  %s27 = ssub.s32 1, %s25
  %s28 = scalar_select 0, %s27, %s25
  $region1: #{tpu_custom_call.1} parent=0
    #allocation6 [shape = 'u8[512]{0}', space=vmem, size = 0x400, scoped, tag = 'input window, operand 6, single buffered']
    #allocation7 [shape = 's32[2]{0}', space=sflag, size = 0x8, scoped, tag = 'scoped memory for tpu_custom_call.1']
    #allocation8 [shape = 's32[2]{0}', space=sflag, size = 0x8, scoped, tag = 'scoped memory for tpu_custom_call.1']
    #allocation9 [shape = 'u8[512]{0}', space=vmem, size = 0x400, scoped, tag = 'input window, operand 7, single buffered']
    #allocation10 [shape = 's32[1]{0}', space=sflag, size = 0x4, scoped, tag = 'scoped memory for tpu_custom_call.1']
    #allocation11 [shape = 'u8[512]{0}', space=vmem, size = 0x400, scoped, tag = 'input window, operand 9, single buffered']
    #allocation12 [shape = 'u8[512]{0}', space=vmem, size = 0x400, scoped, tag = 'input window, operand 11, single buffered']
    #allocation13 [shape = 's32[1]{0}', space=sflag, size = 0x4, scoped, tag = 'scoped memory for tpu_custom_call.1']
    #allocation14 [shape = 'u8[512]{0}', space=vmem, size = 0x400, scoped, tag = 'input window, operand 13, single buffered']
    #allocation15 [shape = 'u8[8192]{0}', space=vmem, size = 0x2000, scoped, tag = 'output window, operand 0']
    %29 = vsyncpa [#allocation7], 0
    %30 = vsyncpa [#allocation10], 0
    %31 = vsyncpa [#allocation13], 0
    %32 = vsyncpa [#allocation8], 0
    %s33 = scalar_lea.sflag [#allocation8], 1
    %34 = vsyncpa %s33, 0
    loop: start=0, step=1, limit=6
    $region2: #{tpu_custom_call.1} parent=1 // loop_pre_header
      _
    $region3: #{tpu_custom_call.1} parent=1 // loop_header
      %s36 = sphi 0, %s40
      %p37 = scmp.ge.s32.totalorder %s36, 6
      %s43 = sphi 0, %s55
      %s44 = sphi 0, %s51
      %s45 = sphi 0, %s43
      %s46 = sphi 0, %s44
      %s47 = sphi 0, %s45
      %s48 = sphi 0, %s46
      %s58 = sphi 0, %s60
      %s61 = sphi 0, %s58
      %s62 = sphi 0, %s61
      %s78 = sphi 0, %s62
      %s86 = sphi 0, %s88
      %s89 = sphi 0, %s86
      %s90 = sphi 0, %s89
      %s106 = sphi 0, %s90
      %s112 = sphi 0, %s114
      %s115 = sphi 0, %s112
      %s116 = sphi 0, %s115
      %s132 = sphi 0, %s116
      %s136 = sphi 0, %s136
      %s138 = sphi 0, %s136
      %s139 = sphi 0, %s138
      %s153 = sphi 0, %s139
      %s159 = sphi 0, %s161
      %s162 = sphi 0, %s159
      %s163 = sphi 0, %s162
      %s179 = sphi 0, %s163
      %s183 = sphi 0, %s183
      %s185 = sphi 0, %s183
      %s186 = sphi 0, %s185
      %s200 = sphi 0, %s186
      %s204 = sphi 0, %s204
      %s206 = sphi 0, %s204
      %s207 = sphi 0, %s206
      %s221 = sphi 0, %s207
      %s225 = sphi 0, %s225
      %s227 = sphi 0, %s225
      %s228 = sphi 0, %s227
      %s242 = sphi 0, %s228
      %s246 = sphi 0, %s246
      %s248 = sphi 0, %s246
      %s249 = sphi 0, %s248
      %s263 = sphi 0, %s249
      %s267 = sphi 0, %s267
      %s269 = sphi 0, %s267
      %s270 = sphi 0, %s269
      %s284 = sphi 0, %s270
      %s288 = sphi 0, %s288
      %s290 = sphi 0, %s288
      %s291 = sphi 0, %s290
      %s305 = sphi 0, %s291
      %s309 = sphi 0, %s309
      %s311 = sphi 0, %s309
      %s312 = sphi 0, %s311
      %s326 = sphi 0, %s312
      %s330 = sphi 0, %s330
      %s332 = sphi 0, %s330
      %s333 = sphi 0, %s332
      %s347 = sphi 0, %s333
      %s351 = sphi 0, %s351
      %s353 = sphi 0, %s351
      %s354 = sphi 0, %s353
      %s368 = sphi 0, %s354
      %s372 = sphi 0, %s372
      %s374 = sphi 0, %s372
      %s375 = sphi 0, %s374
      %s389 = sphi 0, %s375
      %s393 = sphi 0, %s393
      %s395 = sphi 0, %s393
      %s396 = sphi 0, %s395
      %s410 = sphi 0, %s396
      %s414 = sphi 0, %s414
      %s416 = sphi 0, %s414
      %s417 = sphi 0, %s416
      %s431 = sphi 0, %s417
      %s435 = sphi 0, %s435
      %s437 = sphi 0, %s435
      %s438 = sphi 0, %s437
      %s452 = sphi 0, %s438
      %s456 = sphi 0, %s456
      %s458 = sphi 0, %s456
      %s459 = sphi 0, %s458
      %s473 = sphi 0, %s459
      %s477 = sphi 0, %s477
      %s479 = sphi 0, %s477
      %s480 = sphi 0, %s479
      %s494 = sphi 0, %s480
      %s498 = sphi 0, %s498
      %s500 = sphi 0, %s498
      %s501 = sphi 0, %s500
      %s515 = sphi 0, %s501
      %s519 = sphi 0, %s519
      %s521 = sphi 0, %s519
      %s522 = sphi 0, %s521
      %s536 = sphi 0, %s522
      %s540 = sphi 0, %s540
      %s542 = sphi 0, %s540
      %s543 = sphi 0, %s542
      %s557 = sphi 0, %s543
      %s561 = sphi 0, %s561
      %s563 = sphi 0, %s561
      %s564 = sphi 0, %s563
      %s578 = sphi 0, %s564
      %s586 = sphi 0, %s588
      %s589 = sphi 0, %s586
      %s590 = sphi 0, %s589
      %s606 = sphi 0, %s590
    $region4: #{tpu_custom_call.1} parent=1 // loop_header_branch
      %39 = sbr.rel (%p37) target = $region8
    $region5: #{tpu_custom_call.1} parent=1 // loop_body
      %s41 = ssub.s32 %s36, 1
      %s42 = ssub.s32 %s36, 2
      %s49 = sadd.s32 1, %s44
      %p50 = scmp.ge.s32.totalorder %s49, 2
      %s51 = scalar_select %p50, 0, %s49
      %s52 = sadd.s32 1, %s43
      %s53 = scalar_select %p50, %s52, %s43
      %p54 = scmp.ge.s32.totalorder %s53, 2
      %s55 = scalar_select %p54, 0, %s53
      %s56 = ssub.s32 %s43, %s55
      %p57 = scmp.eq.s32.totalorder %s56, 0
      %s59 = sadd.s32 %s58, 1
      %s60 = scalar_select %p57, %s58, %s59
      %p63 = pneg %p57
      %p64 = scmp.eq.s32.totalorder %s36, 3
      %p65 = por %p63, %p64
      %p66 = scmp.ne.s32.totalorder %s58, %s61
      %p67 = scmp.eq.s32.totalorder %s36, 0
      %p68 = por %p66, %p67
      %p69 = scmp.ne.s32.totalorder %s58, %s61
      %p70 = scmp.eq.s32.totalorder %s41, 3
      %p71 = por %p69, %p70
      %p72 = scmp.ne.s32.totalorder %s61, %s62
      %p73 = scmp.eq.s32.totalorder %s41, 0
      %p74 = por %p72, %p73
      %p75 = scmp.ne.s32.totalorder %s61, %s62
      %p76 = scmp.eq.s32.totalorder %s42, 3
      %p77 = por %p75, %p76
      %p79 = scmp.ne.s32.totalorder %s62, %s78
      %p80 = scmp.eq.s32.totalorder %s42, 0
      %p81 = por %p79, %p80
      %s82 = ssub.s32 %s43, %s55
      %s83 = ssub.s32 %s44, %s51
      %s84 = sor.u32 %s82, %s83
      %p85 = scmp.eq.s32.totalorder %s84, 0
      %s87 = sadd.s32 %s86, 1
      %s88 = scalar_select %p85, %s86, %s87
      %p91 = pneg %p85
      %p92 = scmp.eq.s32.totalorder %s36, 3
      %p93 = por %p91, %p92
      %p94 = scmp.ne.s32.totalorder %s86, %s89
      %p95 = scmp.eq.s32.totalorder %s36, 0
      %p96 = por %p94, %p95
      %p97 = scmp.ne.s32.totalorder %s86, %s89
      %p98 = scmp.eq.s32.totalorder %s41, 3
      %p99 = por %p97, %p98
      %p100 = scmp.ne.s32.totalorder %s89, %s90
      %p101 = scmp.eq.s32.totalorder %s41, 0
      %p102 = por %p100, %p101
      %p103 = scmp.ne.s32.totalorder %s89, %s90
      %p104 = scmp.eq.s32.totalorder %s42, 3
      %p105 = por %p103, %p104
      %p107 = scmp.ne.s32.totalorder %s90, %s106
      %p108 = scmp.eq.s32.totalorder %s42, 0
      %p109 = por %p107, %p108
      %s110 = ssub.s32 %s44, %s51
      %p111 = scmp.eq.s32.totalorder %s110, 0
      %s113 = sadd.s32 %s112, 1
      %s114 = scalar_select %p111, %s112, %s113
      %p117 = pneg %p111
      %p118 = scmp.eq.s32.totalorder %s36, 3
      %p119 = por %p117, %p118
      %p120 = scmp.ne.s32.totalorder %s112, %s115
      %p121 = scmp.eq.s32.totalorder %s36, 0
      %p122 = por %p120, %p121
      %p123 = scmp.ne.s32.totalorder %s112, %s115
      %p124 = scmp.eq.s32.totalorder %s41, 3
      %p125 = por %p123, %p124
      %p126 = scmp.ne.s32.totalorder %s115, %s116
      %p127 = scmp.eq.s32.totalorder %s41, 0
      %p128 = por %p126, %p127
      %p129 = scmp.ne.s32.totalorder %s115, %s116
      %p130 = scmp.eq.s32.totalorder %s42, 3
      %p131 = por %p129, %p130
      %p133 = scmp.ne.s32.totalorder %s116, %s132
      %p134 = scmp.eq.s32.totalorder %s42, 0
      %p135 = por %p133, %p134
      %s137 = sadd.s32 %s136, 1
      %p140 = scmp.eq.s32.totalorder %s36, 3
      %p141 = scmp.ne.s32.totalorder %s136, %s138
      %p142 = scmp.eq.s32.totalorder %s36, 0
      %p143 = por %p141, %p142
      %p144 = scmp.ne.s32.totalorder %s136, %s138
      %p145 = scmp.eq.s32.totalorder %s41, 3
      %p146 = por %p144, %p145
      %p147 = scmp.ne.s32.totalorder %s138, %s139
      %p148 = scmp.eq.s32.totalorder %s41, 0
      %p149 = por %p147, %p148
      %p150 = scmp.ne.s32.totalorder %s138, %s139
      %p151 = scmp.eq.s32.totalorder %s42, 3
      %p152 = por %p150, %p151
      %p154 = scmp.ne.s32.totalorder %s139, %s153
      %p155 = scmp.eq.s32.totalorder %s42, 0
      %p156 = por %p154, %p155
      %s157 = ssub.s32 %s44, %s51
      %p158 = scmp.eq.s32.totalorder %s157, 0
      %s160 = sadd.s32 %s159, 1
      %s161 = scalar_select %p158, %s159, %s160
      %p164 = pneg %p158
      %p165 = scmp.eq.s32.totalorder %s36, 3
      %p166 = por %p164, %p165
      %p167 = scmp.ne.s32.totalorder %s159, %s162
      %p168 = scmp.eq.s32.totalorder %s36, 0
      %p169 = por %p167, %p168
      %p170 = scmp.ne.s32.totalorder %s159, %s162
      %p171 = scmp.eq.s32.totalorder %s41, 3
      %p172 = por %p170, %p171
      %p173 = scmp.ne.s32.totalorder %s162, %s163
      %p174 = scmp.eq.s32.totalorder %s41, 0
      %p175 = por %p173, %p174
      %p176 = scmp.ne.s32.totalorder %s162, %s163
      %p177 = scmp.eq.s32.totalorder %s42, 3
      %p178 = por %p176, %p177
      %p180 = scmp.ne.s32.totalorder %s163, %s179
      %p181 = scmp.eq.s32.totalorder %s42, 0
      %p182 = por %p180, %p181
      %s184 = sadd.s32 %s183, 1
      %p187 = scmp.eq.s32.totalorder %s36, 3
      %p188 = scmp.ne.s32.totalorder %s183, %s185
      %p189 = scmp.eq.s32.totalorder %s36, 0
      %p190 = por %p188, %p189
      %p191 = scmp.ne.s32.totalorder %s183, %s185
      %p192 = scmp.eq.s32.totalorder %s41, 3
      %p193 = por %p191, %p192
      %p194 = scmp.ne.s32.totalorder %s185, %s186
      %p195 = scmp.eq.s32.totalorder %s41, 0
      %p196 = por %p194, %p195
      %p197 = scmp.ne.s32.totalorder %s185, %s186
      %p198 = scmp.eq.s32.totalorder %s42, 3
      %p199 = por %p197, %p198
      %p201 = scmp.ne.s32.totalorder %s186, %s200
      %p202 = scmp.eq.s32.totalorder %s42, 0
      %p203 = por %p201, %p202
      %s205 = sadd.s32 %s204, 1
      %p208 = scmp.eq.s32.totalorder %s36, 3
      %p209 = scmp.ne.s32.totalorder %s204, %s206
      %p210 = scmp.eq.s32.totalorder %s36, 0
      %p211 = por %p209, %p210
      %p212 = scmp.ne.s32.totalorder %s204, %s206
      %p213 = scmp.eq.s32.totalorder %s41, 3
      %p214 = por %p212, %p213
      %p215 = scmp.ne.s32.totalorder %s206, %s207
      %p216 = scmp.eq.s32.totalorder %s41, 0
      %p217 = por %p215, %p216
      %p218 = scmp.ne.s32.totalorder %s206, %s207
      %p219 = scmp.eq.s32.totalorder %s42, 3
      %p220 = por %p218, %p219
      %p222 = scmp.ne.s32.totalorder %s207, %s221
      %p223 = scmp.eq.s32.totalorder %s42, 0
      %p224 = por %p222, %p223
      %s226 = sadd.s32 %s225, 1
      %p229 = scmp.eq.s32.totalorder %s36, 3
      %p230 = scmp.ne.s32.totalorder %s225, %s227
      %p231 = scmp.eq.s32.totalorder %s36, 0
      %p232 = por %p230, %p231
      %p233 = scmp.ne.s32.totalorder %s225, %s227
      %p234 = scmp.eq.s32.totalorder %s41, 3
      %p235 = por %p233, %p234
      %p236 = scmp.ne.s32.totalorder %s227, %s228
      %p237 = scmp.eq.s32.totalorder %s41, 0
      %p238 = por %p236, %p237
      %p239 = scmp.ne.s32.totalorder %s227, %s228
      %p240 = scmp.eq.s32.totalorder %s42, 3
      %p241 = por %p239, %p240
      %p243 = scmp.ne.s32.totalorder %s228, %s242
      %p244 = scmp.eq.s32.totalorder %s42, 0
      %p245 = por %p243, %p244
      %s247 = sadd.s32 %s246, 1
      %p250 = scmp.eq.s32.totalorder %s36, 3
      %p251 = scmp.ne.s32.totalorder %s246, %s248
      %p252 = scmp.eq.s32.totalorder %s36, 0
      %p253 = por %p251, %p252
      %p254 = scmp.ne.s32.totalorder %s246, %s248
      %p255 = scmp.eq.s32.totalorder %s41, 3
      %p256 = por %p254, %p255
      %p257 = scmp.ne.s32.totalorder %s248, %s249
      %p258 = scmp.eq.s32.totalorder %s41, 0
      %p259 = por %p257, %p258
      %p260 = scmp.ne.s32.totalorder %s248, %s249
      %p261 = scmp.eq.s32.totalorder %s42, 3
      %p262 = por %p260, %p261
      %p264 = scmp.ne.s32.totalorder %s249, %s263
      %p265 = scmp.eq.s32.totalorder %s42, 0
      %p266 = por %p264, %p265
      %s268 = sadd.s32 %s267, 1
      %p271 = scmp.eq.s32.totalorder %s36, 3
      %p272 = scmp.ne.s32.totalorder %s267, %s269
      %p273 = scmp.eq.s32.totalorder %s36, 0
      %p274 = por %p272, %p273
      %p275 = scmp.ne.s32.totalorder %s267, %s269
      %p276 = scmp.eq.s32.totalorder %s41, 3
      %p277 = por %p275, %p276
      %p278 = scmp.ne.s32.totalorder %s269, %s270
      %p279 = scmp.eq.s32.totalorder %s41, 0
      %p280 = por %p278, %p279
      %p281 = scmp.ne.s32.totalorder %s269, %s270
      %p282 = scmp.eq.s32.totalorder %s42, 3
      %p283 = por %p281, %p282
      %p285 = scmp.ne.s32.totalorder %s270, %s284
      %p286 = scmp.eq.s32.totalorder %s42, 0
      %p287 = por %p285, %p286
      %s289 = sadd.s32 %s288, 1
      %p292 = scmp.eq.s32.totalorder %s36, 3
      %p293 = scmp.ne.s32.totalorder %s288, %s290
      %p294 = scmp.eq.s32.totalorder %s36, 0
      %p295 = por %p293, %p294
      %p296 = scmp.ne.s32.totalorder %s288, %s290
      %p297 = scmp.eq.s32.totalorder %s41, 3
      %p298 = por %p296, %p297
      %p299 = scmp.ne.s32.totalorder %s290, %s291
      %p300 = scmp.eq.s32.totalorder %s41, 0
      %p301 = por %p299, %p300
      %p302 = scmp.ne.s32.totalorder %s290, %s291
      %p303 = scmp.eq.s32.totalorder %s42, 3
      %p304 = por %p302, %p303
      %p306 = scmp.ne.s32.totalorder %s291, %s305
      %p307 = scmp.eq.s32.totalorder %s42, 0
      %p308 = por %p306, %p307
      %s310 = sadd.s32 %s309, 1
      %p313 = scmp.eq.s32.totalorder %s36, 3
      %p314 = scmp.ne.s32.totalorder %s309, %s311
      %p315 = scmp.eq.s32.totalorder %s36, 0
      %p316 = por %p314, %p315
      %p317 = scmp.ne.s32.totalorder %s309, %s311
      %p318 = scmp.eq.s32.totalorder %s41, 3
      %p319 = por %p317, %p318
      %p320 = scmp.ne.s32.totalorder %s311, %s312
      %p321 = scmp.eq.s32.totalorder %s41, 0
      %p322 = por %p320, %p321
      %p323 = scmp.ne.s32.totalorder %s311, %s312
      %p324 = scmp.eq.s32.totalorder %s42, 3
      %p325 = por %p323, %p324
      %p327 = scmp.ne.s32.totalorder %s312, %s326
      %p328 = scmp.eq.s32.totalorder %s42, 0
      %p329 = por %p327, %p328
      %s331 = sadd.s32 %s330, 1
      %p334 = scmp.eq.s32.totalorder %s36, 3
      %p335 = scmp.ne.s32.totalorder %s330, %s332
      %p336 = scmp.eq.s32.totalorder %s36, 0
      %p337 = por %p335, %p336
      %p338 = scmp.ne.s32.totalorder %s330, %s332
      %p339 = scmp.eq.s32.totalorder %s41, 3
      %p340 = por %p338, %p339
      %p341 = scmp.ne.s32.totalorder %s332, %s333
      %p342 = scmp.eq.s32.totalorder %s41, 0
      %p343 = por %p341, %p342
      %p344 = scmp.ne.s32.totalorder %s332, %s333
      %p345 = scmp.eq.s32.totalorder %s42, 3
      %p346 = por %p344, %p345
      %p348 = scmp.ne.s32.totalorder %s333, %s347
      %p349 = scmp.eq.s32.totalorder %s42, 0
      %p350 = por %p348, %p349
      %s352 = sadd.s32 %s351, 1
      %p355 = scmp.eq.s32.totalorder %s36, 3
      %p356 = scmp.ne.s32.totalorder %s351, %s353
      %p357 = scmp.eq.s32.totalorder %s36, 0
      %p358 = por %p356, %p357
      %p359 = scmp.ne.s32.totalorder %s351, %s353
      %p360 = scmp.eq.s32.totalorder %s41, 3
      %p361 = por %p359, %p360
      %p362 = scmp.ne.s32.totalorder %s353, %s354
      %p363 = scmp.eq.s32.totalorder %s41, 0
      %p364 = por %p362, %p363
      %p365 = scmp.ne.s32.totalorder %s353, %s354
      %p366 = scmp.eq.s32.totalorder %s42, 3
      %p367 = por %p365, %p366
      %p369 = scmp.ne.s32.totalorder %s354, %s368
      %p370 = scmp.eq.s32.totalorder %s42, 0
      %p371 = por %p369, %p370
      %s373 = sadd.s32 %s372, 1
      %p376 = scmp.eq.s32.totalorder %s36, 3
      %p377 = scmp.ne.s32.totalorder %s372, %s374
      %p378 = scmp.eq.s32.totalorder %s36, 0
      %p379 = por %p377, %p378
      %p380 = scmp.ne.s32.totalorder %s372, %s374
      %p381 = scmp.eq.s32.totalorder %s41, 3
      %p382 = por %p380, %p381
      %p383 = scmp.ne.s32.totalorder %s374, %s375
      %p384 = scmp.eq.s32.totalorder %s41, 0
      %p385 = por %p383, %p384
      %p386 = scmp.ne.s32.totalorder %s374, %s375
      %p387 = scmp.eq.s32.totalorder %s42, 3
      %p388 = por %p386, %p387
      %p390 = scmp.ne.s32.totalorder %s375, %s389
      %p391 = scmp.eq.s32.totalorder %s42, 0
      %p392 = por %p390, %p391
      %s394 = sadd.s32 %s393, 1
      %p397 = scmp.eq.s32.totalorder %s36, 3
      %p398 = scmp.ne.s32.totalorder %s393, %s395
      %p399 = scmp.eq.s32.totalorder %s36, 0
      %p400 = por %p398, %p399
      %p401 = scmp.ne.s32.totalorder %s393, %s395
      %p402 = scmp.eq.s32.totalorder %s41, 3
      %p403 = por %p401, %p402
      %p404 = scmp.ne.s32.totalorder %s395, %s396
      %p405 = scmp.eq.s32.totalorder %s41, 0
      %p406 = por %p404, %p405
      %p407 = scmp.ne.s32.totalorder %s395, %s396
      %p408 = scmp.eq.s32.totalorder %s42, 3
      %p409 = por %p407, %p408
      %p411 = scmp.ne.s32.totalorder %s396, %s410
      %p412 = scmp.eq.s32.totalorder %s42, 0
      %p413 = por %p411, %p412
      %s415 = sadd.s32 %s414, 1
      %p418 = scmp.eq.s32.totalorder %s36, 3
      %p419 = scmp.ne.s32.totalorder %s414, %s416
      %p420 = scmp.eq.s32.totalorder %s36, 0
      %p421 = por %p419, %p420
      %p422 = scmp.ne.s32.totalorder %s414, %s416
      %p423 = scmp.eq.s32.totalorder %s41, 3
      %p424 = por %p422, %p423
      %p425 = scmp.ne.s32.totalorder %s416, %s417
      %p426 = scmp.eq.s32.totalorder %s41, 0
      %p427 = por %p425, %p426
      %p428 = scmp.ne.s32.totalorder %s416, %s417
      %p429 = scmp.eq.s32.totalorder %s42, 3
      %p430 = por %p428, %p429
      %p432 = scmp.ne.s32.totalorder %s417, %s431
      %p433 = scmp.eq.s32.totalorder %s42, 0
      %p434 = por %p432, %p433
      %s436 = sadd.s32 %s435, 1
      %p439 = scmp.eq.s32.totalorder %s36, 3
      %p440 = scmp.ne.s32.totalorder %s435, %s437
      %p441 = scmp.eq.s32.totalorder %s36, 0
      %p442 = por %p440, %p441
      %p443 = scmp.ne.s32.totalorder %s435, %s437
      %p444 = scmp.eq.s32.totalorder %s41, 3
      %p445 = por %p443, %p444
      %p446 = scmp.ne.s32.totalorder %s437, %s438
      %p447 = scmp.eq.s32.totalorder %s41, 0
      %p448 = por %p446, %p447
      %p449 = scmp.ne.s32.totalorder %s437, %s438
      %p450 = scmp.eq.s32.totalorder %s42, 3
      %p451 = por %p449, %p450
      %p453 = scmp.ne.s32.totalorder %s438, %s452
      %p454 = scmp.eq.s32.totalorder %s42, 0
      %p455 = por %p453, %p454
      %s457 = sadd.s32 %s456, 1
      %p460 = scmp.eq.s32.totalorder %s36, 3
      %p461 = scmp.ne.s32.totalorder %s456, %s458
      %p462 = scmp.eq.s32.totalorder %s36, 0
      %p463 = por %p461, %p462
      %p464 = scmp.ne.s32.totalorder %s456, %s458
      %p465 = scmp.eq.s32.totalorder %s41, 3
      %p466 = por %p464, %p465
      %p467 = scmp.ne.s32.totalorder %s458, %s459
      %p468 = scmp.eq.s32.totalorder %s41, 0
      %p469 = por %p467, %p468
      %p470 = scmp.ne.s32.totalorder %s458, %s459
      %p471 = scmp.eq.s32.totalorder %s42, 3
      %p472 = por %p470, %p471
      %p474 = scmp.ne.s32.totalorder %s459, %s473
      %p475 = scmp.eq.s32.totalorder %s42, 0
      %p476 = por %p474, %p475
      %s478 = sadd.s32 %s477, 1
      %p481 = scmp.eq.s32.totalorder %s36, 3
      %p482 = scmp.ne.s32.totalorder %s477, %s479
      %p483 = scmp.eq.s32.totalorder %s36, 0
      %p484 = por %p482, %p483
      %p485 = scmp.ne.s32.totalorder %s477, %s479
      %p486 = scmp.eq.s32.totalorder %s41, 3
      %p487 = por %p485, %p486
      %p488 = scmp.ne.s32.totalorder %s479, %s480
      %p489 = scmp.eq.s32.totalorder %s41, 0
      %p490 = por %p488, %p489
      %p491 = scmp.ne.s32.totalorder %s479, %s480
      %p492 = scmp.eq.s32.totalorder %s42, 3
      %p493 = por %p491, %p492
      %p495 = scmp.ne.s32.totalorder %s480, %s494
      %p496 = scmp.eq.s32.totalorder %s42, 0
      %p497 = por %p495, %p496
      %s499 = sadd.s32 %s498, 1
      %p502 = scmp.eq.s32.totalorder %s36, 3
      %p503 = scmp.ne.s32.totalorder %s498, %s500
      %p504 = scmp.eq.s32.totalorder %s36, 0
      %p505 = por %p503, %p504
      %p506 = scmp.ne.s32.totalorder %s498, %s500
      %p507 = scmp.eq.s32.totalorder %s41, 3
      %p508 = por %p506, %p507
      %p509 = scmp.ne.s32.totalorder %s500, %s501
      %p510 = scmp.eq.s32.totalorder %s41, 0
      %p511 = por %p509, %p510
      %p512 = scmp.ne.s32.totalorder %s500, %s501
      %p513 = scmp.eq.s32.totalorder %s42, 3
      %p514 = por %p512, %p513
      %p516 = scmp.ne.s32.totalorder %s501, %s515
      %p517 = scmp.eq.s32.totalorder %s42, 0
      %p518 = por %p516, %p517
      %s520 = sadd.s32 %s519, 1
      %p523 = scmp.eq.s32.totalorder %s36, 3
      %p524 = scmp.ne.s32.totalorder %s519, %s521
      %p525 = scmp.eq.s32.totalorder %s36, 0
      %p526 = por %p524, %p525
      %p527 = scmp.ne.s32.totalorder %s519, %s521
      %p528 = scmp.eq.s32.totalorder %s41, 3
      %p529 = por %p527, %p528
      %p530 = scmp.ne.s32.totalorder %s521, %s522
      %p531 = scmp.eq.s32.totalorder %s41, 0
      %p532 = por %p530, %p531
      %p533 = scmp.ne.s32.totalorder %s521, %s522
      %p534 = scmp.eq.s32.totalorder %s42, 3
      %p535 = por %p533, %p534
      %p537 = scmp.ne.s32.totalorder %s522, %s536
      %p538 = scmp.eq.s32.totalorder %s42, 0
      %p539 = por %p537, %p538
      %s541 = sadd.s32 %s540, 1
      %p544 = scmp.eq.s32.totalorder %s36, 3
      %p545 = scmp.ne.s32.totalorder %s540, %s542
      %p546 = scmp.eq.s32.totalorder %s36, 0
      %p547 = por %p545, %p546
      %p548 = scmp.ne.s32.totalorder %s540, %s542
      %p549 = scmp.eq.s32.totalorder %s41, 3
      %p550 = por %p548, %p549
      %p551 = scmp.ne.s32.totalorder %s542, %s543
      %p552 = scmp.eq.s32.totalorder %s41, 0
      %p553 = por %p551, %p552
      %p554 = scmp.ne.s32.totalorder %s542, %s543
      %p555 = scmp.eq.s32.totalorder %s42, 3
      %p556 = por %p554, %p555
      %p558 = scmp.ne.s32.totalorder %s543, %s557
      %p559 = scmp.eq.s32.totalorder %s42, 0
      %p560 = por %p558, %p559
      %s562 = sadd.s32 %s561, 1
      %p565 = scmp.eq.s32.totalorder %s36, 3
      %p566 = scmp.ne.s32.totalorder %s561, %s563
      %p567 = scmp.eq.s32.totalorder %s36, 0
      %p568 = por %p566, %p567
      %p569 = scmp.ne.s32.totalorder %s561, %s563
      %p570 = scmp.eq.s32.totalorder %s41, 3
      %p571 = por %p569, %p570
      %p572 = scmp.ne.s32.totalorder %s563, %s564
      %p573 = scmp.eq.s32.totalorder %s41, 0
      %p574 = por %p572, %p573
      %p575 = scmp.ne.s32.totalorder %s563, %s564
      %p576 = scmp.eq.s32.totalorder %s42, 3
      %p577 = por %p575, %p576
      %p579 = scmp.ne.s32.totalorder %s564, %s578
      %p580 = scmp.eq.s32.totalorder %s42, 0
      %p581 = por %p579, %p580
      %s582 = ssub.s32 %s43, %s55
      %s583 = ssub.s32 %s44, %s51
      %s584 = sor.u32 %s582, %s583
      %p585 = scmp.eq.s32.totalorder %s584, 0
      %s587 = sadd.s32 %s586, 1
      %s588 = scalar_select %p585, %s586, %s587
      %p591 = pneg %p585
      %p592 = scmp.eq.s32.totalorder %s36, 3
      %p593 = por %p591, %p592
      %p594 = scmp.ne.s32.totalorder %s586, %s589
      %p595 = scmp.eq.s32.totalorder %s36, 0
      %p596 = por %p594, %p595
      %p597 = scmp.ne.s32.totalorder %s586, %s589
      %p598 = scmp.eq.s32.totalorder %s41, 3
      %p599 = por %p597, %p598
      %p600 = scmp.ne.s32.totalorder %s589, %s590
      %p601 = scmp.eq.s32.totalorder %s41, 0
      %p602 = por %p600, %p601
      %p603 = scmp.ne.s32.totalorder %s589, %s590
      %p604 = scmp.eq.s32.totalorder %s42, 3
      %p605 = por %p603, %p604
      %p607 = scmp.ne.s32.totalorder %s590, %s606
      %p608 = scmp.eq.s32.totalorder %s42, 0
      %p609 = por %p607, %p608
      %p610 = scmp.le.s32.totalorder 1, %s36
      %p611 = scmp.lt.s32.totalorder %s36, 5
      %p612 = pnand %p610, %p611
      %p613 = pneg %p612
      // Predicated region
      $region9: #{tpu_custom_call.1} parent=5 // pred_check
        _
      $region10: #{tpu_custom_call.1} parent=5 // pred_check_branch
        %615 = sbr.rel (%p612) target = $region12
      $region11: #{tpu_custom_call.1} parent=5 // pred_region
        %s616 = ssub.s32 %s36, 1
        // Predicated region
        $region13: #{tpu_custom_call.1} parent=11 // pred_check
          %p617 = pneg %p149
        $region14: #{tpu_custom_call.1} parent=11 // pred_check_branch
          %619 = sbr.rel (%p617) target = $region16
        $region15: #{tpu_custom_call.1} parent=11 // pred_region
          _
        $region16: #{tpu_custom_call.1} parent=11 // pred_fallthru
          _
        // Predicated region
        $region17: #{tpu_custom_call.1} parent=11 // pred_check
          %p620 = pneg %p196
        $region18: #{tpu_custom_call.1} parent=11 // pred_check_branch
          %622 = sbr.rel (%p620) target = $region20
        $region19: #{tpu_custom_call.1} parent=11 // pred_region
          _
        $region20: #{tpu_custom_call.1} parent=11 // pred_fallthru
          _
        // Predicated region
        $region21: #{tpu_custom_call.1} parent=11 // pred_check
          %p623 = pneg %p217
        $region22: #{tpu_custom_call.1} parent=11 // pred_check_branch
          %625 = sbr.rel (%p623) target = $region24
        $region23: #{tpu_custom_call.1} parent=11 // pred_region
          %s627 = ssub.s32 16, 16
          %628 = vsyncadd [#allocation7], %s627
          %s630 = sshll.u32 [#allocation6], 4
          %s631 = int_to_ptr.vmem [resolvable:$true] %s630
          %633 = dma.hbm_to_vmem [thread:$0]  %s6, 16, %s631, [#allocation7]
        $region24: #{tpu_custom_call.1} parent=11 // pred_fallthru
          _
        // Predicated region
        $region25: #{tpu_custom_call.1} parent=11 // pred_check
          %p634 = pneg %p238
        $region26: #{tpu_custom_call.1} parent=11 // pred_check_branch
          %636 = sbr.rel (%p634) target = $region28
        $region27: #{tpu_custom_call.1} parent=11 // pred_region
          %s638 = ssub.s32 16, 16
          %639 = vsyncadd [#allocation10], %s638
          %s641 = sshll.u32 [#allocation9], 4
          %s642 = int_to_ptr.vmem [resolvable:$true] %s641
          %644 = dma.hbm_to_vmem [thread:$0]  %s7, 16, %s642, [#allocation10]
        $region28: #{tpu_custom_call.1} parent=11 // pred_fallthru
          _
        // Predicated region
        $region29: #{tpu_custom_call.1} parent=11 // pred_check
          %p645 = pneg %p259
        $region30: #{tpu_custom_call.1} parent=11 // pred_check_branch
          %647 = sbr.rel (%p645) target = $region32
        $region31: #{tpu_custom_call.1} parent=11 // pred_region
          _
        $region32: #{tpu_custom_call.1} parent=11 // pred_fallthru
          _
        // Predicated region
        $region33: #{tpu_custom_call.1} parent=11 // pred_check
          %p648 = pneg %p280
        $region34: #{tpu_custom_call.1} parent=11 // pred_check_branch
          %650 = sbr.rel (%p648) target = $region36
        $region35: #{tpu_custom_call.1} parent=11 // pred_region
          %s652 = ssub.s32 16, 16
          %653 = vsyncadd [#allocation10], %s652
          %s655 = sshll.u32 [#allocation11], 4
          %s656 = int_to_ptr.vmem [resolvable:$true] %s655
          %658 = dma.hbm_to_vmem [thread:$0]  %s9, 16, %s656, [#allocation10]
        $region36: #{tpu_custom_call.1} parent=11 // pred_fallthru
          _
        // Predicated region
        $region37: #{tpu_custom_call.1} parent=11 // pred_check
          %p659 = pneg %p301
        $region38: #{tpu_custom_call.1} parent=11 // pred_check_branch
          %661 = sbr.rel (%p659) target = $region40
        $region39: #{tpu_custom_call.1} parent=11 // pred_region
          _
        $region40: #{tpu_custom_call.1} parent=11 // pred_fallthru
          _
        // Predicated region
        $region41: #{tpu_custom_call.1} parent=11 // pred_check
          %p662 = pneg %p322
        $region42: #{tpu_custom_call.1} parent=11 // pred_check_branch
          %664 = sbr.rel (%p662) target = $region44
        $region43: #{tpu_custom_call.1} parent=11 // pred_region
          %s666 = ssub.s32 16, 16
          %667 = vsyncadd [#allocation13], %s666
          %s669 = sshll.u32 [#allocation12], 4
          %s670 = int_to_ptr.vmem [resolvable:$true] %s669
          %672 = dma.hbm_to_vmem [thread:$0]  %s11, 16, %s670, [#allocation13]
        $region44: #{tpu_custom_call.1} parent=11 // pred_fallthru
          _
        // Predicated region
        $region45: #{tpu_custom_call.1} parent=11 // pred_check
          %p673 = pneg %p343
        $region46: #{tpu_custom_call.1} parent=11 // pred_check_branch
          %675 = sbr.rel (%p673) target = $region48
        $region47: #{tpu_custom_call.1} parent=11 // pred_region
          _
        $region48: #{tpu_custom_call.1} parent=11 // pred_fallthru
          _
        // Predicated region
        $region49: #{tpu_custom_call.1} parent=11 // pred_check
          %p676 = pneg %p364
        $region50: #{tpu_custom_call.1} parent=11 // pred_check_branch
          %678 = sbr.rel (%p676) target = $region52
        $region51: #{tpu_custom_call.1} parent=11 // pred_region
          %s680 = ssub.s32 16, 16
          %681 = vsyncadd [#allocation13], %s680
          %s683 = sshll.u32 [#allocation14], 4
          %s684 = int_to_ptr.vmem [resolvable:$true] %s683
          %686 = dma.hbm_to_vmem [thread:$0]  %s13, 16, %s684, [#allocation13]
        $region52: #{tpu_custom_call.1} parent=11 // pred_fallthru
          _
        // Predicated region
        $region53: #{tpu_custom_call.1} parent=11 // pred_check
          %p687 = pneg %p385
        $region54: #{tpu_custom_call.1} parent=11 // pred_check_branch
          %689 = sbr.rel (%p687) target = $region56
        $region55: #{tpu_custom_call.1} parent=11 // pred_region
          _
        $region56: #{tpu_custom_call.1} parent=11 // pred_fallthru
          _
        // Predicated region
        $region57: #{tpu_custom_call.1} parent=11 // pred_check
          %p690 = pneg %p406
        $region58: #{tpu_custom_call.1} parent=11 // pred_check_branch
          %692 = sbr.rel (%p690) target = $region60
        $region59: #{tpu_custom_call.1} parent=11 // pred_region
          _
        $region60: #{tpu_custom_call.1} parent=11 // pred_fallthru
          _
        // Predicated region
        $region61: #{tpu_custom_call.1} parent=11 // pred_check
          %p693 = pneg %p427
        $region62: #{tpu_custom_call.1} parent=11 // pred_check_branch
          %695 = sbr.rel (%p693) target = $region64
        $region63: #{tpu_custom_call.1} parent=11 // pred_region
          _
        $region64: #{tpu_custom_call.1} parent=11 // pred_fallthru
          _
        // Predicated region
        $region65: #{tpu_custom_call.1} parent=11 // pred_check
          %p696 = pneg %p448
        $region66: #{tpu_custom_call.1} parent=11 // pred_check_branch
          %698 = sbr.rel (%p696) target = $region68
        $region67: #{tpu_custom_call.1} parent=11 // pred_region
          _
        $region68: #{tpu_custom_call.1} parent=11 // pred_fallthru
          _
        // Predicated region
        $region69: #{tpu_custom_call.1} parent=11 // pred_check
          %p699 = pneg %p469
        $region70: #{tpu_custom_call.1} parent=11 // pred_check_branch
          %701 = sbr.rel (%p699) target = $region72
        $region71: #{tpu_custom_call.1} parent=11 // pred_region
          _
        $region72: #{tpu_custom_call.1} parent=11 // pred_fallthru
          _
        // Predicated region
        $region73: #{tpu_custom_call.1} parent=11 // pred_check
          %p702 = pneg %p490
        $region74: #{tpu_custom_call.1} parent=11 // pred_check_branch
          %704 = sbr.rel (%p702) target = $region76
        $region75: #{tpu_custom_call.1} parent=11 // pred_region
          _
        $region76: #{tpu_custom_call.1} parent=11 // pred_fallthru
          _
        // Predicated region
        $region77: #{tpu_custom_call.1} parent=11 // pred_check
          %p705 = pneg %p511
        $region78: #{tpu_custom_call.1} parent=11 // pred_check_branch
          %707 = sbr.rel (%p705) target = $region80
        $region79: #{tpu_custom_call.1} parent=11 // pred_region
          _
        $region80: #{tpu_custom_call.1} parent=11 // pred_fallthru
          _
        // Predicated region
        $region81: #{tpu_custom_call.1} parent=11 // pred_check
          %p708 = pneg %p532
        $region82: #{tpu_custom_call.1} parent=11 // pred_check_branch
          %710 = sbr.rel (%p708) target = $region84
        $region83: #{tpu_custom_call.1} parent=11 // pred_region
          _
        $region84: #{tpu_custom_call.1} parent=11 // pred_fallthru
          _
        // Predicated region
        $region85: #{tpu_custom_call.1} parent=11 // pred_check
          %p711 = pneg %p553
        $region86: #{tpu_custom_call.1} parent=11 // pred_check_branch
          %713 = sbr.rel (%p711) target = $region88
        $region87: #{tpu_custom_call.1} parent=11 // pred_region
          _
        $region88: #{tpu_custom_call.1} parent=11 // pred_fallthru
          _
        // Predicated region
        $region89: #{tpu_custom_call.1} parent=11 // pred_check
          %p714 = pneg %p574
        $region90: #{tpu_custom_call.1} parent=11 // pred_check_branch
          %716 = sbr.rel (%p714) target = $region92
        $region91: #{tpu_custom_call.1} parent=11 // pred_region
          _
        $region92: #{tpu_custom_call.1} parent=11 // pred_fallthru
          _
      $region12: #{tpu_custom_call.1} parent=5 // pred_fallthru
        _
      %p717 = scmp.lt.s32.totalorder %s36, 4
      // Predicated region
      $region93: #{tpu_custom_call.1} parent=5 // pred_check
        %p718 = pneg %p717
      $region94: #{tpu_custom_call.1} parent=5 // pred_check_branch
        %720 = sbr.rel (%p718) target = $region96
      $region95: #{tpu_custom_call.1} parent=5 // pred_region
        // Predicated region
        $region97: #{tpu_custom_call.1} parent=95 // pred_check
          %p721 = pneg %p68
        $region98: #{tpu_custom_call.1} parent=95 // pred_check_branch
          %723 = sbr.rel (%p721) target = $region100
        $region99: #{tpu_custom_call.1} parent=95 // pred_region
          %p724 = scmp.lt.s32.totalorder %s43, 1
          %s725 = scalar_select %p724, %s43, 1
          %s726 = smul.addr %s725, 2
          %s727 = smul.addr %s726, 8
          %s728 = scalar_lea.vmem %s0, %s727
        $region100: #{tpu_custom_call.1} parent=95 // pred_fallthru
          _
        // Predicated region
        $region101: #{tpu_custom_call.1} parent=95 // pred_check
          %p729 = pneg %p96
        $region102: #{tpu_custom_call.1} parent=95 // pred_check_branch
          %731 = sbr.rel (%p729) target = $region104
        $region103: #{tpu_custom_call.1} parent=95 // pred_region
          %p732 = scmp.lt.s32.totalorder %s43, 1
          %s733 = scalar_select %p732, %s43, 1
          %p734 = scmp.lt.s32.totalorder %s44, 1
          %s735 = scalar_select %p734, %s44, 1
          %s736 = smul.addr %s733, 2
          %s737 = sadd.s32 %s735, %s736
          %s738 = smul.addr %s737, 8
          %s739 = scalar_lea.vmem %s1, %s738
        $region104: #{tpu_custom_call.1} parent=95 // pred_fallthru
          _
        // Predicated region
        $region105: #{tpu_custom_call.1} parent=95 // pred_check
          %p740 = pneg %p122
        $region106: #{tpu_custom_call.1} parent=95 // pred_check_branch
          %742 = sbr.rel (%p740) target = $region108
        $region107: #{tpu_custom_call.1} parent=95 // pred_region
          %p743 = scmp.lt.s32.totalorder %s44, 1
          %s744 = scalar_select %p743, %s44, 1
          %s745 = smul.addr %s744, 8
          %s746 = scalar_lea.vmem %s2, %s745
        $region108: #{tpu_custom_call.1} parent=95 // pred_fallthru
          _
        // Predicated region
        $region109: #{tpu_custom_call.1} parent=95 // pred_check
          %p747 = pneg %p169
        $region110: #{tpu_custom_call.1} parent=95 // pred_check_branch
          %749 = sbr.rel (%p747) target = $region112
        $region111: #{tpu_custom_call.1} parent=95 // pred_region
          %p750 = scmp.lt.s32.totalorder %s44, 1
          %s751 = scalar_select %p750, %s44, 1
          %s752 = smul.addr %s751, 8
          %s753 = scalar_lea.vmem %s4, %s752
        $region112: #{tpu_custom_call.1} parent=95 // pred_fallthru
          _
      $region96: #{tpu_custom_call.1} parent=5 // pred_fallthru
        _
      %p754 = scmp.le.s32.totalorder 1, %s36
      %p755 = scmp.lt.s32.totalorder %s36, 5
      %p756 = pnand %p754, %p755
      %p757 = pneg %p756
      // Predicated region
      $region113: #{tpu_custom_call.1} parent=5 // pred_check
        _
      $region114: #{tpu_custom_call.1} parent=5 // pred_check_branch
        %759 = sbr.rel (%p756) target = $region116
      $region115: #{tpu_custom_call.1} parent=5 // pred_region
        %s760 = ssub.s32 %s36, 1
        // Predicated region
        $region117: #{tpu_custom_call.1} parent=115 // pred_check
          %p761 = pneg %p217
        $region118: #{tpu_custom_call.1} parent=115 // pred_check_branch
          %763 = sbr.rel (%p761) target = $region120
        $region119: #{tpu_custom_call.1} parent=115 // pred_region
          %764 = dma.done [#allocation7], 16
        $region120: #{tpu_custom_call.1} parent=115 // pred_fallthru
          _
        // Predicated region
        $region121: #{tpu_custom_call.1} parent=115 // pred_check
          %p765 = pneg %p238
        $region122: #{tpu_custom_call.1} parent=115 // pred_check_branch
          %767 = sbr.rel (%p765) target = $region124
        $region123: #{tpu_custom_call.1} parent=115 // pred_region
          %768 = dma.done [#allocation10], 16
        $region124: #{tpu_custom_call.1} parent=115 // pred_fallthru
          _
        // Predicated region
        $region125: #{tpu_custom_call.1} parent=115 // pred_check
          %p769 = pneg %p280
        $region126: #{tpu_custom_call.1} parent=115 // pred_check_branch
          %771 = sbr.rel (%p769) target = $region128
        $region127: #{tpu_custom_call.1} parent=115 // pred_region
          %772 = dma.done [#allocation10], 16
        $region128: #{tpu_custom_call.1} parent=115 // pred_fallthru
          _
        // Predicated region
        $region129: #{tpu_custom_call.1} parent=115 // pred_check
          %p773 = pneg %p322
        $region130: #{tpu_custom_call.1} parent=115 // pred_check_branch
          %775 = sbr.rel (%p773) target = $region132
        $region131: #{tpu_custom_call.1} parent=115 // pred_region
          %776 = dma.done [#allocation13], 16
        $region132: #{tpu_custom_call.1} parent=115 // pred_fallthru
          _
        // Predicated region
        $region133: #{tpu_custom_call.1} parent=115 // pred_check
          %p777 = pneg %p364
        $region134: #{tpu_custom_call.1} parent=115 // pred_check_branch
          %779 = sbr.rel (%p777) target = $region136
        $region135: #{tpu_custom_call.1} parent=115 // pred_region
          %780 = dma.done [#allocation13], 16
        $region136: #{tpu_custom_call.1} parent=115 // pred_fallthru
          _
        %p781 = scmp.lt.s32.totalorder %s45, 1
        %s782 = scalar_select %p781, %s45, 1
        %s783 = smul.addr %s782, 2
        %s784 = smul.addr %s783, 8
        %s785 = scalar_lea.vmem %s0, %s784
        %p786 = pneg %p74
        %p787 = pneg %p71
        %p788 = scmp.lt.s32.totalorder %s45, 1
        %s789 = scalar_select %p788, %s45, 1
        %p790 = scmp.lt.s32.totalorder %s46, 1
        %s791 = scalar_select %p790, %s46, 1
        %s792 = smul.addr %s789, 2
        %s793 = sadd.s32 %s791, %s792
        %s794 = smul.addr %s793, 8
        %s795 = scalar_lea.vmem %s1, %s794
        %p796 = pneg %p102
        %p797 = pneg %p99
        %p798 = scmp.lt.s32.totalorder %s46, 1
        %s799 = scalar_select %p798, %s46, 1
        %s800 = smul.addr %s799, 8
        %s801 = scalar_lea.vmem %s2, %s800
        %p802 = pneg %p128
        %p803 = pneg %p125
        %p804 = pneg %p149
        %p805 = pneg %p146
        %p806 = scmp.lt.s32.totalorder %s46, 1
        %s807 = scalar_select %p806, %s46, 1
        %s808 = smul.addr %s807, 8
        %s809 = scalar_lea.vmem %s4, %s808
        %p810 = pneg %p175
        %p811 = pneg %p172
        %p812 = pneg %p196
        %p813 = pneg %p193
        %p814 = pneg %p217
        %p815 = pneg %p214
        %p816 = pneg %p238
        %p817 = pneg %p235
        %p818 = pneg %p259
        %p819 = pneg %p256
        %p820 = pneg %p280
        %p821 = pneg %p277
        %p822 = pneg %p301
        %p823 = pneg %p298
        %p824 = pneg %p322
        %p825 = pneg %p319
        %p826 = pneg %p343
        %p827 = pneg %p340
        %p828 = pneg %p364
        %p829 = pneg %p361
        %p830 = pneg %p385
        %p831 = pneg %p382
        %p832 = pneg %p406
        %p833 = pneg %p403
        %p834 = pneg %p427
        %p835 = pneg %p424
        %p836 = pneg %p448
        %p837 = pneg %p445
        %p838 = pneg %p469
        %p839 = pneg %p466
        %p840 = pneg %p490
        %p841 = pneg %p487
        %p842 = pneg %p511
        %p843 = pneg %p508
        %p844 = pneg %p532
        %p845 = pneg %p529
        %p846 = pneg %p553
        %p847 = pneg %p550
        %p848 = pneg %p574
        %p849 = pneg %p571
        %p850 = pneg %p602
        %p851 = pneg %p599
        %s852 = sand.u32 %s589, 1
        %s853 = scalar_lea.sflag [#allocation8], %s852
        %s854 = sand.u32 %s589, 1
        %s855 = smul.addr %s854, 8
        %s856 = scalar_lea.vmem [#allocation15], %s855
        %p857 = scmp.lt.s32.totalorder %s45, 1
        %s858 = scalar_select %p857, %s45, 1
        %s859 = smul.addr %s858, 2
        %s860 = smul.addr %s859, 8
        %s861 = scalar_lea.vmem %s0, %s860
        %p862 = scmp.lt.s32.totalorder %s45, 1
        %s863 = scalar_select %p862, %s45, 1
        %p864 = scmp.lt.s32.totalorder %s46, 1
        %s865 = scalar_select %p864, %s46, 1
        %s866 = smul.addr %s863, 2
        %s867 = sadd.s32 %s865, %s866
        %s868 = smul.addr %s867, 8
        %s869 = scalar_lea.vmem %s1, %s868
        %p870 = scmp.lt.s32.totalorder %s46, 1
        %s871 = scalar_select %p870, %s46, 1
        %s872 = smul.addr %s871, 8
        %s873 = scalar_lea.vmem %s2, %s872
        %p874 = scmp.lt.s32.totalorder %s46, 1
        %s875 = scalar_select %p874, %s46, 1
        %s876 = smul.addr %s875, 8
        %s877 = scalar_lea.vmem %s4, %s876
        %v879 = vld [vmem:[%s869] sm:$0xff]
        %p880 = scmp.eq.s32.totalorder %s46, 0
        // Predicated region
        $region137: #{tpu_custom_call.1} parent=115 // pred_check
          %p881 = pneg %p880
        $region138: #{tpu_custom_call.1} parent=115 // pred_check_branch
          %883 = sbr.rel (%p881) target = $region140
        $region139: #{tpu_custom_call.1} parent=115 // pred_region
          %v884 = vld [vmem:[%s861] sm:$0xff]
          %v885 = vld [vmem:[%s861 + $0x8] sm:$0xff]
          %v886 = vpack.c.bf16 %v885, %v884
          %v887 = vld [vmem:[%s10] sm:$0xf]
          %v888 = vld [vmem:[%s10 + $0x4] sm:$0xf]
          %v889 = vld [vmem:[%s10 + $0x8] sm:$0xf]
          %v890 = vld [vmem:[%s10 + $0xc] sm:$0xf]
          %v891 = vld [vmem:[#allocation12] sm:$0x1]
          %v893 = vlaneseq
          %v894 = vshrl.u32 %v893, 7
          %v895 = vsub.s32 0, %v894
          %v896 = vrot.slane %v891, %v895
          %v902 = vunpack.c.l.b16 %v887
          %v903 = vunpack.c.l.b16 %v888
          %v904 = vunpack.c.l.b16 %v889
          %v905 = vunpack.c.l.b16 %v890
          %v906 = vpack.c.b16 %v903, %v902
          %v907 = vpack.c.b16 %v905, %v904
          %vm910 = vcmask 261120
          %v912 = vsel %vm910, %v886, 0
          %914 = vmatprep.subr.bf16.mxu0 0
          %915 = vmatpush1.bf16.msra.mxu0 %v906
          %916 = vmatprep.subr.bf16.mxu0 0
          %917 = vmatpush1.bf16.msra.mxu0 %v907
          %918 = vmatprep.subr.bf16.mxu0 0
          %919 = vmatpush1.bf16.msra.mxu0 0
          %920 = vmatprep.subr.bf16.mxu0 0
          %921 = vmatpush1.bf16.msra.mxu0 0
          %922 = vmatprep.subr.bf16.mxu0 0
          %923 = vmatpush1.bf16.msra.mxu0 0
          %924 = vmatprep.subr.bf16.mxu0 0
          %925 = vmatpush1.bf16.msra.mxu0 0
          %926 = vmatprep.subr.bf16.mxu0 0
          %927 = vmatpush1.bf16.msra.mxu0 0
          %928 = vmatprep.subr.bf16.mxu0 0
          %929 = vmatpush1.bf16.msra.mxu0 0
          %930 = vmatprep.subr.bf16.mxu0 0
          %931 = vmatpush1.bf16.msra.mxu0 0
          %932 = vmatprep.subr.bf16.mxu0 0
          %933 = vmatpush1.bf16.msra.mxu0 0
          %934 = vmatprep.subr.bf16.mxu0 0
          %935 = vmatpush1.bf16.msra.mxu0 0
          %936 = vmatprep.subr.bf16.mxu0 0
          %937 = vmatpush1.bf16.msra.mxu0 0
          %938 = vmatprep.subr.bf16.mxu0 0
          %939 = vmatpush1.bf16.msra.mxu0 0
          %940 = vmatprep.subr.bf16.mxu0 0
          %941 = vmatpush1.bf16.msra.mxu0 0
          %942 = vmatprep.subr.bf16.mxu0 0
          %943 = vmatpush1.bf16.msra.mxu0 0
          %944 = vmatprep.subr.bf16.mxu0 0
          %945 = vmatpush1.bf16.msra.mxu0 0
          %946 = vmatprep.mubr.bf16.mxu0 0
          %947 = vmatmul.mubr.bf16.gmra.mrb[0].mxu0 %v912
          %v948 = vpop.f32.mrb[0].mxu0
          %v949 = vadd.f32 %v896, %v948
          %v950 = vpop.f32.mrb[0].mxu0
          %v951 = vpop.f32.mrb[0].mxu0
          %v952 = vadd.f32 %v896, %v951
          %v953 = vpop.f32.mrb[0].mxu0
          %954 = vdwg.mxu0
          %v955 = vpack.c.bf16 %v952, %v949
          %956 = vst.msk [vmem:[#allocation2] sm:$0xff] %vm910, %v955
          %v957 = vld [vmem:[%s12] sm:$0xf]
          %v958 = vld [vmem:[%s12 + $0x4] sm:$0xf]
          %v959 = vld [vmem:[%s12 + $0x8] sm:$0xf]
          %v960 = vld [vmem:[%s12 + $0xc] sm:$0xf]
          %v961 = vld [vmem:[#allocation14] sm:$0x1]
          %v963 = vlaneseq
          %v964 = vshrl.u32 %v963, 7
          %v965 = vsub.s32 0, %v964
          %v966 = vrot.slane %v961, %v965
          %v972 = vunpack.c.l.b16 %v957
          %v973 = vunpack.c.l.b16 %v958
          %v974 = vunpack.c.l.b16 %v959
          %v975 = vunpack.c.l.b16 %v960
          %v976 = vpack.c.b16 %v973, %v972
          %v977 = vpack.c.b16 %v975, %v974
          %980 = vmatprep.subr.bf16.mxu0 0
          %981 = vmatpush1.bf16.msra.mxu0 %v976
          %982 = vmatprep.subr.bf16.mxu0 0
          %983 = vmatpush1.bf16.msra.mxu0 %v977
          %984 = vmatprep.subr.bf16.mxu0 0
          %985 = vmatpush1.bf16.msra.mxu0 0
          %986 = vmatprep.subr.bf16.mxu0 0
          %987 = vmatpush1.bf16.msra.mxu0 0
          %988 = vmatprep.subr.bf16.mxu0 0
          %989 = vmatpush1.bf16.msra.mxu0 0
          %990 = vmatprep.subr.bf16.mxu0 0
          %991 = vmatpush1.bf16.msra.mxu0 0
          %992 = vmatprep.subr.bf16.mxu0 0
          %993 = vmatpush1.bf16.msra.mxu0 0
          %994 = vmatprep.subr.bf16.mxu0 0
          %995 = vmatpush1.bf16.msra.mxu0 0
          %996 = vmatprep.subr.bf16.mxu0 0
          %997 = vmatpush1.bf16.msra.mxu0 0
          %998 = vmatprep.subr.bf16.mxu0 0
          %999 = vmatpush1.bf16.msra.mxu0 0
          %1000 = vmatprep.subr.bf16.mxu0 0
          %1001 = vmatpush1.bf16.msra.mxu0 0
          %1002 = vmatprep.subr.bf16.mxu0 0
          %1003 = vmatpush1.bf16.msra.mxu0 0
          %1004 = vmatprep.subr.bf16.mxu0 0
          %1005 = vmatpush1.bf16.msra.mxu0 0
          %1006 = vmatprep.subr.bf16.mxu0 0
          %1007 = vmatpush1.bf16.msra.mxu0 0
          %1008 = vmatprep.subr.bf16.mxu0 0
          %1009 = vmatpush1.bf16.msra.mxu0 0
          %1010 = vmatprep.subr.bf16.mxu0 0
          %1011 = vmatpush1.bf16.msra.mxu0 0
          %1012 = vmatprep.mubr.bf16.mxu0 0
          %1013 = vmatmul.mubr.bf16.gmra.mrb[0].mxu0 %v912
          %v1014 = vpop.f32.mrb[0].mxu0
          %v1015 = vadd.f32 %v966, %v1014
          %v1016 = vpop.f32.mrb[0].mxu0
          %v1017 = vpop.f32.mrb[0].mxu0
          %v1018 = vadd.f32 %v966, %v1017
          %v1019 = vpop.f32.mrb[0].mxu0
          %1020 = vdwg.mxu0
          %v1021 = vpack.c.bf16 %v1018, %v1015
          %1022 = vst.msk [vmem:[#allocation3] sm:$0xff] %vm910, %v1021
          %v1023 = vld [vmem:[%s3] sm:$0xff]
          %v1024 = vld [vmem:[%s3 + $0x8] sm:$0xff]
          %1025 = vxpose.xlu0.b32.start [1/16] %v1023, 128
          %1026 = vxpose.xlu0.b32.cont [2/16] %v1024, 128
          %1027 = vxpose.xlu0.b32.cont [3/16] 0.0, 128
          %1028 = vxpose.xlu0.b32.cont [4/16] 0.0, 128
          %1029 = vxpose.xlu0.b32.cont [5/16] 0.0, 128
          %1030 = vxpose.xlu0.b32.cont [6/16] 0.0, 128
          %1031 = vxpose.xlu0.b32.cont [7/16] 0.0, 128
          %1032 = vxpose.xlu0.b32.cont [8/16] 0.0, 128
          %1033 = vxpose.xlu0.b32.cont [9/16] 0.0, 128
          %1034 = vxpose.xlu0.b32.cont [10/16] 0.0, 128
          %1035 = vxpose.xlu0.b32.cont [11/16] 0.0, 128
          %1036 = vxpose.xlu0.b32.cont [12/16] 0.0, 128
          %1037 = vxpose.xlu0.b32.cont [13/16] 0.0, 128
          %1038 = vxpose.xlu0.b32.cont [14/16] 0.0, 128
          %1039 = vxpose.xlu0.b32.cont [15/16] 0.0, 128
          %1040 = vxpose.xlu0.b32.end [16/16] 0.0, 128
          %v1041 = vpop.trf.xlu0
          %v1042 = vpop.trf.xlu0
          %v1043 = vpop.trf.xlu0
          %v1044 = vpop.trf.xlu0
          %v1045 = vpop.trf.xlu0
          %v1046 = vpop.trf.xlu0
          %v1047 = vpop.trf.xlu0
          %v1048 = vpop.trf.xlu0
          %v1049 = vpop.trf.xlu0
          %v1050 = vpop.trf.xlu0
          %v1051 = vpop.trf.xlu0
          %v1052 = vpop.trf.xlu0
          %v1053 = vpop.trf.xlu0
          %v1054 = vpop.trf.xlu0
          %v1055 = vpop.trf.xlu0
          %v1056 = vpop.trf.xlu0
          %vm1057 = vcmask 130048
          %v1059 = vsel %vm1057, %v1041, 0
          %1061 = vmatprep.subr.mxu0 0.0
          %1062 = vmatpush1.msra.mxu0 %v884
          %1063 = vmatprep.subr.mxu0 0.0
          %1064 = vmatpush1.msra.mxu0 %v885
          %1065 = vmatprep.subr.mxu0 0.0
          %1066 = vmatpush1.msra.mxu0 0.0
          %1067 = vmatprep.subr.mxu0 0.0
          %1068 = vmatpush1.msra.mxu0 0.0
          %1069 = vmatprep.subr.mxu0 0.0
          %1070 = vmatpush1.msra.mxu0 0.0
          %1071 = vmatprep.subr.mxu0 0.0
          %1072 = vmatpush1.msra.mxu0 0.0
          %1073 = vmatprep.subr.mxu0 0.0
          %1074 = vmatpush1.msra.mxu0 0.0
          %1075 = vmatprep.subr.mxu0 0.0
          %1076 = vmatpush1.msra.mxu0 0.0
          %1077 = vmatprep.subr.mxu0 0.0
          %1078 = vmatpush1.msra.mxu0 0.0
          %1079 = vmatprep.subr.mxu0 0.0
          %1080 = vmatpush1.msra.mxu0 0.0
          %1081 = vmatprep.subr.mxu0 0.0
          %1082 = vmatpush1.msra.mxu0 0.0
          %1083 = vmatprep.subr.mxu0 0.0
          %1084 = vmatpush1.msra.mxu0 0.0
          %1085 = vmatprep.subr.mxu0 0.0
          %1086 = vmatpush1.msra.mxu0 0.0
          %1087 = vmatprep.subr.mxu0 0.0
          %1088 = vmatpush1.msra.mxu0 0.0
          %1089 = vmatprep.subr.mxu0 0.0
          %1090 = vmatpush1.msra.mxu0 0.0
          %1091 = vmatprep.subr.mxu0 0.0
          %1092 = vmatpush1.msra.mxu0 0.0
          %1093 = vmatprep.subr.mxu0 0.0
          %1094 = vmatpush1.msra.mxu0 0.0
          %1095 = vmatprep.subr.mxu0 0.0
          %1096 = vmatpush1.msra.mxu0 0.0
          %1097 = vmatprep.subr.mxu0 0.0
          %1098 = vmatpush1.msra.mxu0 0.0
          %1099 = vmatprep.subr.mxu0 0.0
          %1100 = vmatpush1.msra.mxu0 0.0
          %1101 = vmatprep.subr.mxu0 0.0
          %1102 = vmatpush1.msra.mxu0 0.0
          %1103 = vmatprep.subr.mxu0 0.0
          %1104 = vmatpush1.msra.mxu0 0.0
          %1105 = vmatprep.subr.mxu0 0.0
          %1106 = vmatpush1.msra.mxu0 0.0
          %1107 = vmatprep.subr.mxu0 0.0
          %1108 = vmatpush1.msra.mxu0 0.0
          %1109 = vmatprep.subr.mxu0 0.0
          %1110 = vmatpush1.msra.mxu0 0.0
          %1111 = vmatprep.subr.mxu0 0.0
          %1112 = vmatpush1.msra.mxu0 0.0
          %1113 = vmatprep.subr.mxu0 0.0
          %1114 = vmatpush1.msra.mxu0 0.0
          %1115 = vmatprep.subr.mxu0 0.0
          %1116 = vmatpush1.msra.mxu0 0.0
          %1117 = vmatprep.subr.mxu0 0.0
          %1118 = vmatpush1.msra.mxu0 0.0
          %1119 = vmatprep.subr.mxu0 0.0
          %1120 = vmatpush1.msra.mxu0 0.0
          %1121 = vmatprep.subr.mxu0 0.0
          %1122 = vmatpush1.msra.mxu0 0.0
          %1123 = vmatprep.subr.mxu0 0.0
          %1124 = vmatpush1.msra.mxu0 0.0
          %1125 = vmatprep.mubr.f32.mxu0 0.0
          %1126 = vmatmul.mubr.f32.gmra.mrb[0].mxu0 %v1059
          %v1127 = vpop.f32.mrb[0].mxu0
          %v1128 = vadd.f32 0.0, %v1127
          %v1129 = vpop.f32.mrb[0].mxu0
          %1130 = vdwg.mxu0
          %vm1131 = vcmask 258048
          %1132 = vst.msk [vmem:[#allocation4] sm:$0x1f] %vm1131, %v1128
        $region140: #{tpu_custom_call.1} parent=115 // pred_fallthru
          _
        %v1133 = vld [vmem:[%s877] sm:$0xff]
        %v1134 = vld [vmem:[#allocation4] sm:$0x1f]
        %vm1135 = vcmask 39936
        %v1137 = vsel %vm1135, %v1133, 0
        %vm1139 = vcmask 1044480
        %v1141 = vsel %vm1139, %v1134, 0
        %1143 = vmatprep.subr.mxu0 0.0
        %1144 = vmatpush1.msra.mxu0 %v1141
        %1145 = vmatprep.subr.mxu0 0.0
        %1146 = vmatpush1.msra.mxu0 0.0
        %1147 = vmatprep.subr.mxu0 0.0
        %1148 = vmatpush1.msra.mxu0 0.0
        %1149 = vmatprep.subr.mxu0 0.0
        %1150 = vmatpush1.msra.mxu0 0.0
        %1151 = vmatprep.subr.mxu0 0.0
        %1152 = vmatpush1.msra.mxu0 0.0
        %1153 = vmatprep.subr.mxu0 0.0
        %1154 = vmatpush1.msra.mxu0 0.0
        %1155 = vmatprep.subr.mxu0 0.0
        %1156 = vmatpush1.msra.mxu0 0.0
        %1157 = vmatprep.subr.mxu0 0.0
        %1158 = vmatpush1.msra.mxu0 0.0
        %1159 = vmatprep.subr.mxu0 0.0
        %1160 = vmatpush1.msra.mxu0 0.0
        %1161 = vmatprep.subr.mxu0 0.0
        %1162 = vmatpush1.msra.mxu0 0.0
        %1163 = vmatprep.subr.mxu0 0.0
        %1164 = vmatpush1.msra.mxu0 0.0
        %1165 = vmatprep.subr.mxu0 0.0
        %1166 = vmatpush1.msra.mxu0 0.0
        %1167 = vmatprep.subr.mxu0 0.0
        %1168 = vmatpush1.msra.mxu0 0.0
        %1169 = vmatprep.subr.mxu0 0.0
        %1170 = vmatpush1.msra.mxu0 0.0
        %1171 = vmatprep.subr.mxu0 0.0
        %1172 = vmatpush1.msra.mxu0 0.0
        %1173 = vmatprep.subr.mxu0 0.0
        %1174 = vmatpush1.msra.mxu0 0.0
        %1175 = vmatprep.subr.mxu0 0.0
        %1176 = vmatpush1.msra.mxu0 0.0
        %1177 = vmatprep.subr.mxu0 0.0
        %1178 = vmatpush1.msra.mxu0 0.0
        %1179 = vmatprep.subr.mxu0 0.0
        %1180 = vmatpush1.msra.mxu0 0.0
        %1181 = vmatprep.subr.mxu0 0.0
        %1182 = vmatpush1.msra.mxu0 0.0
        %1183 = vmatprep.subr.mxu0 0.0
        %1184 = vmatpush1.msra.mxu0 0.0
        %1185 = vmatprep.subr.mxu0 0.0
        %1186 = vmatpush1.msra.mxu0 0.0
        %1187 = vmatprep.subr.mxu0 0.0
        %1188 = vmatpush1.msra.mxu0 0.0
        %1189 = vmatprep.subr.mxu0 0.0
        %1190 = vmatpush1.msra.mxu0 0.0
        %1191 = vmatprep.subr.mxu0 0.0
        %1192 = vmatpush1.msra.mxu0 0.0
        %1193 = vmatprep.subr.mxu0 0.0
        %1194 = vmatpush1.msra.mxu0 0.0
        %1195 = vmatprep.subr.mxu0 0.0
        %1196 = vmatpush1.msra.mxu0 0.0
        %1197 = vmatprep.subr.mxu0 0.0
        %1198 = vmatpush1.msra.mxu0 0.0
        %1199 = vmatprep.subr.mxu0 0.0
        %1200 = vmatpush1.msra.mxu0 0.0
        %1201 = vmatprep.subr.mxu0 0.0
        %1202 = vmatpush1.msra.mxu0 0.0
        %1203 = vmatprep.subr.mxu0 0.0
        %1204 = vmatpush1.msra.mxu0 0.0
        %1205 = vmatprep.subr.mxu0 0.0
        %1206 = vmatpush1.msra.mxu0 0.0
        %1207 = vmatprep.mubr.f32.mxu0 0.0
        %1208 = vmatmul.mubr.f32.gmra.mrb[0].mxu0 %v1137
        %v1209 = vpop.f32.mrb[0].mxu0
        %v1210 = vadd.f32 0.0, %v1209
        %v1211 = vpop.f32.mrb[0].mxu0
        %1212 = vdwg.mxu0
        %v1213 = vld [vmem:[%s5] sm:$0x1]
        %v1214 = vmul.f32 %v1213, %v1213
        %v1215 = vsub.f32 %v879, %v1210
        %v1217 = vlaneseq
        %v1218 = vshrl.u32 %v1217, 7
        %v1219 = vsub.s32 0, %v1218
        %v1220 = vrot.slane %v1214, %v1219
        %v1222 = vmul.f32 %v1220, %v1215
        %v1223 = vadd.f32 %v1210, %v1222
        %v1224 = vadd.f32 %v1223, %v879
        %v1225 = vld [vmem:[#allocation6] sm:$0x1]
        %v1226 = vld [vmem:[#allocation9] sm:$0x1]
        %vm1227 = vcmask 261120
        %v1228 = vsel %vm1227, %v1224, 0.0
        %1229 = vadd.xlane.f32.xlu0 %v1228
        %v1230 = vpop.xlane.xlu0 %1229
        %v1231 = vrcp.pop 32.0
        %v1232 = vmul.f32 %v1230, %v1231
        %v1233 = vsub.f32 %v1224, %v1232
        %v1234 = vmul.f32 %v1233, %v1233
        %v1235 = vsel %vm1227, %v1234, 0.0
        %1236 = vadd.xlane.f32.xlu0 %v1235
        %v1237 = vpop.xlane.xlu0 %1236
        %v1238 = vmul.f32 %v1237, %v1231
        %v1239 = vadd.f32 %v1238, 1e-12
        %v1240 = vrsqrt.pop %v1239
        %v1241 = vmul.f32 %v1233, %v1240
        %v1243 = vlaneseq
        %v1244 = vshrl.u32 %v1243, 7
        %v1245 = vsub.s32 0, %v1244
        %v1246 = vrot.slane %v1225, %v1245
        %v1248 = vmul.f32 %v1246, %v1241
        %v1250 = vlaneseq
        %v1251 = vshrl.u32 %v1250, 7
        %v1252 = vsub.s32 0, %v1251
        %v1253 = vrot.slane %v1226, %v1252
        %v1255 = vadd.f32 %v1248, %v1253
        %v1256 = vpack.c.bf16 %v879, %v879
        %v1257 = vld [vmem:[%s8] sm:$0xf]
        %v1258 = vld [vmem:[%s8 + $0x4] sm:$0xf]
        %v1259 = vld [vmem:[%s8 + $0x8] sm:$0xf]
        %v1260 = vld [vmem:[%s8 + $0xc] sm:$0xf]
        %v1261 = vld [vmem:[#allocation11] sm:$0x1]
        %v1263 = vlaneseq
        %v1264 = vshrl.u32 %v1263, 7
        %v1265 = vsub.s32 0, %v1264
        %v1266 = vrot.slane %v1261, %v1265
        %v1272 = vunpack.c.l.b16 %v1257
        %v1273 = vunpack.c.l.b16 %v1258
        %v1274 = vunpack.c.l.b16 %v1259
        %v1275 = vunpack.c.l.b16 %v1260
        %v1276 = vpack.c.b16 %v1273, %v1272
        %v1277 = vpack.c.b16 %v1275, %v1274
        %v1281 = vsel %vm1227, %v1256, 0
        %1283 = vmatprep.subr.bf16.mxu0 0
        %1284 = vmatpush1.bf16.msra.mxu0 %v1276
        %1285 = vmatprep.subr.bf16.mxu0 0
        %1286 = vmatpush1.bf16.msra.mxu0 %v1277
        %1287 = vmatprep.subr.bf16.mxu0 0
        %1288 = vmatpush1.bf16.msra.mxu0 0
        %1289 = vmatprep.subr.bf16.mxu0 0
        %1290 = vmatpush1.bf16.msra.mxu0 0
        %1291 = vmatprep.subr.bf16.mxu0 0
        %1292 = vmatpush1.bf16.msra.mxu0 0
        %1293 = vmatprep.subr.bf16.mxu0 0
        %1294 = vmatpush1.bf16.msra.mxu0 0
        %1295 = vmatprep.subr.bf16.mxu0 0
        %1296 = vmatpush1.bf16.msra.mxu0 0
        %1297 = vmatprep.subr.bf16.mxu0 0
        %1298 = vmatpush1.bf16.msra.mxu0 0
        %1299 = vmatprep.subr.bf16.mxu0 0
        %1300 = vmatpush1.bf16.msra.mxu0 0
        %1301 = vmatprep.subr.bf16.mxu0 0
        %1302 = vmatpush1.bf16.msra.mxu0 0
        %1303 = vmatprep.subr.bf16.mxu0 0
        %1304 = vmatpush1.bf16.msra.mxu0 0
        %1305 = vmatprep.subr.bf16.mxu0 0
        %1306 = vmatpush1.bf16.msra.mxu0 0
        %1307 = vmatprep.subr.bf16.mxu0 0
        %1308 = vmatpush1.bf16.msra.mxu0 0
        %1309 = vmatprep.subr.bf16.mxu0 0
        %1310 = vmatpush1.bf16.msra.mxu0 0
        %1311 = vmatprep.subr.bf16.mxu0 0
        %1312 = vmatpush1.bf16.msra.mxu0 0
        %1313 = vmatprep.subr.bf16.mxu0 0
        %1314 = vmatpush1.bf16.msra.mxu0 0
        %1315 = vmatprep.mubr.bf16.mxu0 0
        %1316 = vmatmul.mubr.bf16.gmra.mrb[0].mxu0 %v1281
        %v1317 = vpop.f32.mrb[0].mxu0
        %v1318 = vadd.f32 %v1266, %v1317
        %v1319 = vpop.f32.mrb[0].mxu0
        %v1320 = vpop.f32.mrb[0].mxu0
        %v1321 = vpop.f32.mrb[0].mxu0
        %1322 = vdwg.mxu0
        %v1323 = vld [vmem:[%s873] sm:$0xff]
        %v1324 = vpack.c.bf16 %v1318, %v1318
        %v1325 = vld [vmem:[#allocation2] sm:$0xff]
        %vm1326 = vcmask 130048
        %v1328 = vsel %vm1326, %v1324, 0
        %v1331 = vsel %vm1326, %v1325, 0
        %1333 = vmatprep.subr.bf16.mxu0 0
        %1334 = vmatpush1.bf16.xpose.msra.mxu0 %v1331
        %1335 = vmatprep.subr.bf16.mxu0 0
        %1336 = vmatpush1.bf16.xpose.msra.mxu0 0
        %1337 = vmatprep.subr.bf16.mxu0 0
        %1338 = vmatpush1.bf16.xpose.msra.mxu0 0
        %1339 = vmatprep.subr.bf16.mxu0 0
        %1340 = vmatpush1.bf16.xpose.msra.mxu0 0
        %1341 = vmatprep.subr.bf16.mxu0 0
        %1342 = vmatpush1.bf16.xpose.msra.mxu0 0
        %1343 = vmatprep.subr.bf16.mxu0 0
        %1344 = vmatpush1.bf16.xpose.msra.mxu0 0
        %1345 = vmatprep.subr.bf16.mxu0 0
        %1346 = vmatpush1.bf16.xpose.msra.mxu0 0
        %1347 = vmatprep.subr.bf16.mxu0 0
        %1348 = vmatpush1.bf16.xpose.msra.mxu0 0
        %1349 = vmatprep.subr.bf16.mxu0 0
        %1350 = vmatpush1.bf16.xpose.msra.mxu0 0
        %1351 = vmatprep.subr.bf16.mxu0 0
        %1352 = vmatpush1.bf16.xpose.msra.mxu0 0
        %1353 = vmatprep.subr.bf16.mxu0 0
        %1354 = vmatpush1.bf16.xpose.msra.mxu0 0
        %1355 = vmatprep.subr.bf16.mxu0 0
        %1356 = vmatpush1.bf16.xpose.msra.mxu0 0
        %1357 = vmatprep.subr.bf16.mxu0 0
        %1358 = vmatpush1.bf16.xpose.msra.mxu0 0
        %1359 = vmatprep.subr.bf16.mxu0 0
        %1360 = vmatpush1.bf16.xpose.msra.mxu0 0
        %1361 = vmatprep.subr.bf16.mxu0 0
        %1362 = vmatpush1.bf16.xpose.msra.mxu0 0
        %1363 = vmatprep.subr.bf16.mxu0 0
        %1364 = vmatpush1.bf16.xpose.msra.mxu0 0
        %1365 = vmatprep.mubr.bf16.mxu0 0
        %1366 = vmatmul.mubr.bf16.gmra.mrb[0].mxu0 %v1328
        %v1367 = vpop.f32.mrb[0].mxu0
        %v1368 = vadd.f32 0.0, %v1367
        %v1369 = vpop.f32.mrb[0].mxu0
        %v1370 = vpop.f32.mrb[0].mxu0
        %v1371 = vpop.f32.mrb[0].mxu0
        %1372 = vdwg.mxu0
        %v1373 = vmul.f32 %v1368, 0.25
        %v1374 = vadd.f32 %v1373, %v1323
        %v1375 = vsel %vm1326, %v1374, -inf
        %1376 = vmax.xlane.f32.xlu0 %v1375
        %v1377 = vpop.xlane.xlu0 %1376
        %v1378 = vsub.f32 %v1374, %v1377
        %v1379 = vmul.f32 %v1378, 1.442695
        %v1380 = vpow.pop %v1379
        %v1381 = vsel %vm1326, %v1380, 0.0
        %1382 = vadd.xlane.f32.xlu0 %v1381
        %v1383 = vpop.xlane.xlu0 %1382
        %v1384 = vrcp.pop %v1383
        %v1385 = vmul.f32 %v1380, %v1384
        %v1386 = vpack.c.bf16 %v1385, %v1385
        %v1387 = vld [vmem:[#allocation3] sm:$0xff]
        %v1389 = vsel %vm1326, %v1386, 0
        %1391 = vmatprep.subr.bf16.mxu0 0
        %1392 = vmatpush1.bf16.msra.mxu0 %v1387
        %1393 = vmatprep.subr.bf16.mxu0 0
        %1394 = vmatpush1.bf16.msra.mxu0 0
        %1395 = vmatprep.subr.bf16.mxu0 0
        %1396 = vmatpush1.bf16.msra.mxu0 0
        %1397 = vmatprep.subr.bf16.mxu0 0
        %1398 = vmatpush1.bf16.msra.mxu0 0
        %1399 = vmatprep.subr.bf16.mxu0 0
        %1400 = vmatpush1.bf16.msra.mxu0 0
        %1401 = vmatprep.subr.bf16.mxu0 0
        %1402 = vmatpush1.bf16.msra.mxu0 0
        %1403 = vmatprep.subr.bf16.mxu0 0
        %1404 = vmatpush1.bf16.msra.mxu0 0
        %1405 = vmatprep.subr.bf16.mxu0 0
        %1406 = vmatpush1.bf16.msra.mxu0 0
        %1407 = vmatprep.subr.bf16.mxu0 0
        %1408 = vmatpush1.bf16.msra.mxu0 0
        %1409 = vmatprep.subr.bf16.mxu0 0
        %1410 = vmatpush1.bf16.msra.mxu0 0
        %1411 = vmatprep.subr.bf16.mxu0 0
        %1412 = vmatpush1.bf16.msra.mxu0 0
        %1413 = vmatprep.subr.bf16.mxu0 0
        %1414 = vmatpush1.bf16.msra.mxu0 0
        %1415 = vmatprep.subr.bf16.mxu0 0
        %1416 = vmatpush1.bf16.msra.mxu0 0
        %1417 = vmatprep.subr.bf16.mxu0 0
        %1418 = vmatpush1.bf16.msra.mxu0 0
        %1419 = vmatprep.subr.bf16.mxu0 0
        %1420 = vmatpush1.bf16.msra.mxu0 0
        %1421 = vmatprep.subr.bf16.mxu0 0
        %1422 = vmatpush1.bf16.msra.mxu0 0
        %1423 = vmatprep.mubr.bf16.mxu0 0
        %1424 = vmatmul.mubr.bf16.gmra.mrb[0].mxu0 %v1389
        %v1425 = vpop.f32.mrb[0].mxu0
        %v1426 = vadd.f32 0.0, %v1425
        %v1427 = vpop.f32.mrb[0].mxu0
        %v1428 = vpop.f32.mrb[0].mxu0
        %v1429 = vpop.f32.mrb[0].mxu0
        %1430 = vdwg.mxu0
        %1431 = vst.msk [vmem:[#allocation5] sm:$0xff] %vm1326, %v1426
        %v1432 = vld [vmem:[#allocation2] sm:$0xff]
        %1434 = vrot.lane.b32.xlu0 %v1324, 112
        %v1435 = vpop.permute.xlu0 %1434
        %1437 = vrot.lane.b32.xlu0 %v1432, 112
        %v1438 = vpop.permute.xlu0 %1437
        %v1440 = vsel %vm1326, %v1435, 0
        %v1443 = vsel %vm1326, %v1438, 0
        %1445 = vmatprep.subr.bf16.mxu0 0
        %1446 = vmatpush1.bf16.xpose.msra.mxu0 %v1443
        %1447 = vmatprep.subr.bf16.mxu0 0
        %1448 = vmatpush1.bf16.xpose.msra.mxu0 0
        %1449 = vmatprep.subr.bf16.mxu0 0
        %1450 = vmatpush1.bf16.xpose.msra.mxu0 0
        %1451 = vmatprep.subr.bf16.mxu0 0
        %1452 = vmatpush1.bf16.xpose.msra.mxu0 0
        %1453 = vmatprep.subr.bf16.mxu0 0
        %1454 = vmatpush1.bf16.xpose.msra.mxu0 0
        %1455 = vmatprep.subr.bf16.mxu0 0
        %1456 = vmatpush1.bf16.xpose.msra.mxu0 0
        %1457 = vmatprep.subr.bf16.mxu0 0
        %1458 = vmatpush1.bf16.xpose.msra.mxu0 0
        %1459 = vmatprep.subr.bf16.mxu0 0
        %1460 = vmatpush1.bf16.xpose.msra.mxu0 0
        %1461 = vmatprep.subr.bf16.mxu0 0
        %1462 = vmatpush1.bf16.xpose.msra.mxu0 0
        %1463 = vmatprep.subr.bf16.mxu0 0
        %1464 = vmatpush1.bf16.xpose.msra.mxu0 0
        %1465 = vmatprep.subr.bf16.mxu0 0
        %1466 = vmatpush1.bf16.xpose.msra.mxu0 0
        %1467 = vmatprep.subr.bf16.mxu0 0
        %1468 = vmatpush1.bf16.xpose.msra.mxu0 0
        %1469 = vmatprep.subr.bf16.mxu0 0
        %1470 = vmatpush1.bf16.xpose.msra.mxu0 0
        %1471 = vmatprep.subr.bf16.mxu0 0
        %1472 = vmatpush1.bf16.xpose.msra.mxu0 0
        %1473 = vmatprep.subr.bf16.mxu0 0
        %1474 = vmatpush1.bf16.xpose.msra.mxu0 0
        %1475 = vmatprep.subr.bf16.mxu0 0
        %1476 = vmatpush1.bf16.xpose.msra.mxu0 0
        %1477 = vmatprep.mubr.bf16.mxu0 0
        %1478 = vmatmul.mubr.bf16.gmra.mrb[0].mxu0 %v1440
        %v1479 = vpop.f32.mrb[0].mxu0
        %v1480 = vadd.f32 0.0, %v1479
        %v1481 = vpop.f32.mrb[0].mxu0
        %v1482 = vpop.f32.mrb[0].mxu0
        %v1483 = vpop.f32.mrb[0].mxu0
        %1484 = vdwg.mxu0
        %v1485 = vmul.f32 %v1480, 0.25
        %v1486 = vadd.f32 %v1485, %v1323
        %v1487 = vsel %vm1326, %v1486, -inf
        %1488 = vmax.xlane.f32.xlu0 %v1487
        %v1489 = vpop.xlane.xlu0 %1488
        %v1490 = vsub.f32 %v1486, %v1489
        %v1491 = vmul.f32 %v1490, 1.442695
        %v1492 = vpow.pop %v1491
        %v1493 = vsel %vm1326, %v1492, 0.0
        %1494 = vadd.xlane.f32.xlu0 %v1493
        %v1495 = vpop.xlane.xlu0 %1494
        %v1496 = vrcp.pop %v1495
        %v1497 = vmul.f32 %v1492, %v1496
        %v1498 = vpack.c.bf16 %v1497, %v1497
        %v1499 = vld [vmem:[#allocation3] sm:$0xff]
        %1501 = vrot.lane.b32.xlu0 %v1499, 112
        %v1502 = vpop.permute.xlu0 %1501
        %v1505 = vsel %vm1326, %v1498, 0
        %1507 = vmatprep.subr.bf16.mxu0 0
        %1508 = vmatpush1.bf16.msra.mxu0 %v1502
        %1509 = vmatprep.subr.bf16.mxu0 0
        %1510 = vmatpush1.bf16.msra.mxu0 0
        %1511 = vmatprep.subr.bf16.mxu0 0
        %1512 = vmatpush1.bf16.msra.mxu0 0
        %1513 = vmatprep.subr.bf16.mxu0 0
        %1514 = vmatpush1.bf16.msra.mxu0 0
        %1515 = vmatprep.subr.bf16.mxu0 0
        %1516 = vmatpush1.bf16.msra.mxu0 0
        %1517 = vmatprep.subr.bf16.mxu0 0
        %1518 = vmatpush1.bf16.msra.mxu0 0
        %1519 = vmatprep.subr.bf16.mxu0 0
        %1520 = vmatpush1.bf16.msra.mxu0 0
        %1521 = vmatprep.subr.bf16.mxu0 0
        %1522 = vmatpush1.bf16.msra.mxu0 0
        %1523 = vmatprep.subr.bf16.mxu0 0
        %1524 = vmatpush1.bf16.msra.mxu0 0
        %1525 = vmatprep.subr.bf16.mxu0 0
        %1526 = vmatpush1.bf16.msra.mxu0 0
        %1527 = vmatprep.subr.bf16.mxu0 0
        %1528 = vmatpush1.bf16.msra.mxu0 0
        %1529 = vmatprep.subr.bf16.mxu0 0
        %1530 = vmatpush1.bf16.msra.mxu0 0
        %1531 = vmatprep.subr.bf16.mxu0 0
        %1532 = vmatpush1.bf16.msra.mxu0 0
        %1533 = vmatprep.subr.bf16.mxu0 0
        %1534 = vmatpush1.bf16.msra.mxu0 0
        %1535 = vmatprep.subr.bf16.mxu0 0
        %1536 = vmatpush1.bf16.msra.mxu0 0
        %1537 = vmatprep.subr.bf16.mxu0 0
        %1538 = vmatpush1.bf16.msra.mxu0 0
        %1539 = vmatprep.mubr.bf16.mxu0 0
        %1540 = vmatmul.mubr.bf16.gmra.mrb[0].mxu0 %v1505
        %v1541 = vpop.f32.mrb[0].mxu0
        %v1542 = vadd.f32 0.0, %v1541
        %v1543 = vpop.f32.mrb[0].mxu0
        %v1544 = vpop.f32.mrb[0].mxu0
        %v1545 = vpop.f32.mrb[0].mxu0
        %1546 = vdwg.mxu0
        %1548 = vrot.lane.b32.xlu0 %v1542, 16
        %v1549 = vpop.permute.xlu0 %1548
        %vm1551 = vcmask 261248
        %1552 = vst.msk [vmem:[#allocation5] sm:$0xff] %vm1551, %v1549
        %v1553 = vld [vmem:[#allocation5] sm:$0xff]
        %v1554 = vpack.c.bf16 %v1553, %v1553
        %v1555 = vld [vmem:[%s14] sm:$0xf]
        %v1556 = vld [vmem:[%s14 + $0x4] sm:$0xf]
        %v1557 = vld [vmem:[%s14 + $0x8] sm:$0xf]
        %v1558 = vld [vmem:[%s14 + $0xc] sm:$0xf]
        %v1559 = vld [vmem:[%s15] sm:$0x1]
        %v1561 = vlaneseq
        %v1562 = vshrl.u32 %v1561, 7
        %v1563 = vsub.s32 0, %v1562
        %v1564 = vrot.slane %v1559, %v1563
        %v1570 = vunpack.c.l.b16 %v1555
        %v1571 = vunpack.c.l.b16 %v1556
        %v1572 = vunpack.c.l.b16 %v1557
        %v1573 = vunpack.c.l.b16 %v1558
        %v1574 = vpack.c.b16 %v1571, %v1570
        %v1575 = vpack.c.b16 %v1573, %v1572
        %v1579 = vsel %vm1227, %v1554, 0
        %1581 = vmatprep.subr.bf16.mxu0 0
        %1582 = vmatpush1.bf16.msra.mxu0 %v1574
        %1583 = vmatprep.subr.bf16.mxu0 0
        %1584 = vmatpush1.bf16.msra.mxu0 %v1575
        %1585 = vmatprep.subr.bf16.mxu0 0
        %1586 = vmatpush1.bf16.msra.mxu0 0
        %1587 = vmatprep.subr.bf16.mxu0 0
        %1588 = vmatpush1.bf16.msra.mxu0 0
        %1589 = vmatprep.subr.bf16.mxu0 0
        %1590 = vmatpush1.bf16.msra.mxu0 0
        %1591 = vmatprep.subr.bf16.mxu0 0
        %1592 = vmatpush1.bf16.msra.mxu0 0
        %1593 = vmatprep.subr.bf16.mxu0 0
        %1594 = vmatpush1.bf16.msra.mxu0 0
        %1595 = vmatprep.subr.bf16.mxu0 0
        %1596 = vmatpush1.bf16.msra.mxu0 0
        %1597 = vmatprep.subr.bf16.mxu0 0
        %1598 = vmatpush1.bf16.msra.mxu0 0
        %1599 = vmatprep.subr.bf16.mxu0 0
        %1600 = vmatpush1.bf16.msra.mxu0 0
        %1601 = vmatprep.subr.bf16.mxu0 0
        %1602 = vmatpush1.bf16.msra.mxu0 0
        %1603 = vmatprep.subr.bf16.mxu0 0
        %1604 = vmatpush1.bf16.msra.mxu0 0
        %1605 = vmatprep.subr.bf16.mxu0 0
        %1606 = vmatpush1.bf16.msra.mxu0 0
        %1607 = vmatprep.subr.bf16.mxu0 0
        %1608 = vmatpush1.bf16.msra.mxu0 0
        %1609 = vmatprep.subr.bf16.mxu0 0
        %1610 = vmatpush1.bf16.msra.mxu0 0
        %1611 = vmatprep.subr.bf16.mxu0 0
        %1612 = vmatpush1.bf16.msra.mxu0 0
        %1613 = vmatprep.mubr.bf16.mxu0 0
        %1614 = vmatmul.mubr.bf16.gmra.mrb[0].mxu0 %v1579
        %v1615 = vpop.f32.mrb[0].mxu0
        %v1616 = vadd.f32 %v1564, %v1615
        %v1617 = vpop.f32.mrb[0].mxu0
        %v1618 = vpop.f32.mrb[0].mxu0
        %v1619 = vpop.f32.mrb[0].mxu0
        %1620 = vdwg.mxu0
        %v1621 = vadd.f32 %v1616, %v879
        %v1622 = vld [vmem:[%s16] sm:$0x1]
        %v1623 = vld [vmem:[%s17] sm:$0x1]
        %v1624 = vsel %vm1227, %v1621, 0.0
        %1625 = vadd.xlane.f32.xlu0 %v1624
        %v1626 = vpop.xlane.xlu0 %1625
        %v1627 = vmul.f32 %v1626, %v1231
        %v1628 = vsub.f32 %v1621, %v1627
        %v1629 = vmul.f32 %v1628, %v1628
        %v1630 = vsel %vm1227, %v1629, 0.0
        %1631 = vadd.xlane.f32.xlu0 %v1630
        %v1632 = vpop.xlane.xlu0 %1631
        %v1633 = vmul.f32 %v1632, %v1231
        %v1634 = vadd.f32 %v1633, 1e-12
        %v1635 = vrsqrt.pop %v1634
        %v1636 = vmul.f32 %v1628, %v1635
        %v1638 = vlaneseq
        %v1639 = vshrl.u32 %v1638, 7
        %v1640 = vsub.s32 0, %v1639
        %v1641 = vrot.slane %v1622, %v1640
        %v1643 = vmul.f32 %v1641, %v1636
        %v1645 = vlaneseq
        %v1646 = vshrl.u32 %v1645, 7
        %v1647 = vsub.s32 0, %v1646
        %v1648 = vrot.slane %v1623, %v1647
        %v1650 = vadd.f32 %v1643, %v1648
        %v1651 = vmul.f32 %v1255, 0.5
        %v1652 = vmul.f32 %v1650, 0.5
        %v1653 = vadd.f32 %v1651, %v1652
        %v1654 = vpack.c.bf16 %v1653, %v1653
        %v1655 = vld [vmem:[%s18] sm:$0xf]
        %v1656 = vld [vmem:[%s18 + $0x4] sm:$0xf]
        %v1657 = vld [vmem:[%s18 + $0x8] sm:$0xf]
        %v1658 = vld [vmem:[%s18 + $0xc] sm:$0xf]
        %v1659 = vld [vmem:[%s19] sm:$0x1]
        %v1661 = vlaneseq
        %v1662 = vshrl.u32 %v1661, 7
        %v1663 = vsub.s32 0, %v1662
        %v1664 = vrot.slane %v1659, %v1663
        %v1670 = vunpack.c.l.b16 %v1655
        %v1671 = vunpack.c.l.b16 %v1656
        %v1672 = vunpack.c.l.b16 %v1657
        %v1673 = vunpack.c.l.b16 %v1658
        %v1674 = vpack.c.b16 %v1671, %v1670
        %v1675 = vpack.c.b16 %v1673, %v1672
        %v1679 = vsel %vm1227, %v1654, 0
        %1681 = vmatprep.subr.bf16.mxu0 0
        %1682 = vmatpush1.bf16.msra.mxu0 %v1674
        %1683 = vmatprep.subr.bf16.mxu0 0
        %1684 = vmatpush1.bf16.msra.mxu0 %v1675
        %1685 = vmatprep.subr.bf16.mxu0 0
        %1686 = vmatpush1.bf16.msra.mxu0 0
        %1687 = vmatprep.subr.bf16.mxu0 0
        %1688 = vmatpush1.bf16.msra.mxu0 0
        %1689 = vmatprep.subr.bf16.mxu0 0
        %1690 = vmatpush1.bf16.msra.mxu0 0
        %1691 = vmatprep.subr.bf16.mxu0 0
        %1692 = vmatpush1.bf16.msra.mxu0 0
        %1693 = vmatprep.subr.bf16.mxu0 0
        %1694 = vmatpush1.bf16.msra.mxu0 0
        %1695 = vmatprep.subr.bf16.mxu0 0
        %1696 = vmatpush1.bf16.msra.mxu0 0
        %1697 = vmatprep.subr.bf16.mxu0 0
        %1698 = vmatpush1.bf16.msra.mxu0 0
        %1699 = vmatprep.subr.bf16.mxu0 0
        %1700 = vmatpush1.bf16.msra.mxu0 0
        %1701 = vmatprep.subr.bf16.mxu0 0
        %1702 = vmatpush1.bf16.msra.mxu0 0
        %1703 = vmatprep.subr.bf16.mxu0 0
        %1704 = vmatpush1.bf16.msra.mxu0 0
        %1705 = vmatprep.subr.bf16.mxu0 0
        %1706 = vmatpush1.bf16.msra.mxu0 0
        %1707 = vmatprep.subr.bf16.mxu0 0
        %1708 = vmatpush1.bf16.msra.mxu0 0
        %1709 = vmatprep.subr.bf16.mxu0 0
        %1710 = vmatpush1.bf16.msra.mxu0 0
        %1711 = vmatprep.subr.bf16.mxu0 0
        %1712 = vmatpush1.bf16.msra.mxu0 0
        %1713 = vmatprep.mubr.bf16.mxu0 0
        %1714 = vmatmul.mubr.bf16.gmra.mrb[0].mxu0 %v1679
        %v1715 = vpop.f32.mrb[0].mxu0
        %v1716 = vadd.f32 %v1664, %v1715
        %v1717 = vpop.f32.mrb[0].mxu0
        %v1718 = vpop.f32.mrb[0].mxu0
        %v1719 = vpop.f32.mrb[0].mxu0
        %1720 = vdwg.mxu0
        %v1721 = vmul.f32 %v1716, 0.5
        %v1722 = vmul.f32 %v1716, 0.70710677
        %v1723 = verf.f32.pop %v1722
        %v1724 = vadd.f32 %v1723, 1.0
        %v1725 = vmul.f32 %v1721, %v1724
        %v1726 = vpack.c.bf16 %v1725, %v1725
        %v1727 = vld [vmem:[%s20] sm:$0xf]
        %v1728 = vld [vmem:[%s20 + $0x4] sm:$0xf]
        %v1729 = vld [vmem:[%s20 + $0x8] sm:$0xf]
        %v1730 = vld [vmem:[%s20 + $0xc] sm:$0xf]
        %v1731 = vld [vmem:[%s20 + $0x10] sm:$0xf]
        %v1732 = vld [vmem:[%s20 + $0x14] sm:$0xf]
        %v1733 = vld [vmem:[%s20 + $0x18] sm:$0xf]
        %v1734 = vld [vmem:[%s20 + $0x1c] sm:$0xf]
        %v1735 = vld [vmem:[%s20 + $0x20] sm:$0xf]
        %v1736 = vld [vmem:[%s20 + $0x24] sm:$0xf]
        %v1737 = vld [vmem:[%s20 + $0x28] sm:$0xf]
        %v1738 = vld [vmem:[%s20 + $0x2c] sm:$0xf]
        %v1739 = vld [vmem:[%s20 + $0x30] sm:$0xf]
        %v1740 = vld [vmem:[%s20 + $0x34] sm:$0xf]
        %v1741 = vld [vmem:[%s20 + $0x38] sm:$0xf]
        %v1742 = vld [vmem:[%s20 + $0x3c] sm:$0xf]
        %v1743 = vld [vmem:[%s21] sm:$0x1]
        %v1745 = vlaneseq
        %v1746 = vshrl.u32 %v1745, 7
        %v1747 = vsub.s32 0, %v1746
        %v1748 = vrot.slane %v1743, %v1747
        %v1766 = vunpack.c.l.b16 %v1727
        %v1767 = vunpack.c.l.b16 %v1728
        %v1768 = vunpack.c.l.b16 %v1729
        %v1769 = vunpack.c.l.b16 %v1730
        %v1770 = vunpack.c.l.b16 %v1731
        %v1771 = vunpack.c.l.b16 %v1732
        %v1772 = vunpack.c.l.b16 %v1733
        %v1773 = vunpack.c.l.b16 %v1734
        %v1774 = vunpack.c.l.b16 %v1735
        %v1775 = vunpack.c.l.b16 %v1736
        %v1776 = vunpack.c.l.b16 %v1737
        %v1777 = vunpack.c.l.b16 %v1738
        %v1778 = vunpack.c.l.b16 %v1739
        %v1779 = vunpack.c.l.b16 %v1740
        %v1780 = vunpack.c.l.b16 %v1741
        %v1781 = vunpack.c.l.b16 %v1742
        %v1782 = vpack.c.b16 %v1767, %v1766
        %v1783 = vpack.c.b16 %v1769, %v1768
        %v1784 = vpack.c.b16 %v1771, %v1770
        %v1785 = vpack.c.b16 %v1773, %v1772
        %v1786 = vpack.c.b16 %v1775, %v1774
        %v1787 = vpack.c.b16 %v1777, %v1776
        %v1788 = vpack.c.b16 %v1779, %v1778
        %v1789 = vpack.c.b16 %v1781, %v1780
        %1798 = vmatprep.subr.bf16.mxu0 0
        %1799 = vmatpush1.bf16.msra.mxu0 %v1782
        %1800 = vmatprep.subr.bf16.mxu0 0
        %1801 = vmatpush1.bf16.msra.mxu0 %v1783
        %1802 = vmatprep.subr.bf16.mxu0 0
        %1803 = vmatpush1.bf16.msra.mxu0 %v1784
        %1804 = vmatprep.subr.bf16.mxu0 0
        %1805 = vmatpush1.bf16.msra.mxu0 %v1785
        %1806 = vmatprep.subr.bf16.mxu0 0
        %1807 = vmatpush1.bf16.msra.mxu0 %v1786
        %1808 = vmatprep.subr.bf16.mxu0 0
        %1809 = vmatpush1.bf16.msra.mxu0 %v1787
        %1810 = vmatprep.subr.bf16.mxu0 0
        %1811 = vmatpush1.bf16.msra.mxu0 %v1788
        %1812 = vmatprep.subr.bf16.mxu0 0
        %1813 = vmatpush1.bf16.msra.mxu0 %v1789
        %1814 = vmatprep.subr.bf16.mxu0 0
        %1815 = vmatpush1.bf16.msra.mxu0 0
        %1816 = vmatprep.subr.bf16.mxu0 0
        %1817 = vmatpush1.bf16.msra.mxu0 0
        %1818 = vmatprep.subr.bf16.mxu0 0
        %1819 = vmatpush1.bf16.msra.mxu0 0
        %1820 = vmatprep.subr.bf16.mxu0 0
        %1821 = vmatpush1.bf16.msra.mxu0 0
        %1822 = vmatprep.subr.bf16.mxu0 0
        %1823 = vmatpush1.bf16.msra.mxu0 0
        %1824 = vmatprep.subr.bf16.mxu0 0
        %1825 = vmatpush1.bf16.msra.mxu0 0
        %1826 = vmatprep.subr.bf16.mxu0 0
        %1827 = vmatpush1.bf16.msra.mxu0 0
        %1828 = vmatprep.subr.bf16.mxu0 0
        %1829 = vmatpush1.bf16.msra.mxu0 0
        %1830 = vmatprep.mubr.bf16.mxu0 0
        %1831 = vmatmul.mubr.bf16.gmra.mrb[0].mxu0 %v1726
        %v1832 = vpop.f32.mrb[0].mxu0
        %v1833 = vadd.f32 %v1748, %v1832
        %v1834 = vpop.f32.mrb[0].mxu0
        %v1835 = vpop.f32.mrb[0].mxu0
        %v1836 = vpop.f32.mrb[0].mxu0
        %1837 = vdwg.mxu0
        %v1838 = vadd.f32 %v1833, %v1653
        %v1839 = vld [vmem:[%s22] sm:$0x1]
        %v1840 = vld [vmem:[%s23] sm:$0x1]
        %v1841 = vsel %vm1227, %v1838, 0.0
        %1842 = vadd.xlane.f32.xlu0 %v1841
        %v1843 = vpop.xlane.xlu0 %1842
        %v1844 = vmul.f32 %v1843, %v1231
        %v1845 = vsub.f32 %v1838, %v1844
        %v1846 = vmul.f32 %v1845, %v1845
        %v1847 = vsel %vm1227, %v1846, 0.0
        %1848 = vadd.xlane.f32.xlu0 %v1847
        %v1849 = vpop.xlane.xlu0 %1848
        %v1850 = vmul.f32 %v1849, %v1231
        %v1851 = vadd.f32 %v1850, 1e-12
        %v1852 = vrsqrt.pop %v1851
        %v1853 = vmul.f32 %v1845, %v1852
        %v1855 = vlaneseq
        %v1856 = vshrl.u32 %v1855, 7
        %v1857 = vsub.s32 0, %v1856
        %v1858 = vrot.slane %v1839, %v1857
        %v1860 = vmul.f32 %v1858, %v1853
        %v1862 = vlaneseq
        %v1863 = vshrl.u32 %v1862, 7
        %v1864 = vsub.s32 0, %v1863
        %v1865 = vrot.slane %v1840, %v1864
        %v1867 = vadd.f32 %v1860, %v1865
        %1868 = vst.msk [vmem:[%s856] sm:$0xff] %vm1227, %v1867
        %s1869 = sand.u32 %s589, 1
        %s1870 = scalar_lea.sflag [#allocation8], %s1869
        %s1871 = sand.u32 %s589, 1
        %s1872 = smul.addr %s1871, 8
        %s1873 = scalar_lea.vmem [#allocation15], %s1872
        // Predicated region
        $region141: #{tpu_custom_call.1} parent=115 // pred_check
          %p1874 = pneg %p599
        $region142: #{tpu_custom_call.1} parent=115 // pred_check_branch
          %1876 = sbr.rel (%p1874) target = $region144
        $region143: #{tpu_custom_call.1} parent=115 // pred_region
          %s1878 = ssub.s32 128, 128
          %1879 = vsyncadd %s1870, %s1878
          %s1880 = smul.addr %s45, 2
          %s1881 = sadd.s32 %s46, %s1880
          %s1882 = smul.addr %s1881, 128
          %s1883 = scalar_lea.hbm %s24, %s1882
          %s1885 = sshll.u32 %s1873, 4
          %s1886 = int_to_ptr.vmem [resolvable:$true] %s1885
          %1888 = dma.vmem_to_hbm [thread:$0]  %s1886, 128, %s1883, %s1870
        $region144: #{tpu_custom_call.1} parent=115 // pred_fallthru
          _
      $region116: #{tpu_custom_call.1} parent=5 // pred_fallthru
        _
      %p1889 = scmp.le.s32.totalorder 2, %s36
      // Predicated region
      $region145: #{tpu_custom_call.1} parent=5 // pred_check
        %p1890 = pneg %p1889
      $region146: #{tpu_custom_call.1} parent=5 // pred_check_branch
        %1892 = sbr.rel (%p1890) target = $region148
      $region147: #{tpu_custom_call.1} parent=5 // pred_region
        %s1893 = ssub.s32 %s36, 2
        // Predicated region
        $region149: #{tpu_custom_call.1} parent=147 // pred_check
          %p1894 = pneg %p605
        $region150: #{tpu_custom_call.1} parent=147 // pred_check_branch
          %1896 = sbr.rel (%p1894) target = $region152
        $region151: #{tpu_custom_call.1} parent=147 // pred_region
          %s1897 = sand.u32 %s590, 1
          %s1898 = scalar_lea.sflag [#allocation8], %s1897
          %s1899 = sand.u32 %s590, 1
          %s1900 = smul.addr %s1899, 8
          %s1901 = scalar_lea.vmem [#allocation15], %s1900
          %1902 = dma.done %s1898, 128
        $region152: #{tpu_custom_call.1} parent=147 // pred_fallthru
          _
      $region148: #{tpu_custom_call.1} parent=5 // pred_fallthru
        _
    $region6: #{tpu_custom_call.1} parent=1 // loop_footer
      %s40 = sadd.s32 1, %s36
    $region7: #{tpu_custom_call.1} parent=1 // loop_footer_branch
      %35 = sbr.rel target = $region3
    $region8: #{tpu_custom_call.1} parent=1 // loop_exit
      _
    %1903 = vsyncpa [#allocation7], 1
    %s1904 = scalar_lea.sflag [#allocation7], 1
    %1905 = vsyncpa %s1904, 1
    %1906 = vsyncpa [#allocation10], 1
    %1907 = vsyncpa [#allocation13], 1
    %1908 = vsyncpa [#allocation8], 1
    %s1909 = scalar_lea.sflag [#allocation8], 1
    %1910 = vsyncpa %s1909, 1

</llo_original>
